<compile_context>
chip_gen: v5e
topology: v5e:2x2
jax: 0.10.0
libtpu: 0.0.40
codegen_flags: <defaults>
</compile_context>

<pallas_src>
import functools

import jax
import jax.numpy as jnp
from jax.experimental import pallas as pl
from jax.experimental.pallas import tpu as pltpu


# ----------------------------------------------------------------------------
# Single fused kernel: 4 stacked LSTM layers (wavefront) + flatten + 3 dense.
# ----------------------------------------------------------------------------
def _fused_forward_kernel(x_ref, wbig_ref, bbig_ref,
                          w1_ref, b1_ref, w2_ref, b2_ref, w3_ref, b3_ref,
                          out_ref, lhs_ref, flat_ref, *, T, B, H, L):
    # lhs slab layout (lanes, all offsets multiples of H):
    #   layer l occupies lanes [2l*H, (2l+2)*H) as [ input_l | h_l ].
    lhs_ref[...] = jnp.zeros_like(lhs_ref)

    # Cell states stay in vregs; the wave loop is fully unrolled (T+L-1 waves).
    c = [jnp.zeros((B, H), jnp.float32) for _ in range(L)]

    for w in range(T + L - 1):
        # Stage x_t into layer 0's input slot while layer 0 is still active.
        if w < T:
            lhs_ref[:, 0:H] = x_ref[:, w, :]

        # ONE block-diagonal matmul per wave covers every active (layer, step):
        # (B, L*2H) @ (L*2H, L*4H) -> per-layer gates in 128-aligned column blocks.
        gates = jnp.dot(lhs_ref[...], wbig_ref[...],
                        preferred_element_type=jnp.float32) + bbig_ref[...]

        # Active layers at wave w: t = w - l must be in [0, T).
        for l in range(max(0, w - T + 1), min(L - 1, w) + 1):
            t = w - l
            g = gates[:, l * 4 * H:(l + 1) * 4 * H]          # (B, 4H), 128-aligned
            # Two EUP pushes for the whole gate block instead of four.
            sg = jax.nn.sigmoid(g)
            th = jnp.tanh(g)
            i_g = sg[:, 0 * H:1 * H]
            f_g = sg[:, 1 * H:2 * H]
            g_g = th[:, 2 * H:3 * H]
            o_g = sg[:, 3 * H:4 * H]
            c_new = f_g * c[l] + i_g * g_g
            h_new = o_g * jnp.tanh(c_new)
            c[l] = c_new

            # Recurrent slot of layer l (consumed next wave).
            lhs_ref[:, (2 * l + 1) * H:(2 * l + 2) * H] = h_new
            if l + 1 < L:
                # Inter-layer hand-off: input slot of layer l+1 for next wave.
                lhs_ref[:, (2 * l + 2) * H:(2 * l + 3) * H] = h_new
            else:
                # Last layer: write straight into the lane-dense flatten slab.
                flat_ref[:, t * H:(t + 1) * H] = h_new

    # Dense chain (Dropout(0.5) layers are identity in eval mode).
    flat = flat_ref[...]                                             # (B, T*H)
    h1 = jnp.dot(flat, w1_ref[...], preferred_element_type=jnp.float32) + b1_ref[...]
    h2 = jnp.dot(h1, w2_ref[...], preferred_element_type=jnp.float32) + b2_ref[...]
    out_ref[...] = (jnp.dot(h2, w3_ref[...], preferred_element_type=jnp.float32)
                    + b3_ref[...])


def _full_spec(shape):
    nd = len(shape)
    return pl.BlockSpec(shape, lambda *_: (0,) * nd)


def forward_pallas(params, x):
    """x: (B, T, N) batch_first, f32. Returns (B, output_num)."""
    B, T, N = x.shape
    H = N
    L = 4

    wbig, bbig = params["w_big"], params["b_big"]
    w1, b1 = params["w1"], params["b1"]
    w2, b2 = params["w2"], params["b2"]
    w3, b3 = params["w3"], params["b3"]
    out_dim = w3.shape[1]

    kernel = functools.partial(_fused_forward_kernel, T=T, B=B, H=H, L=L)
    args = (x, wbig, bbig, w1, b1, w2, b2, w3, b3)

    return pl.pallas_call(
        kernel,
        out_shape=jax.ShapeDtypeStruct((B, out_dim), jnp.float32),
        in_specs=[_full_spec(a.shape) for a in args],
        out_specs=_full_spec((B, out_dim)),
        scratch_shapes=[
            pltpu.VMEM((B, 2 * L * H), jnp.float32),   # wavefront LHS slab
            pltpu.VMEM((B, T * H), jnp.float32),       # flatten slab
        ],
    )(*args)


# ----------------------------------------------------------------------------
# Parameter init (deterministic, PyTorch-shaped, uniform(-1/sqrt(fan), 1/sqrt(fan)))
# ----------------------------------------------------------------------------
def init_params(key, nodes, win_len, output_num):
    H = nodes
    L = 4
    k_lstm = 1.0 / jnp.sqrt(jnp.float32(H))

    def uni(k, shape, bound):
        return jax.random.uniform(k, shape, jnp.float32, -bound, bound)

    # 4 stacked LSTM layers total (2 per nn.LSTM, hidden == input == nodes).
    w_ih_l, w_hh_l, b_l = [], [], []
    for _ in range(L):
        key, k1, k2, k3, k4 = jax.random.split(key, 5)
        w_ih = uni(k1, (4 * H, nodes), k_lstm)    # PyTorch layout (4H, N_in)
        w_hh = uni(k2, (4 * H, H), k_lstm)        # PyTorch layout (4H, H)
        b_ih = uni(k3, (4 * H,), k_lstm)
        b_hh = uni(k4, (4 * H,), k_lstm)
        w_ih_l.append(w_ih.T)                     # kernel layout (N_in, 4H)
        w_hh_l.append(w_hh.T)                     # kernel layout (H, 4H)
        b_l.append((b_ih + b_hh).reshape(1, 4 * H))

    # Block-diagonal packed weights for the wavefront kernel:
    # block l = [W_ih_l ; W_hh_l]  (2H, 4H)  at rows [2lH,(2l+2)H), cols [4lH,(4l+4)H)
    w_big = jnp.zeros((L * 2 * H, L * 4 * H), jnp.float32)
    for l in range(L):
        blk = jnp.concatenate([w_ih_l[l], w_hh_l[l]], axis=0)
        w_big = w_big.at[l * 2 * H:(l + 1) * 2 * H,
                         l * 4 * H:(l + 1) * 4 * H].set(blk)
    b_big = jnp.concatenate(b_l, axis=1)          # (1, L*4H)

    params = {
        "w_ih_all": jnp.stack(w_ih_l),            # (4, N, 4H)   (reference)
        "w_hh_all": jnp.stack(w_hh_l),            # (4, H, 4H)   (reference)
        "b_all": jnp.stack(b_l),                  # (4, 1, 4H)   (reference)
        "w_big": w_big,                           # (2LH, 4LH)   (kernel)
        "b_big": b_big,                           # (1, 4LH)     (kernel)
    }

    def linear_init(key, din, dout):
        kb = 1.0 / jnp.sqrt(jnp.float32(din))
        key, k1, k2 = jax.random.split(key, 3)
        w = uni(k1, (dout, din), kb)              # PyTorch layout (out, in)
        b = uni(k2, (dout,), kb)
        return key, w.T, b.reshape(1, dout)       # kernel layout (in, out), (1, out)

    key, params["w1"], params["b1"] = linear_init(key, nodes * win_len, 128)
    key, params["w2"], params["b2"] = linear_init(key, 128, 64)
    key, params["w3"], params["b3"] = linear_init(key, 64, output_num)
    return params


# ----------------------------------------------------------------------------
# Pure-JAX reference for correctness checking
# ----------------------------------------------------------------------------
def _lstm_layer_ref(x_tm, w_ih, w_hh, b):
    T, B, _ = x_tm.shape
    H = w_hh.shape[0]

    def step(carry, x_t):
        h, c = carry
        gates = x_t @ w_ih + h @ w_hh + b[0]
        i_g = jax.nn.sigmoid(gates[:, :H])
        f_g = jax.nn.sigmoid(gates[:, H:2 * H])
        g_g = jnp.tanh(gates[:, 2 * H:3 * H])
        o_g = jax.nn.sigmoid(gates[:, 3 * H:])
        c = f_g * c + i_g * g_g
        h = o_g * jnp.tanh(c)
        return (h, c), h

    init = (jnp.zeros((B, H), jnp.float32), jnp.zeros((B, H), jnp.float32))
    _, hs = jax.lax.scan(step, init, x_tm)
    return hs


def forward_ref(params, x):
    B, T, N = x.shape
    h = jnp.transpose(x, (1, 0, 2))
    for l in range(params["w_ih_all"].shape[0]):
        h = _lstm_layer_ref(h, params["w_ih_all"][l], params["w_hh_all"][l],
                            params["b_all"][l])
    h = jnp.transpose(h, (1, 0, 2)).reshape(B, T * N)
    h = h @ params["w1"] + params["b1"]
    h = h @ params["w2"] + params["b2"]
    h = h @ params["w3"] + params["b3"]
    return h


if __name__ == "__main__":
    nodes, win_len, output_num, batch = 32, 8, 4, 2

    key = jax.random.PRNGKey(0)
    key, kx = jax.random.split(key)
    x = jax.random.normal(kx, (batch, win_len, nodes), jnp.float32)

    params = init_params(key, nodes, win_len, output_num)

    out = jax.jit(forward_pallas)(params, x)
    out = jax.block_until_ready(out)

    ref = forward_ref(params, x)
    assert out.shape == (batch, output_num), out.shape
    assert jnp.allclose(out, ref, atol=1e-3, rtol=1e-3), (
        float(jnp.max(jnp.abs(out - ref))))

    print("KERNEL_OK")
</pallas_src>

<mosaic_0001>
module attributes {stable_mosaic.version = 11 : i64} {
  func.func @_fused_forward_kernel(%arg0: memref<2x8x32xf32, #tpu.memory_space<vmem>>, %arg1: memref<256x512xf32, #tpu.memory_space<vmem>>, %arg2: memref<1x512xf32, #tpu.memory_space<vmem>>, %arg3: memref<256x128xf32, #tpu.memory_space<vmem>>, %arg4: memref<1x128xf32, #tpu.memory_space<vmem>>, %arg5: memref<128x64xf32, #tpu.memory_space<vmem>>, %arg6: memref<1x64xf32, #tpu.memory_space<vmem>>, %arg7: memref<64x4xf32, #tpu.memory_space<vmem>>, %arg8: memref<1x4xf32, #tpu.memory_space<vmem>>, %arg9: memref<2x4xf32, #tpu.memory_space<vmem>>, %arg10: memref<2x256xf32, #tpu.memory_space<vmem>>, %arg11: memref<2x256xf32, #tpu.memory_space<vmem>>) attributes {dimension_semantics = [], scalar_prefetch = 0 : i64, scratch_operands = 2 : i64, tpu.core_type = #tpu.core_type<tc>} {
    %cst = arith.constant 0.000000e+00 : f32
    %0 = vector.broadcast %cst : f32 to vector<2x256xf32>
    %c0 = arith.constant 0 : index
    %c0_0 = arith.constant 0 : index
    %1 = vector.load %arg10[%c0, %c0_0] : memref<2x256xf32, #tpu.memory_space<vmem>>, vector<2x256xf32>
    tpu.vector_store %arg10[%c0, %c0_0], %0 {strides = array<i32>} : memref<2x256xf32, #tpu.memory_space<vmem>>, vector<2x256xf32>,
    %cst_1 = arith.constant 0.000000e+00 : f32
    %2 = vector.broadcast %cst_1 : f32 to vector<2x32xf32>
    %cst_2 = arith.constant 0.000000e+00 : f32
    %3 = vector.broadcast %cst_2 : f32 to vector<2x32xf32>
    %cst_3 = arith.constant 0.000000e+00 : f32
    %4 = vector.broadcast %cst_3 : f32 to vector<2x32xf32>
    %cst_4 = arith.constant 0.000000e+00 : f32
    %5 = vector.broadcast %cst_4 : f32 to vector<2x32xf32>
    %c0_5 = arith.constant 0 : index
    %c0_6 = arith.constant 0 : index
    %c0_7 = arith.constant 0 : index
    %6 = vector.load %arg0[%c0_5, %c0_6, %c0_7] : memref<2x8x32xf32, #tpu.memory_space<vmem>>, vector<2x1x32xf32>
    %7 = vector.shape_cast %6 : vector<2x1x32xf32> to vector<2x32xf32>
    %c0_8 = arith.constant 0 : index
    %c0_9 = arith.constant 0 : index
    %8 = vector.load %arg10[%c0_8, %c0_9] : memref<2x256xf32, #tpu.memory_space<vmem>>, vector<2x32xf32>
    tpu.vector_store %arg10[%c0_8, %c0_9], %7 {strides = array<i32>} : memref<2x256xf32, #tpu.memory_space<vmem>>, vector<2x32xf32>,
    %c0_10 = arith.constant 0 : index
    %c0_11 = arith.constant 0 : index
    %9 = vector.load %arg10[%c0_10, %c0_11] : memref<2x256xf32, #tpu.memory_space<vmem>>, vector<2x256xf32>
    %c0_12 = arith.constant 0 : index
    %c0_13 = arith.constant 0 : index
    %10 = vector.load %arg1[%c0_12, %c0_13] : memref<256x512xf32, #tpu.memory_space<vmem>>, vector<256x512xf32>
    %cst_14 = arith.constant dense<0.000000e+00> : vector<2x512xf32>
    %11 = tpu.matmul %9, %10, %cst_14 {dimension_numbers = #tpu.dot_dimension_numbers<[1], [0], [0], [1], [0, 0, 1, 1], [], []>} : vector<2x256xf32>, vector<256x512xf32>, vector<2x512xf32> -> vector<2x512xf32>
    %c0_15 = arith.constant 0 : index
    %c0_16 = arith.constant 0 : index
    %12 = vector.load %arg2[%c0_15, %c0_16] : memref<1x512xf32, #tpu.memory_space<vmem>>, vector<1x512xf32>
    %13 = vector.broadcast %12 : vector<1x512xf32> to vector<2x512xf32>
    %14 = arith.addf %11, %13 : vector<2x512xf32>
    %15 = vector.extract_strided_slice %14 {offsets = [0, 0], sizes = [2, 128], strides = [1, 1]} : vector<2x512xf32> to vector<2x128xf32>
    %16 = arith.negf %15 : vector<2x128xf32>
    %17 = math.exp %16 : vector<2x128xf32>
    %cst_17 = arith.constant 1.000000e+00 : f32
    %18 = vector.broadcast %cst_17 : f32 to vector<2x128xf32>
    %19 = arith.addf %18, %17 : vector<2x128xf32>
    %20 = arith.divf %18, %19 : vector<2x128xf32>
    %21 = math.tanh %15 : vector<2x128xf32>
    %22 = vector.extract_strided_slice %20 {offsets = [0, 0], sizes = [2, 32], strides = [1, 1]} : vector<2x128xf32> to vector<2x32xf32>
    %23 = vector.extract_strided_slice %20 {offsets = [0, 32], sizes = [2, 32], strides = [1, 1]} : vector<2x128xf32> to vector<2x32xf32>
    %24 = vector.extract_strided_slice %21 {offsets = [0, 64], sizes = [2, 32], strides = [1, 1]} : vector<2x128xf32> to vector<2x32xf32>
    %25 = vector.extract_strided_slice %20 {offsets = [0, 96], sizes = [2, 32], strides = [1, 1]} : vector<2x128xf32> to vector<2x32xf32>
    %26 = arith.mulf %23, %2 : vector<2x32xf32>
    %27 = arith.mulf %22, %24 : vector<2x32xf32>
    %28 = arith.addf %26, %27 : vector<2x32xf32>
    %29 = math.tanh %28 : vector<2x32xf32>
    %30 = arith.mulf %25, %29 : vector<2x32xf32>
    %c0_18 = arith.constant 0 : index
    %c32 = arith.constant 32 : index
    %31 = vector.load %arg10[%c0_18, %c32] : memref<2x256xf32, #tpu.memory_space<vmem>>, vector<2x32xf32>
    tpu.vector_store %arg10[%c0_18, %c32], %30 {strides = array<i32>} : memref<2x256xf32, #tpu.memory_space<vmem>>, vector<2x32xf32>,
    %c0_19 = arith.constant 0 : index
    %c64 = arith.constant 64 : index
    %32 = vector.load %arg10[%c0_19, %c64] : memref<2x256xf32, #tpu.memory_space<vmem>>, vector<2x32xf32>
    tpu.vector_store %arg10[%c0_19, %c64], %30 {strides = array<i32>} : memref<2x256xf32, #tpu.memory_space<vmem>>, vector<2x32xf32>,
    %c0_20 = arith.constant 0 : index
    %c1 = arith.constant 1 : index
    %c0_21 = arith.constant 0 : index
    %33 = vector.load %arg0[%c0_20, %c1, %c0_21] : memref<2x8x32xf32, #tpu.memory_space<vmem>>, vector<2x1x32xf32>
    %34 = vector.shape_cast %33 : vector<2x1x32xf32> to vector<2x32xf32>
    %c0_22 = arith.constant 0 : index
    %c0_23 = arith.constant 0 : index
    %35 = vector.load %arg10[%c0_22, %c0_23] : memref<2x256xf32, #tpu.memory_space<vmem>>, vector<2x32xf32>
    tpu.vector_store %arg10[%c0_22, %c0_23], %34 {strides = array<i32>} : memref<2x256xf32, #tpu.memory_space<vmem>>, vector<2x32xf32>,
    %c0_24 = arith.constant 0 : index
    %c0_25 = arith.constant 0 : index
    %36 = vector.load %arg10[%c0_24, %c0_25] : memref<2x256xf32, #tpu.memory_space<vmem>>, vector<2x256xf32>
    %c0_26 = arith.constant 0 : index
    %c0_27 = arith.constant 0 : index
    %37 = vector.load %arg1[%c0_26, %c0_27] : memref<256x512xf32, #tpu.memory_space<vmem>>, vector<256x512xf32>
    %cst_28 = arith.constant dense<0.000000e+00> : vector<2x512xf32>
    %38 = tpu.matmul %36, %37, %cst_28 {dimension_numbers = #tpu.dot_dimension_numbers<[1], [0], [0], [1], [0, 0, 1, 1], [], []>} : vector<2x256xf32>, vector<256x512xf32>, vector<2x512xf32> -> vector<2x512xf32>
    %c0_29 = arith.constant 0 : index
    %c0_30 = arith.constant 0 : index
    %39 = vector.load %arg2[%c0_29, %c0_30] : memref<1x512xf32, #tpu.memory_space<vmem>>, vector<1x512xf32>
    %40 = vector.broadcast %39 : vector<1x512xf32> to vector<2x512xf32>
    %41 = arith.addf %38, %40 : vector<2x512xf32>
    %42 = vector.extract_strided_slice %41 {offsets = [0, 0], sizes = [2, 128], strides = [1, 1]} : vector<2x512xf32> to vector<2x128xf32>
    %43 = arith.negf %42 : vector<2x128xf32>
    %44 = math.exp %43 : vector<2x128xf32>
    %cst_31 = arith.constant 1.000000e+00 : f32
    %45 = vector.broadcast %cst_31 : f32 to vector<2x128xf32>
    %46 = arith.addf %45, %44 : vector<2x128xf32>
    %47 = arith.divf %45, %46 : vector<2x128xf32>
    %48 = math.tanh %42 : vector<2x128xf32>
    %49 = vector.extract_strided_slice %47 {offsets = [0, 0], sizes = [2, 32], strides = [1, 1]} : vector<2x128xf32> to vector<2x32xf32>
    %50 = vector.extract_strided_slice %47 {offsets = [0, 32], sizes = [2, 32], strides = [1, 1]} : vector<2x128xf32> to vector<2x32xf32>
    %51 = vector.extract_strided_slice %48 {offsets = [0, 64], sizes = [2, 32], strides = [1, 1]} : vector<2x128xf32> to vector<2x32xf32>
    %52 = vector.extract_strided_slice %47 {offsets = [0, 96], sizes = [2, 32], strides = [1, 1]} : vector<2x128xf32> to vector<2x32xf32>
    %53 = arith.mulf %50, %28 : vector<2x32xf32>
    %54 = arith.mulf %49, %51 : vector<2x32xf32>
    %55 = arith.addf %53, %54 : vector<2x32xf32>
    %56 = math.tanh %55 : vector<2x32xf32>
    %57 = arith.mulf %52, %56 : vector<2x32xf32>
    %c0_32 = arith.constant 0 : index
    %c32_33 = arith.constant 32 : index
    %58 = vector.load %arg10[%c0_32, %c32_33] : memref<2x256xf32, #tpu.memory_space<vmem>>, vector<2x32xf32>
    tpu.vector_store %arg10[%c0_32, %c32_33], %57 {strides = array<i32>} : memref<2x256xf32, #tpu.memory_space<vmem>>, vector<2x32xf32>,
    %c0_34 = arith.constant 0 : index
    %c64_35 = arith.constant 64 : index
    %59 = vector.load %arg10[%c0_34, %c64_35] : memref<2x256xf32, #tpu.memory_space<vmem>>, vector<2x32xf32>
    tpu.vector_store %arg10[%c0_34, %c64_35], %57 {strides = array<i32>} : memref<2x256xf32, #tpu.memory_space<vmem>>, vector<2x32xf32>,
    %60 = vector.extract_strided_slice %41 {offsets = [0, 128], sizes = [2, 128], strides = [1, 1]} : vector<2x512xf32> to vector<2x128xf32>
    %61 = arith.negf %60 : vector<2x128xf32>
    %62 = math.exp %61 : vector<2x128xf32>
    %cst_36 = arith.constant 1.000000e+00 : f32
    %63 = vector.broadcast %cst_36 : f32 to vector<2x128xf32>
    %64 = arith.addf %63, %62 : vector<2x128xf32>
    %65 = arith.divf %63, %64 : vector<2x128xf32>
    %66 = math.tanh %60 : vector<2x128xf32>
    %67 = vector.extract_strided_slice %65 {offsets = [0, 0], sizes = [2, 32], strides = [1, 1]} : vector<2x128xf32> to vector<2x32xf32>
    %68 = vector.extract_strided_slice %65 {offsets = [0, 32], sizes = [2, 32], strides = [1, 1]} : vector<2x128xf32> to vector<2x32xf32>
    %69 = vector.extract_strided_slice %66 {offsets = [0, 64], sizes = [2, 32], strides = [1, 1]} : vector<2x128xf32> to vector<2x32xf32>
    %70 = vector.extract_strided_slice %65 {offsets = [0, 96], sizes = [2, 32], strides = [1, 1]} : vector<2x128xf32> to vector<2x32xf32>
    %71 = arith.mulf %68, %3 : vector<2x32xf32>
    %72 = arith.mulf %67, %69 : vector<2x32xf32>
    %73 = arith.addf %71, %72 : vector<2x32xf32>
    %74 = math.tanh %73 : vector<2x32xf32>
    %75 = arith.mulf %70, %74 : vector<2x32xf32>
    %c0_37 = arith.constant 0 : index
    %c96 = arith.constant 96 : index
    %76 = vector.load %arg10[%c0_37, %c96] : memref<2x256xf32, #tpu.memory_space<vmem>>, vector<2x32xf32>
    tpu.vector_store %arg10[%c0_37, %c96], %75 {strides = array<i32>} : memref<2x256xf32, #tpu.memory_space<vmem>>, vector<2x32xf32>,
    %c0_38 = arith.constant 0 : index
    %c128 = arith.constant 128 : index
    %77 = vector.load %arg10[%c0_38, %c128] : memref<2x256xf32, #tpu.memory_space<vmem>>, vector<2x32xf32>
    tpu.vector_store %arg10[%c0_38, %c128], %75 {strides = array<i32>} : memref<2x256xf32, #tpu.memory_space<vmem>>, vector<2x32xf32>,
    %c0_39 = arith.constant 0 : index
    %c2 = arith.constant 2 : index
    %c0_40 = arith.constant 0 : index
    %78 = vector.load %arg0[%c0_39, %c2, %c0_40] : memref<2x8x32xf32, #tpu.memory_space<vmem>>, vector<2x1x32xf32>
    %79 = vector.shape_cast %78 : vector<2x1x32xf32> to vector<2x32xf32>
    %c0_41 = arith.constant 0 : index
    %c0_42 = arith.constant 0 : index
    %80 = vector.load %arg10[%c0_41, %c0_42] : memref<2x256xf32, #tpu.memory_space<vmem>>, vector<2x32xf32>
    tpu.vector_store %arg10[%c0_41, %c0_42], %79 {strides = array<i32>} : memref<2x256xf32, #tpu.memory_space<vmem>>, vector<2x32xf32>,
    %c0_43 = arith.constant 0 : index
    %c0_44 = arith.constant 0 : index
    %81 = vector.load %arg10[%c0_43, %c0_44] : memref<2x256xf32, #tpu.memory_space<vmem>>, vector<2x256xf32>
    %c0_45 = arith.constant 0 : index
    %c0_46 = arith.constant 0 : index
    %82 = vector.load %arg1[%c0_45, %c0_46] : memref<256x512xf32, #tpu.memory_space<vmem>>, vector<256x512xf32>
    %cst_47 = arith.constant dense<0.000000e+00> : vector<2x512xf32>
    %83 = tpu.matmul %81, %82, %cst_47 {dimension_numbers = #tpu.dot_dimension_numbers<[1], [0], [0], [1], [0, 0, 1, 1], [], []>} : vector<2x256xf32>, vector<256x512xf32>, vector<2x512xf32> -> vector<2x512xf32>
    %c0_48 = arith.constant 0 : index
    %c0_49 = arith.constant 0 : index
    %84 = vector.load %arg2[%c0_48, %c0_49] : memref<1x512xf32, #tpu.memory_space<vmem>>, vector<1x512xf32>
    %85 = vector.broadcast %84 : vector<1x512xf32> to vector<2x512xf32>
    %86 = arith.addf %83, %85 : vector<2x512xf32>
    %87 = vector.extract_strided_slice %86 {offsets = [0, 0], sizes = [2, 128], strides = [1, 1]} : vector<2x512xf32> to vector<2x128xf32>
    %88 = arith.negf %87 : vector<2x128xf32>
    %89 = math.exp %88 : vector<2x128xf32>
    %cst_50 = arith.constant 1.000000e+00 : f32
    %90 = vector.broadcast %cst_50 : f32 to vector<2x128xf32>
    %91 = arith.addf %90, %89 : vector<2x128xf32>
    %92 = arith.divf %90, %91 : vector<2x128xf32>
    %93 = math.tanh %87 : vector<2x128xf32>
    %94 = vector.extract_strided_slice %92 {offsets = [0, 0], sizes = [2, 32], strides = [1, 1]} : vector<2x128xf32> to vector<2x32xf32>
    %95 = vector.extract_strided_slice %92 {offsets = [0, 32], sizes = [2, 32], strides = [1, 1]} : vector<2x128xf32> to vector<2x32xf32>
    %96 = vector.extract_strided_slice %93 {offsets = [0, 64], sizes = [2, 32], strides = [1, 1]} : vector<2x128xf32> to vector<2x32xf32>
    %97 = vector.extract_strided_slice %92 {offsets = [0, 96], sizes = [2, 32], strides = [1, 1]} : vector<2x128xf32> to vector<2x32xf32>
    %98 = arith.mulf %95, %55 : vector<2x32xf32>
    %99 = arith.mulf %94, %96 : vector<2x32xf32>
    %100 = arith.addf %98, %99 : vector<2x32xf32>
    %101 = math.tanh %100 : vector<2x32xf32>
    %102 = arith.mulf %97, %101 : vector<2x32xf32>
    %c0_51 = arith.constant 0 : index
    %c32_52 = arith.constant 32 : index
    %103 = vector.load %arg10[%c0_51, %c32_52] : memref<2x256xf32, #tpu.memory_space<vmem>>, vector<2x32xf32>
    tpu.vector_store %arg10[%c0_51, %c32_52], %102 {strides = array<i32>} : memref<2x256xf32, #tpu.memory_space<vmem>>, vector<2x32xf32>,
    %c0_53 = arith.constant 0 : index
    %c64_54 = arith.constant 64 : index
    %104 = vector.load %arg10[%c0_53, %c64_54] : memref<2x256xf32, #tpu.memory_space<vmem>>, vector<2x32xf32>
    tpu.vector_store %arg10[%c0_53, %c64_54], %102 {strides = array<i32>} : memref<2x256xf32, #tpu.memory_space<vmem>>, vector<2x32xf32>,
    %105 = vector.extract_strided_slice %86 {offsets = [0, 128], sizes = [2, 128], strides = [1, 1]} : vector<2x512xf32> to vector<2x128xf32>
    %106 = arith.negf %105 : vector<2x128xf32>
    %107 = math.exp %106 : vector<2x128xf32>
    %cst_55 = arith.constant 1.000000e+00 : f32
    %108 = vector.broadcast %cst_55 : f32 to vector<2x128xf32>
    %109 = arith.addf %108, %107 : vector<2x128xf32>
    %110 = arith.divf %108, %109 : vector<2x128xf32>
    %111 = math.tanh %105 : vector<2x128xf32>
    %112 = vector.extract_strided_slice %110 {offsets = [0, 0], sizes = [2, 32], strides = [1, 1]} : vector<2x128xf32> to vector<2x32xf32>
    %113 = vector.extract_strided_slice %110 {offsets = [0, 32], sizes = [2, 32], strides = [1, 1]} : vector<2x128xf32> to vector<2x32xf32>
    %114 = vector.extract_strided_slice %111 {offsets = [0, 64], sizes = [2, 32], strides = [1, 1]} : vector<2x128xf32> to vector<2x32xf32>
    %115 = vector.extract_strided_slice %110 {offsets = [0, 96], sizes = [2, 32], strides = [1, 1]} : vector<2x128xf32> to vector<2x32xf32>
    %116 = arith.mulf %113, %73 : vector<2x32xf32>
    %117 = arith.mulf %112, %114 : vector<2x32xf32>
    %118 = arith.addf %116, %117 : vector<2x32xf32>
    %119 = math.tanh %118 : vector<2x32xf32>
    %120 = arith.mulf %115, %119 : vector<2x32xf32>
    %c0_56 = arith.constant 0 : index
    %c96_57 = arith.constant 96 : index
    %121 = vector.load %arg10[%c0_56, %c96_57] : memref<2x256xf32, #tpu.memory_space<vmem>>, vector<2x32xf32>
    tpu.vector_store %arg10[%c0_56, %c96_57], %120 {strides = array<i32>} : memref<2x256xf32, #tpu.memory_space<vmem>>, vector<2x32xf32>,
    %c0_58 = arith.constant 0 : index
    %c128_59 = arith.constant 128 : index
    %122 = vector.load %arg10[%c0_58, %c128_59] : memref<2x256xf32, #tpu.memory_space<vmem>>, vector<2x32xf32>
    tpu.vector_store %arg10[%c0_58, %c128_59], %120 {strides = array<i32>} : memref<2x256xf32, #tpu.memory_space<vmem>>, vector<2x32xf32>,
    %123 = vector.extract_strided_slice %86 {offsets = [0, 256], sizes = [2, 128], strides = [1, 1]} : vector<2x512xf32> to vector<2x128xf32>
    %124 = arith.negf %123 : vector<2x128xf32>
    %125 = math.exp %124 : vector<2x128xf32>
    %cst_60 = arith.constant 1.000000e+00 : f32
    %126 = vector.broadcast %cst_60 : f32 to vector<2x128xf32>
    %127 = arith.addf %126, %125 : vector<2x128xf32>
    %128 = arith.divf %126, %127 : vector<2x128xf32>
    %129 = math.tanh %123 : vector<2x128xf32>
    %130 = vector.extract_strided_slice %128 {offsets = [0, 0], sizes = [2, 32], strides = [1, 1]} : vector<2x128xf32> to vector<2x32xf32>
    %131 = vector.extract_strided_slice %128 {offsets = [0, 32], sizes = [2, 32], strides = [1, 1]} : vector<2x128xf32> to vector<2x32xf32>
    %132 = vector.extract_strided_slice %129 {offsets = [0, 64], sizes = [2, 32], strides = [1, 1]} : vector<2x128xf32> to vector<2x32xf32>
    %133 = vector.extract_strided_slice %128 {offsets = [0, 96], sizes = [2, 32], strides = [1, 1]} : vector<2x128xf32> to vector<2x32xf32>
    %134 = arith.mulf %131, %4 : vector<2x32xf32>
    %135 = arith.mulf %130, %132 : vector<2x32xf32>
    %136 = arith.addf %134, %135 : vector<2x32xf32>
    %137 = math.tanh %136 : vector<2x32xf32>
    %138 = arith.mulf %133, %137 : vector<2x32xf32>
    %c0_61 = arith.constant 0 : index
    %c160 = arith.constant 160 : index
    %139 = vector.load %arg10[%c0_61, %c160] : memref<2x256xf32, #tpu.memory_space<vmem>>, vector<2x32xf32>
    tpu.vector_store %arg10[%c0_61, %c160], %138 {strides = array<i32>} : memref<2x256xf32, #tpu.memory_space<vmem>>, vector<2x32xf32>,
    %c0_62 = arith.constant 0 : index
    %c192 = arith.constant 192 : index
    %140 = vector.load %arg10[%c0_62, %c192] : memref<2x256xf32, #tpu.memory_space<vmem>>, vector<2x32xf32>
    tpu.vector_store %arg10[%c0_62, %c192], %138 {strides = array<i32>} : memref<2x256xf32, #tpu.memory_space<vmem>>, vector<2x32xf32>,
    %c0_63 = arith.constant 0 : index
    %c3 = arith.constant 3 : index
    %c0_64 = arith.constant 0 : index
    %141 = vector.load %arg0[%c0_63, %c3, %c0_64] : memref<2x8x32xf32, #tpu.memory_space<vmem>>, vector<2x1x32xf32>
    %142 = vector.shape_cast %141 : vector<2x1x32xf32> to vector<2x32xf32>
    %c0_65 = arith.constant 0 : index
    %c0_66 = arith.constant 0 : index
    %143 = vector.load %arg10[%c0_65, %c0_66] : memref<2x256xf32, #tpu.memory_space<vmem>>, vector<2x32xf32>
    tpu.vector_store %arg10[%c0_65, %c0_66], %142 {strides = array<i32>} : memref<2x256xf32, #tpu.memory_space<vmem>>, vector<2x32xf32>,
    %c0_67 = arith.constant 0 : index
    %c0_68 = arith.constant 0 : index
    %144 = vector.load %arg10[%c0_67, %c0_68] : memref<2x256xf32, #tpu.memory_space<vmem>>, vector<2x256xf32>
    %c0_69 = arith.constant 0 : index
    %c0_70 = arith.constant 0 : index
    %145 = vector.load %arg1[%c0_69, %c0_70] : memref<256x512xf32, #tpu.memory_space<vmem>>, vector<256x512xf32>
    %cst_71 = arith.constant dense<0.000000e+00> : vector<2x512xf32>
    %146 = tpu.matmul %144, %145, %cst_71 {dimension_numbers = #tpu.dot_dimension_numbers<[1], [0], [0], [1], [0, 0, 1, 1], [], []>} : vector<2x256xf32>, vector<256x512xf32>, vector<2x512xf32> -> vector<2x512xf32>
    %c0_72 = arith.constant 0 : index
    %c0_73 = arith.constant 0 : index
    %147 = vector.load %arg2[%c0_72, %c0_73] : memref<1x512xf32, #tpu.memory_space<vmem>>, vector<1x512xf32>
    %148 = vector.broadcast %147 : vector<1x512xf32> to vector<2x512xf32>
    %149 = arith.addf %146, %148 : vector<2x512xf32>
    %150 = vector.extract_strided_slice %149 {offsets = [0, 0], sizes = [2, 128], strides = [1, 1]} : vector<2x512xf32> to vector<2x128xf32>
    %151 = arith.negf %150 : vector<2x128xf32>
    %152 = math.exp %151 : vector<2x128xf32>
    %cst_74 = arith.constant 1.000000e+00 : f32
    %153 = vector.broadcast %cst_74 : f32 to vector<2x128xf32>
    %154 = arith.addf %153, %152 : vector<2x128xf32>
    %155 = arith.divf %153, %154 : vector<2x128xf32>
    %156 = math.tanh %150 : vector<2x128xf32>
    %157 = vector.extract_strided_slice %155 {offsets = [0, 0], sizes = [2, 32], strides = [1, 1]} : vector<2x128xf32> to vector<2x32xf32>
    %158 = vector.extract_strided_slice %155 {offsets = [0, 32], sizes = [2, 32], strides = [1, 1]} : vector<2x128xf32> to vector<2x32xf32>
    %159 = vector.extract_strided_slice %156 {offsets = [0, 64], sizes = [2, 32], strides = [1, 1]} : vector<2x128xf32> to vector<2x32xf32>
    %160 = vector.extract_strided_slice %155 {offsets = [0, 96], sizes = [2, 32], strides = [1, 1]} : vector<2x128xf32> to vector<2x32xf32>
    %161 = arith.mulf %158, %100 : vector<2x32xf32>
    %162 = arith.mulf %157, %159 : vector<2x32xf32>
    %163 = arith.addf %161, %162 : vector<2x32xf32>
    %164 = math.tanh %163 : vector<2x32xf32>
    %165 = arith.mulf %160, %164 : vector<2x32xf32>
    %c0_75 = arith.constant 0 : index
    %c32_76 = arith.constant 32 : index
    %166 = vector.load %arg10[%c0_75, %c32_76] : memref<2x256xf32, #tpu.memory_space<vmem>>, vector<2x32xf32>
    tpu.vector_store %arg10[%c0_75, %c32_76], %165 {strides = array<i32>} : memref<2x256xf32, #tpu.memory_space<vmem>>, vector<2x32xf32>,
    %c0_77 = arith.constant 0 : index
    %c64_78 = arith.constant 64 : index
    %167 = vector.load %arg10[%c0_77, %c64_78] : memref<2x256xf32, #tpu.memory_space<vmem>>, vector<2x32xf32>
    tpu.vector_store %arg10[%c0_77, %c64_78], %165 {strides = array<i32>} : memref<2x256xf32, #tpu.memory_space<vmem>>, vector<2x32xf32>,
    %168 = vector.extract_strided_slice %149 {offsets = [0, 128], sizes = [2, 128], strides = [1, 1]} : vector<2x512xf32> to vector<2x128xf32>
    %169 = arith.negf %168 : vector<2x128xf32>
    %170 = math.exp %169 : vector<2x128xf32>
    %cst_79 = arith.constant 1.000000e+00 : f32
    %171 = vector.broadcast %cst_79 : f32 to vector<2x128xf32>
    %172 = arith.addf %171, %170 : vector<2x128xf32>
    %173 = arith.divf %171, %172 : vector<2x128xf32>
    %174 = math.tanh %168 : vector<2x128xf32>
    %175 = vector.extract_strided_slice %173 {offsets = [0, 0], sizes = [2, 32], strides = [1, 1]} : vector<2x128xf32> to vector<2x32xf32>
    %176 = vector.extract_strided_slice %173 {offsets = [0, 32], sizes = [2, 32], strides = [1, 1]} : vector<2x128xf32> to vector<2x32xf32>
    %177 = vector.extract_strided_slice %174 {offsets = [0, 64], sizes = [2, 32], strides = [1, 1]} : vector<2x128xf32> to vector<2x32xf32>
    %178 = vector.extract_strided_slice %173 {offsets = [0, 96], sizes = [2, 32], strides = [1, 1]} : vector<2x128xf32> to vector<2x32xf32>
    %179 = arith.mulf %176, %118 : vector<2x32xf32>
    %180 = arith.mulf %175, %177 : vector<2x32xf32>
    %181 = arith.addf %179, %180 : vector<2x32xf32>
    %182 = math.tanh %181 : vector<2x32xf32>
    %183 = arith.mulf %178, %182 : vector<2x32xf32>
    %c0_80 = arith.constant 0 : index
    %c96_81 = arith.constant 96 : index
    %184 = vector.load %arg10[%c0_80, %c96_81] : memref<2x256xf32, #tpu.memory_space<vmem>>, vector<2x32xf32>
    tpu.vector_store %arg10[%c0_80, %c96_81], %183 {strides = array<i32>} : memref<2x256xf32, #tpu.memory_space<vmem>>, vector<2x32xf32>,
    %c0_82 = arith.constant 0 : index
    %c128_83 = arith.constant 128 : index
    %185 = vector.load %arg10[%c0_82, %c128_83] : memref<2x256xf32, #tpu.memory_space<vmem>>, vector<2x32xf32>
    tpu.vector_store %arg10[%c0_82, %c128_83], %183 {strides = array<i32>} : memref<2x256xf32, #tpu.memory_space<vmem>>, vector<2x32xf32>,
    %186 = vector.extract_strided_slice %149 {offsets = [0, 256], sizes = [2, 128], strides = [1, 1]} : vector<2x512xf32> to vector<2x128xf32>
    %187 = arith.negf %186 : vector<2x128xf32>
    %188 = math.exp %187 : vector<2x128xf32>
    %cst_84 = arith.constant 1.000000e+00 : f32
    %189 = vector.broadcast %cst_84 : f32 to vector<2x128xf32>
    %190 = arith.addf %189, %188 : vector<2x128xf32>
    %191 = arith.divf %189, %190 : vector<2x128xf32>
    %192 = math.tanh %186 : vector<2x128xf32>
    %193 = vector.extract_strided_slice %191 {offsets = [0, 0], sizes = [2, 32], strides = [1, 1]} : vector<2x128xf32> to vector<2x32xf32>
    %194 = vector.extract_strided_slice %191 {offsets = [0, 32], sizes = [2, 32], strides = [1, 1]} : vector<2x128xf32> to vector<2x32xf32>
    %195 = vector.extract_strided_slice %192 {offsets = [0, 64], sizes = [2, 32], strides = [1, 1]} : vector<2x128xf32> to vector<2x32xf32>
    %196 = vector.extract_strided_slice %191 {offsets = [0, 96], sizes = [2, 32], strides = [1, 1]} : vector<2x128xf32> to vector<2x32xf32>
    %197 = arith.mulf %194, %136 : vector<2x32xf32>
    %198 = arith.mulf %193, %195 : vector<2x32xf32>
    %199 = arith.addf %197, %198 : vector<2x32xf32>
    %200 = math.tanh %199 : vector<2x32xf32>
    %201 = arith.mulf %196, %200 : vector<2x32xf32>
    %c0_85 = arith.constant 0 : index
    %c160_86 = arith.constant 160 : index
    %202 = vector.load %arg10[%c0_85, %c160_86] : memref<2x256xf32, #tpu.memory_space<vmem>>, vector<2x32xf32>
    tpu.vector_store %arg10[%c0_85, %c160_86], %201 {strides = array<i32>} : memref<2x256xf32, #tpu.memory_space<vmem>>, vector<2x32xf32>,
    %c0_87 = arith.constant 0 : index
    %c192_88 = arith.constant 192 : index
    %203 = vector.load %arg10[%c0_87, %c192_88] : memref<2x256xf32, #tpu.memory_space<vmem>>, vector<2x32xf32>
    tpu.vector_store %arg10[%c0_87, %c192_88], %201 {strides = array<i32>} : memref<2x256xf32, #tpu.memory_space<vmem>>, vector<2x32xf32>,
    %204 = vector.extract_strided_slice %149 {offsets = [0, 384], sizes = [2, 128], strides = [1, 1]} : vector<2x512xf32> to vector<2x128xf32>
    %205 = arith.negf %204 : vector<2x128xf32>
    %206 = math.exp %205 : vector<2x128xf32>
    %cst_89 = arith.constant 1.000000e+00 : f32
    %207 = vector.broadcast %cst_89 : f32 to vector<2x128xf32>
    %208 = arith.addf %207, %206 : vector<2x128xf32>
    %209 = arith.divf %207, %208 : vector<2x128xf32>
    %210 = math.tanh %204 : vector<2x128xf32>
    %211 = vector.extract_strided_slice %209 {offsets = [0, 0], sizes = [2, 32], strides = [1, 1]} : vector<2x128xf32> to vector<2x32xf32>
    %212 = vector.extract_strided_slice %209 {offsets = [0, 32], sizes = [2, 32], strides = [1, 1]} : vector<2x128xf32> to vector<2x32xf32>
    %213 = vector.extract_strided_slice %210 {offsets = [0, 64], sizes = [2, 32], strides = [1, 1]} : vector<2x128xf32> to vector<2x32xf32>
    %214 = vector.extract_strided_slice %209 {offsets = [0, 96], sizes = [2, 32], strides = [1, 1]} : vector<2x128xf32> to vector<2x32xf32>
    %215 = arith.mulf %212, %5 : vector<2x32xf32>
    %216 = arith.mulf %211, %213 : vector<2x32xf32>
    %217 = arith.addf %215, %216 : vector<2x32xf32>
    %218 = math.tanh %217 : vector<2x32xf32>
    %219 = arith.mulf %214, %218 : vector<2x32xf32>
    %c0_90 = arith.constant 0 : index
    %c224 = arith.constant 224 : index
    %220 = vector.load %arg10[%c0_90, %c224] : memref<2x256xf32, #tpu.memory_space<vmem>>, vector<2x32xf32>
    tpu.vector_store %arg10[%c0_90, %c224], %219 {strides = array<i32>} : memref<2x256xf32, #tpu.memory_space<vmem>>, vector<2x32xf32>,
    %c0_91 = arith.constant 0 : index
    %c0_92 = arith.constant 0 : index
    %221 = vector.load %arg11[%c0_91, %c0_92] : memref<2x256xf32, #tpu.memory_space<vmem>>, vector<2x32xf32>
    tpu.vector_store %arg11[%c0_91, %c0_92], %219 {strides = array<i32>} : memref<2x256xf32, #tpu.memory_space<vmem>>, vector<2x32xf32>,
    %c0_93 = arith.constant 0 : index
    %c4 = arith.constant 4 : index
    %c0_94 = arith.constant 0 : index
    %222 = vector.load %arg0[%c0_93, %c4, %c0_94] : memref<2x8x32xf32, #tpu.memory_space<vmem>>, vector<2x1x32xf32>
    %223 = vector.shape_cast %222 : vector<2x1x32xf32> to vector<2x32xf32>
    %c0_95 = arith.constant 0 : index
    %c0_96 = arith.constant 0 : index
    %224 = vector.load %arg10[%c0_95, %c0_96] : memref<2x256xf32, #tpu.memory_space<vmem>>, vector<2x32xf32>
    tpu.vector_store %arg10[%c0_95, %c0_96], %223 {strides = array<i32>} : memref<2x256xf32, #tpu.memory_space<vmem>>, vector<2x32xf32>,
    %c0_97 = arith.constant 0 : index
    %c0_98 = arith.constant 0 : index
    %225 = vector.load %arg10[%c0_97, %c0_98] : memref<2x256xf32, #tpu.memory_space<vmem>>, vector<2x256xf32>
    %c0_99 = arith.constant 0 : index
    %c0_100 = arith.constant 0 : index
    %226 = vector.load %arg1[%c0_99, %c0_100] : memref<256x512xf32, #tpu.memory_space<vmem>>, vector<256x512xf32>
    %cst_101 = arith.constant dense<0.000000e+00> : vector<2x512xf32>
    %227 = tpu.matmul %225, %226, %cst_101 {dimension_numbers = #tpu.dot_dimension_numbers<[1], [0], [0], [1], [0, 0, 1, 1], [], []>} : vector<2x256xf32>, vector<256x512xf32>, vector<2x512xf32> -> vector<2x512xf32>
    %c0_102 = arith.constant 0 : index
    %c0_103 = arith.constant 0 : index
    %228 = vector.load %arg2[%c0_102, %c0_103] : memref<1x512xf32, #tpu.memory_space<vmem>>, vector<1x512xf32>
    %229 = vector.broadcast %228 : vector<1x512xf32> to vector<2x512xf32>
    %230 = arith.addf %227, %229 : vector<2x512xf32>
    %231 = vector.extract_strided_slice %230 {offsets = [0, 0], sizes = [2, 128], strides = [1, 1]} : vector<2x512xf32> to vector<2x128xf32>
    %232 = arith.negf %231 : vector<2x128xf32>
    %233 = math.exp %232 : vector<2x128xf32>
    %cst_104 = arith.constant 1.000000e+00 : f32
    %234 = vector.broadcast %cst_104 : f32 to vector<2x128xf32>
    %235 = arith.addf %234, %233 : vector<2x128xf32>
    %236 = arith.divf %234, %235 : vector<2x128xf32>
    %237 = math.tanh %231 : vector<2x128xf32>
    %238 = vector.extract_strided_slice %236 {offsets = [0, 0], sizes = [2, 32], strides = [1, 1]} : vector<2x128xf32> to vector<2x32xf32>
    %239 = vector.extract_strided_slice %236 {offsets = [0, 32], sizes = [2, 32], strides = [1, 1]} : vector<2x128xf32> to vector<2x32xf32>
    %240 = vector.extract_strided_slice %237 {offsets = [0, 64], sizes = [2, 32], strides = [1, 1]} : vector<2x128xf32> to vector<2x32xf32>
    %241 = vector.extract_strided_slice %236 {offsets = [0, 96], sizes = [2, 32], strides = [1, 1]} : vector<2x128xf32> to vector<2x32xf32>
    %242 = arith.mulf %239, %163 : vector<2x32xf32>
    %243 = arith.mulf %238, %240 : vector<2x32xf32>
    %244 = arith.addf %242, %243 : vector<2x32xf32>
    %245 = math.tanh %244 : vector<2x32xf32>
    %246 = arith.mulf %241, %245 : vector<2x32xf32>
    %c0_105 = arith.constant 0 : index
    %c32_106 = arith.constant 32 : index
    %247 = vector.load %arg10[%c0_105, %c32_106] : memref<2x256xf32, #tpu.memory_space<vmem>>, vector<2x32xf32>
    tpu.vector_store %arg10[%c0_105, %c32_106], %246 {strides = array<i32>} : memref<2x256xf32, #tpu.memory_space<vmem>>, vector<2x32xf32>,
    %c0_107 = arith.constant 0 : index
    %c64_108 = arith.constant 64 : index
    %248 = vector.load %arg10[%c0_107, %c64_108] : memref<2x256xf32, #tpu.memory_space<vmem>>, vector<2x32xf32>
    tpu.vector_store %arg10[%c0_107, %c64_108], %246 {strides = array<i32>} : memref<2x256xf32, #tpu.memory_space<vmem>>, vector<2x32xf32>,
    %249 = vector.extract_strided_slice %230 {offsets = [0, 128], sizes = [2, 128], strides = [1, 1]} : vector<2x512xf32> to vector<2x128xf32>
    %250 = arith.negf %249 : vector<2x128xf32>
    %251 = math.exp %250 : vector<2x128xf32>
    %cst_109 = arith.constant 1.000000e+00 : f32
    %252 = vector.broadcast %cst_109 : f32 to vector<2x128xf32>
    %253 = arith.addf %252, %251 : vector<2x128xf32>
    %254 = arith.divf %252, %253 : vector<2x128xf32>
    %255 = math.tanh %249 : vector<2x128xf32>
    %256 = vector.extract_strided_slice %254 {offsets = [0, 0], sizes = [2, 32], strides = [1, 1]} : vector<2x128xf32> to vector<2x32xf32>
    %257 = vector.extract_strided_slice %254 {offsets = [0, 32], sizes = [2, 32], strides = [1, 1]} : vector<2x128xf32> to vector<2x32xf32>
    %258 = vector.extract_strided_slice %255 {offsets = [0, 64], sizes = [2, 32], strides = [1, 1]} : vector<2x128xf32> to vector<2x32xf32>
    %259 = vector.extract_strided_slice %254 {offsets = [0, 96], sizes = [2, 32], strides = [1, 1]} : vector<2x128xf32> to vector<2x32xf32>
    %260 = arith.mulf %257, %181 : vector<2x32xf32>
    %261 = arith.mulf %256, %258 : vector<2x32xf32>
    %262 = arith.addf %260, %261 : vector<2x32xf32>
    %263 = math.tanh %262 : vector<2x32xf32>
    %264 = arith.mulf %259, %263 : vector<2x32xf32>
    %c0_110 = arith.constant 0 : index
    %c96_111 = arith.constant 96 : index
    %265 = vector.load %arg10[%c0_110, %c96_111] : memref<2x256xf32, #tpu.memory_space<vmem>>, vector<2x32xf32>
    tpu.vector_store %arg10[%c0_110, %c96_111], %264 {strides = array<i32>} : memref<2x256xf32, #tpu.memory_space<vmem>>, vector<2x32xf32>,
    %c0_112 = arith.constant 0 : index
    %c128_113 = arith.constant 128 : index
    %266 = vector.load %arg10[%c0_112, %c128_113] : memref<2x256xf32, #tpu.memory_space<vmem>>, vector<2x32xf32>
    tpu.vector_store %arg10[%c0_112, %c128_113], %264 {strides = array<i32>} : memref<2x256xf32, #tpu.memory_space<vmem>>, vector<2x32xf32>,
    %267 = vector.extract_strided_slice %230 {offsets = [0, 256], sizes = [2, 128], strides = [1, 1]} : vector<2x512xf32> to vector<2x128xf32>
    %268 = arith.negf %267 : vector<2x128xf32>
    %269 = math.exp %268 : vector<2x128xf32>
    %cst_114 = arith.constant 1.000000e+00 : f32
    %270 = vector.broadcast %cst_114 : f32 to vector<2x128xf32>
    %271 = arith.addf %270, %269 : vector<2x128xf32>
    %272 = arith.divf %270, %271 : vector<2x128xf32>
    %273 = math.tanh %267 : vector<2x128xf32>
    %274 = vector.extract_strided_slice %272 {offsets = [0, 0], sizes = [2, 32], strides = [1, 1]} : vector<2x128xf32> to vector<2x32xf32>
    %275 = vector.extract_strided_slice %272 {offsets = [0, 32], sizes = [2, 32], strides = [1, 1]} : vector<2x128xf32> to vector<2x32xf32>
    %276 = vector.extract_strided_slice %273 {offsets = [0, 64], sizes = [2, 32], strides = [1, 1]} : vector<2x128xf32> to vector<2x32xf32>
    %277 = vector.extract_strided_slice %272 {offsets = [0, 96], sizes = [2, 32], strides = [1, 1]} : vector<2x128xf32> to vector<2x32xf32>
    %278 = arith.mulf %275, %199 : vector<2x32xf32>
    %279 = arith.mulf %274, %276 : vector<2x32xf32>
    %280 = arith.addf %278, %279 : vector<2x32xf32>
    %281 = math.tanh %280 : vector<2x32xf32>
    %282 = arith.mulf %277, %281 : vector<2x32xf32>
    %c0_115 = arith.constant 0 : index
    %c160_116 = arith.constant 160 : index
    %283 = vector.load %arg10[%c0_115, %c160_116] : memref<2x256xf32, #tpu.memory_space<vmem>>, vector<2x32xf32>
    tpu.vector_store %arg10[%c0_115, %c160_116], %282 {strides = array<i32>} : memref<2x256xf32, #tpu.memory_space<vmem>>, vector<2x32xf32>,
    %c0_117 = arith.constant 0 : index
    %c192_118 = arith.constant 192 : index
    %284 = vector.load %arg10[%c0_117, %c192_118] : memref<2x256xf32, #tpu.memory_space<vmem>>, vector<2x32xf32>
    tpu.vector_store %arg10[%c0_117, %c192_118], %282 {strides = array<i32>} : memref<2x256xf32, #tpu.memory_space<vmem>>, vector<2x32xf32>,
    %285 = vector.extract_strided_slice %230 {offsets = [0, 384], sizes = [2, 128], strides = [1, 1]} : vector<2x512xf32> to vector<2x128xf32>
    %286 = arith.negf %285 : vector<2x128xf32>
    %287 = math.exp %286 : vector<2x128xf32>
    %cst_119 = arith.constant 1.000000e+00 : f32
    %288 = vector.broadcast %cst_119 : f32 to vector<2x128xf32>
    %289 = arith.addf %288, %287 : vector<2x128xf32>
    %290 = arith.divf %288, %289 : vector<2x128xf32>
    %291 = math.tanh %285 : vector<2x128xf32>
    %292 = vector.extract_strided_slice %290 {offsets = [0, 0], sizes = [2, 32], strides = [1, 1]} : vector<2x128xf32> to vector<2x32xf32>
    %293 = vector.extract_strided_slice %290 {offsets = [0, 32], sizes = [2, 32], strides = [1, 1]} : vector<2x128xf32> to vector<2x32xf32>
    %294 = vector.extract_strided_slice %291 {offsets = [0, 64], sizes = [2, 32], strides = [1, 1]} : vector<2x128xf32> to vector<2x32xf32>
    %295 = vector.extract_strided_slice %290 {offsets = [0, 96], sizes = [2, 32], strides = [1, 1]} : vector<2x128xf32> to vector<2x32xf32>
    %296 = arith.mulf %293, %217 : vector<2x32xf32>
    %297 = arith.mulf %292, %294 : vector<2x32xf32>
    %298 = arith.addf %296, %297 : vector<2x32xf32>
    %299 = math.tanh %298 : vector<2x32xf32>
    %300 = arith.mulf %295, %299 : vector<2x32xf32>
    %c0_120 = arith.constant 0 : index
    %c224_121 = arith.constant 224 : index
    %301 = vector.load %arg10[%c0_120, %c224_121] : memref<2x256xf32, #tpu.memory_space<vmem>>, vector<2x32xf32>
    tpu.vector_store %arg10[%c0_120, %c224_121], %300 {strides = array<i32>} : memref<2x256xf32, #tpu.memory_space<vmem>>, vector<2x32xf32>,
    %c0_122 = arith.constant 0 : index
    %c32_123 = arith.constant 32 : index
    %302 = vector.load %arg11[%c0_122, %c32_123] : memref<2x256xf32, #tpu.memory_space<vmem>>, vector<2x32xf32>
    tpu.vector_store %arg11[%c0_122, %c32_123], %300 {strides = array<i32>} : memref<2x256xf32, #tpu.memory_space<vmem>>, vector<2x32xf32>,
    %c0_124 = arith.constant 0 : index
    %c5 = arith.constant 5 : index
    %c0_125 = arith.constant 0 : index
    %303 = vector.load %arg0[%c0_124, %c5, %c0_125] : memref<2x8x32xf32, #tpu.memory_space<vmem>>, vector<2x1x32xf32>
    %304 = vector.shape_cast %303 : vector<2x1x32xf32> to vector<2x32xf32>
    %c0_126 = arith.constant 0 : index
    %c0_127 = arith.constant 0 : index
    %305 = vector.load %arg10[%c0_126, %c0_127] : memref<2x256xf32, #tpu.memory_space<vmem>>, vector<2x32xf32>
    tpu.vector_store %arg10[%c0_126, %c0_127], %304 {strides = array<i32>} : memref<2x256xf32, #tpu.memory_space<vmem>>, vector<2x32xf32>,
    %c0_128 = arith.constant 0 : index
    %c0_129 = arith.constant 0 : index
    %306 = vector.load %arg10[%c0_128, %c0_129] : memref<2x256xf32, #tpu.memory_space<vmem>>, vector<2x256xf32>
    %c0_130 = arith.constant 0 : index
    %c0_131 = arith.constant 0 : index
    %307 = vector.load %arg1[%c0_130, %c0_131] : memref<256x512xf32, #tpu.memory_space<vmem>>, vector<256x512xf32>
    %cst_132 = arith.constant dense<0.000000e+00> : vector<2x512xf32>
    %308 = tpu.matmul %306, %307, %cst_132 {dimension_numbers = #tpu.dot_dimension_numbers<[1], [0], [0], [1], [0, 0, 1, 1], [], []>} : vector<2x256xf32>, vector<256x512xf32>, vector<2x512xf32> -> vector<2x512xf32>
    %c0_133 = arith.constant 0 : index
    %c0_134 = arith.constant 0 : index
    %309 = vector.load %arg2[%c0_133, %c0_134] : memref<1x512xf32, #tpu.memory_space<vmem>>, vector<1x512xf32>
    %310 = vector.broadcast %309 : vector<1x512xf32> to vector<2x512xf32>
    %311 = arith.addf %308, %310 : vector<2x512xf32>
    %312 = vector.extract_strided_slice %311 {offsets = [0, 0], sizes = [2, 128], strides = [1, 1]} : vector<2x512xf32> to vector<2x128xf32>
    %313 = arith.negf %312 : vector<2x128xf32>
    %314 = math.exp %313 : vector<2x128xf32>
    %cst_135 = arith.constant 1.000000e+00 : f32
    %315 = vector.broadcast %cst_135 : f32 to vector<2x128xf32>
    %316 = arith.addf %315, %314 : vector<2x128xf32>
    %317 = arith.divf %315, %316 : vector<2x128xf32>
    %318 = math.tanh %312 : vector<2x128xf32>
    %319 = vector.extract_strided_slice %317 {offsets = [0, 0], sizes = [2, 32], strides = [1, 1]} : vector<2x128xf32> to vector<2x32xf32>
    %320 = vector.extract_strided_slice %317 {offsets = [0, 32], sizes = [2, 32], strides = [1, 1]} : vector<2x128xf32> to vector<2x32xf32>
    %321 = vector.extract_strided_slice %318 {offsets = [0, 64], sizes = [2, 32], strides = [1, 1]} : vector<2x128xf32> to vector<2x32xf32>
    %322 = vector.extract_strided_slice %317 {offsets = [0, 96], sizes = [2, 32], strides = [1, 1]} : vector<2x128xf32> to vector<2x32xf32>
    %323 = arith.mulf %320, %244 : vector<2x32xf32>
    %324 = arith.mulf %319, %321 : vector<2x32xf32>
    %325 = arith.addf %323, %324 : vector<2x32xf32>
    %326 = math.tanh %325 : vector<2x32xf32>
    %327 = arith.mulf %322, %326 : vector<2x32xf32>
    %c0_136 = arith.constant 0 : index
    %c32_137 = arith.constant 32 : index
    %328 = vector.load %arg10[%c0_136, %c32_137] : memref<2x256xf32, #tpu.memory_space<vmem>>, vector<2x32xf32>
    tpu.vector_store %arg10[%c0_136, %c32_137], %327 {strides = array<i32>} : memref<2x256xf32, #tpu.memory_space<vmem>>, vector<2x32xf32>,
    %c0_138 = arith.constant 0 : index
    %c64_139 = arith.constant 64 : index
    %329 = vector.load %arg10[%c0_138, %c64_139] : memref<2x256xf32, #tpu.memory_space<vmem>>, vector<2x32xf32>
    tpu.vector_store %arg10[%c0_138, %c64_139], %327 {strides = array<i32>} : memref<2x256xf32, #tpu.memory_space<vmem>>, vector<2x32xf32>,
    %330 = vector.extract_strided_slice %311 {offsets = [0, 128], sizes = [2, 128], strides = [1, 1]} : vector<2x512xf32> to vector<2x128xf32>
    %331 = arith.negf %330 : vector<2x128xf32>
    %332 = math.exp %331 : vector<2x128xf32>
    %cst_140 = arith.constant 1.000000e+00 : f32
    %333 = vector.broadcast %cst_140 : f32 to vector<2x128xf32>
    %334 = arith.addf %333, %332 : vector<2x128xf32>
    %335 = arith.divf %333, %334 : vector<2x128xf32>
    %336 = math.tanh %330 : vector<2x128xf32>
    %337 = vector.extract_strided_slice %335 {offsets = [0, 0], sizes = [2, 32], strides = [1, 1]} : vector<2x128xf32> to vector<2x32xf32>
    %338 = vector.extract_strided_slice %335 {offsets = [0, 32], sizes = [2, 32], strides = [1, 1]} : vector<2x128xf32> to vector<2x32xf32>
    %339 = vector.extract_strided_slice %336 {offsets = [0, 64], sizes = [2, 32], strides = [1, 1]} : vector<2x128xf32> to vector<2x32xf32>
    %340 = vector.extract_strided_slice %335 {offsets = [0, 96], sizes = [2, 32], strides = [1, 1]} : vector<2x128xf32> to vector<2x32xf32>
    %341 = arith.mulf %338, %262 : vector<2x32xf32>
    %342 = arith.mulf %337, %339 : vector<2x32xf32>
    %343 = arith.addf %341, %342 : vector<2x32xf32>
    %344 = math.tanh %343 : vector<2x32xf32>
    %345 = arith.mulf %340, %344 : vector<2x32xf32>
    %c0_141 = arith.constant 0 : index
    %c96_142 = arith.constant 96 : index
    %346 = vector.load %arg10[%c0_141, %c96_142] : memref<2x256xf32, #tpu.memory_space<vmem>>, vector<2x32xf32>
    tpu.vector_store %arg10[%c0_141, %c96_142], %345 {strides = array<i32>} : memref<2x256xf32, #tpu.memory_space<vmem>>, vector<2x32xf32>,
    %c0_143 = arith.constant 0 : index
    %c128_144 = arith.constant 128 : index
    %347 = vector.load %arg10[%c0_143, %c128_144] : memref<2x256xf32, #tpu.memory_space<vmem>>, vector<2x32xf32>
    tpu.vector_store %arg10[%c0_143, %c128_144], %345 {strides = array<i32>} : memref<2x256xf32, #tpu.memory_space<vmem>>, vector<2x32xf32>,
    %348 = vector.extract_strided_slice %311 {offsets = [0, 256], sizes = [2, 128], strides = [1, 1]} : vector<2x512xf32> to vector<2x128xf32>
    %349 = arith.negf %348 : vector<2x128xf32>
    %350 = math.exp %349 : vector<2x128xf32>
    %cst_145 = arith.constant 1.000000e+00 : f32
    %351 = vector.broadcast %cst_145 : f32 to vector<2x128xf32>
    %352 = arith.addf %351, %350 : vector<2x128xf32>
    %353 = arith.divf %351, %352 : vector<2x128xf32>
    %354 = math.tanh %348 : vector<2x128xf32>
    %355 = vector.extract_strided_slice %353 {offsets = [0, 0], sizes = [2, 32], strides = [1, 1]} : vector<2x128xf32> to vector<2x32xf32>
    %356 = vector.extract_strided_slice %353 {offsets = [0, 32], sizes = [2, 32], strides = [1, 1]} : vector<2x128xf32> to vector<2x32xf32>
    %357 = vector.extract_strided_slice %354 {offsets = [0, 64], sizes = [2, 32], strides = [1, 1]} : vector<2x128xf32> to vector<2x32xf32>
    %358 = vector.extract_strided_slice %353 {offsets = [0, 96], sizes = [2, 32], strides = [1, 1]} : vector<2x128xf32> to vector<2x32xf32>
    %359 = arith.mulf %356, %280 : vector<2x32xf32>
    %360 = arith.mulf %355, %357 : vector<2x32xf32>
    %361 = arith.addf %359, %360 : vector<2x32xf32>
    %362 = math.tanh %361 : vector<2x32xf32>
    %363 = arith.mulf %358, %362 : vector<2x32xf32>
    %c0_146 = arith.constant 0 : index
    %c160_147 = arith.constant 160 : index
    %364 = vector.load %arg10[%c0_146, %c160_147] : memref<2x256xf32, #tpu.memory_space<vmem>>, vector<2x32xf32>
    tpu.vector_store %arg10[%c0_146, %c160_147], %363 {strides = array<i32>} : memref<2x256xf32, #tpu.memory_space<vmem>>, vector<2x32xf32>,
    %c0_148 = arith.constant 0 : index
    %c192_149 = arith.constant 192 : index
    %365 = vector.load %arg10[%c0_148, %c192_149] : memref<2x256xf32, #tpu.memory_space<vmem>>, vector<2x32xf32>
    tpu.vector_store %arg10[%c0_148, %c192_149], %363 {strides = array<i32>} : memref<2x256xf32, #tpu.memory_space<vmem>>, vector<2x32xf32>,
    %366 = vector.extract_strided_slice %311 {offsets = [0, 384], sizes = [2, 128], strides = [1, 1]} : vector<2x512xf32> to vector<2x128xf32>
    %367 = arith.negf %366 : vector<2x128xf32>
    %368 = math.exp %367 : vector<2x128xf32>
    %cst_150 = arith.constant 1.000000e+00 : f32
    %369 = vector.broadcast %cst_150 : f32 to vector<2x128xf32>
    %370 = arith.addf %369, %368 : vector<2x128xf32>
    %371 = arith.divf %369, %370 : vector<2x128xf32>
    %372 = math.tanh %366 : vector<2x128xf32>
    %373 = vector.extract_strided_slice %371 {offsets = [0, 0], sizes = [2, 32], strides = [1, 1]} : vector<2x128xf32> to vector<2x32xf32>
    %374 = vector.extract_strided_slice %371 {offsets = [0, 32], sizes = [2, 32], strides = [1, 1]} : vector<2x128xf32> to vector<2x32xf32>
    %375 = vector.extract_strided_slice %372 {offsets = [0, 64], sizes = [2, 32], strides = [1, 1]} : vector<2x128xf32> to vector<2x32xf32>
    %376 = vector.extract_strided_slice %371 {offsets = [0, 96], sizes = [2, 32], strides = [1, 1]} : vector<2x128xf32> to vector<2x32xf32>
    %377 = arith.mulf %374, %298 : vector<2x32xf32>
    %378 = arith.mulf %373, %375 : vector<2x32xf32>
    %379 = arith.addf %377, %378 : vector<2x32xf32>
    %380 = math.tanh %379 : vector<2x32xf32>
    %381 = arith.mulf %376, %380 : vector<2x32xf32>
    %c0_151 = arith.constant 0 : index
    %c224_152 = arith.constant 224 : index
    %382 = vector.load %arg10[%c0_151, %c224_152] : memref<2x256xf32, #tpu.memory_space<vmem>>, vector<2x32xf32>
    tpu.vector_store %arg10[%c0_151, %c224_152], %381 {strides = array<i32>} : memref<2x256xf32, #tpu.memory_space<vmem>>, vector<2x32xf32>,
    %c0_153 = arith.constant 0 : index
    %c64_154 = arith.constant 64 : index
    %383 = vector.load %arg11[%c0_153, %c64_154] : memref<2x256xf32, #tpu.memory_space<vmem>>, vector<2x32xf32>
    tpu.vector_store %arg11[%c0_153, %c64_154], %381 {strides = array<i32>} : memref<2x256xf32, #tpu.memory_space<vmem>>, vector<2x32xf32>,
    %c0_155 = arith.constant 0 : index
    %c6 = arith.constant 6 : index
    %c0_156 = arith.constant 0 : index
    %384 = vector.load %arg0[%c0_155, %c6, %c0_156] : memref<2x8x32xf32, #tpu.memory_space<vmem>>, vector<2x1x32xf32>
    %385 = vector.shape_cast %384 : vector<2x1x32xf32> to vector<2x32xf32>
    %c0_157 = arith.constant 0 : index
    %c0_158 = arith.constant 0 : index
    %386 = vector.load %arg10[%c0_157, %c0_158] : memref<2x256xf32, #tpu.memory_space<vmem>>, vector<2x32xf32>
    tpu.vector_store %arg10[%c0_157, %c0_158], %385 {strides = array<i32>} : memref<2x256xf32, #tpu.memory_space<vmem>>, vector<2x32xf32>,
    %c0_159 = arith.constant 0 : index
    %c0_160 = arith.constant 0 : index
    %387 = vector.load %arg10[%c0_159, %c0_160] : memref<2x256xf32, #tpu.memory_space<vmem>>, vector<2x256xf32>
    %c0_161 = arith.constant 0 : index
    %c0_162 = arith.constant 0 : index
    %388 = vector.load %arg1[%c0_161, %c0_162] : memref<256x512xf32, #tpu.memory_space<vmem>>, vector<256x512xf32>
    %cst_163 = arith.constant dense<0.000000e+00> : vector<2x512xf32>
    %389 = tpu.matmul %387, %388, %cst_163 {dimension_numbers = #tpu.dot_dimension_numbers<[1], [0], [0], [1], [0, 0, 1, 1], [], []>} : vector<2x256xf32>, vector<256x512xf32>, vector<2x512xf32> -> vector<2x512xf32>
    %c0_164 = arith.constant 0 : index
    %c0_165 = arith.constant 0 : index
    %390 = vector.load %arg2[%c0_164, %c0_165] : memref<1x512xf32, #tpu.memory_space<vmem>>, vector<1x512xf32>
    %391 = vector.broadcast %390 : vector<1x512xf32> to vector<2x512xf32>
    %392 = arith.addf %389, %391 : vector<2x512xf32>
    %393 = vector.extract_strided_slice %392 {offsets = [0, 0], sizes = [2, 128], strides = [1, 1]} : vector<2x512xf32> to vector<2x128xf32>
    %394 = arith.negf %393 : vector<2x128xf32>
    %395 = math.exp %394 : vector<2x128xf32>
    %cst_166 = arith.constant 1.000000e+00 : f32
    %396 = vector.broadcast %cst_166 : f32 to vector<2x128xf32>
    %397 = arith.addf %396, %395 : vector<2x128xf32>
    %398 = arith.divf %396, %397 : vector<2x128xf32>
    %399 = math.tanh %393 : vector<2x128xf32>
    %400 = vector.extract_strided_slice %398 {offsets = [0, 0], sizes = [2, 32], strides = [1, 1]} : vector<2x128xf32> to vector<2x32xf32>
    %401 = vector.extract_strided_slice %398 {offsets = [0, 32], sizes = [2, 32], strides = [1, 1]} : vector<2x128xf32> to vector<2x32xf32>
    %402 = vector.extract_strided_slice %399 {offsets = [0, 64], sizes = [2, 32], strides = [1, 1]} : vector<2x128xf32> to vector<2x32xf32>
    %403 = vector.extract_strided_slice %398 {offsets = [0, 96], sizes = [2, 32], strides = [1, 1]} : vector<2x128xf32> to vector<2x32xf32>
    %404 = arith.mulf %401, %325 : vector<2x32xf32>
    %405 = arith.mulf %400, %402 : vector<2x32xf32>
    %406 = arith.addf %404, %405 : vector<2x32xf32>
    %407 = math.tanh %406 : vector<2x32xf32>
    %408 = arith.mulf %403, %407 : vector<2x32xf32>
    %c0_167 = arith.constant 0 : index
    %c32_168 = arith.constant 32 : index
    %409 = vector.load %arg10[%c0_167, %c32_168] : memref<2x256xf32, #tpu.memory_space<vmem>>, vector<2x32xf32>
    tpu.vector_store %arg10[%c0_167, %c32_168], %408 {strides = array<i32>} : memref<2x256xf32, #tpu.memory_space<vmem>>, vector<2x32xf32>,
    %c0_169 = arith.constant 0 : index
    %c64_170 = arith.constant 64 : index
    %410 = vector.load %arg10[%c0_169, %c64_170] : memref<2x256xf32, #tpu.memory_space<vmem>>, vector<2x32xf32>
    tpu.vector_store %arg10[%c0_169, %c64_170], %408 {strides = array<i32>} : memref<2x256xf32, #tpu.memory_space<vmem>>, vector<2x32xf32>,
    %411 = vector.extract_strided_slice %392 {offsets = [0, 128], sizes = [2, 128], strides = [1, 1]} : vector<2x512xf32> to vector<2x128xf32>
    %412 = arith.negf %411 : vector<2x128xf32>
    %413 = math.exp %412 : vector<2x128xf32>
    %cst_171 = arith.constant 1.000000e+00 : f32
    %414 = vector.broadcast %cst_171 : f32 to vector<2x128xf32>
    %415 = arith.addf %414, %413 : vector<2x128xf32>
    %416 = arith.divf %414, %415 : vector<2x128xf32>
    %417 = math.tanh %411 : vector<2x128xf32>
    %418 = vector.extract_strided_slice %416 {offsets = [0, 0], sizes = [2, 32], strides = [1, 1]} : vector<2x128xf32> to vector<2x32xf32>
    %419 = vector.extract_strided_slice %416 {offsets = [0, 32], sizes = [2, 32], strides = [1, 1]} : vector<2x128xf32> to vector<2x32xf32>
    %420 = vector.extract_strided_slice %417 {offsets = [0, 64], sizes = [2, 32], strides = [1, 1]} : vector<2x128xf32> to vector<2x32xf32>
    %421 = vector.extract_strided_slice %416 {offsets = [0, 96], sizes = [2, 32], strides = [1, 1]} : vector<2x128xf32> to vector<2x32xf32>
    %422 = arith.mulf %419, %343 : vector<2x32xf32>
    %423 = arith.mulf %418, %420 : vector<2x32xf32>
    %424 = arith.addf %422, %423 : vector<2x32xf32>
    %425 = math.tanh %424 : vector<2x32xf32>
    %426 = arith.mulf %421, %425 : vector<2x32xf32>
    %c0_172 = arith.constant 0 : index
    %c96_173 = arith.constant 96 : index
    %427 = vector.load %arg10[%c0_172, %c96_173] : memref<2x256xf32, #tpu.memory_space<vmem>>, vector<2x32xf32>
    tpu.vector_store %arg10[%c0_172, %c96_173], %426 {strides = array<i32>} : memref<2x256xf32, #tpu.memory_space<vmem>>, vector<2x32xf32>,
    %c0_174 = arith.constant 0 : index
    %c128_175 = arith.constant 128 : index
    %428 = vector.load %arg10[%c0_174, %c128_175] : memref<2x256xf32, #tpu.memory_space<vmem>>, vector<2x32xf32>
    tpu.vector_store %arg10[%c0_174, %c128_175], %426 {strides = array<i32>} : memref<2x256xf32, #tpu.memory_space<vmem>>, vector<2x32xf32>,
    %429 = vector.extract_strided_slice %392 {offsets = [0, 256], sizes = [2, 128], strides = [1, 1]} : vector<2x512xf32> to vector<2x128xf32>
    %430 = arith.negf %429 : vector<2x128xf32>
    %431 = math.exp %430 : vector<2x128xf32>
    %cst_176 = arith.constant 1.000000e+00 : f32
    %432 = vector.broadcast %cst_176 : f32 to vector<2x128xf32>
    %433 = arith.addf %432, %431 : vector<2x128xf32>
    %434 = arith.divf %432, %433 : vector<2x128xf32>
    %435 = math.tanh %429 : vector<2x128xf32>
    %436 = vector.extract_strided_slice %434 {offsets = [0, 0], sizes = [2, 32], strides = [1, 1]} : vector<2x128xf32> to vector<2x32xf32>
    %437 = vector.extract_strided_slice %434 {offsets = [0, 32], sizes = [2, 32], strides = [1, 1]} : vector<2x128xf32> to vector<2x32xf32>
    %438 = vector.extract_strided_slice %435 {offsets = [0, 64], sizes = [2, 32], strides = [1, 1]} : vector<2x128xf32> to vector<2x32xf32>
    %439 = vector.extract_strided_slice %434 {offsets = [0, 96], sizes = [2, 32], strides = [1, 1]} : vector<2x128xf32> to vector<2x32xf32>
    %440 = arith.mulf %437, %361 : vector<2x32xf32>
    %441 = arith.mulf %436, %438 : vector<2x32xf32>
    %442 = arith.addf %440, %441 : vector<2x32xf32>
    %443 = math.tanh %442 : vector<2x32xf32>
    %444 = arith.mulf %439, %443 : vector<2x32xf32>
    %c0_177 = arith.constant 0 : index
    %c160_178 = arith.constant 160 : index
    %445 = vector.load %arg10[%c0_177, %c160_178] : memref<2x256xf32, #tpu.memory_space<vmem>>, vector<2x32xf32>
    tpu.vector_store %arg10[%c0_177, %c160_178], %444 {strides = array<i32>} : memref<2x256xf32, #tpu.memory_space<vmem>>, vector<2x32xf32>,
    %c0_179 = arith.constant 0 : index
    %c192_180 = arith.constant 192 : index
    %446 = vector.load %arg10[%c0_179, %c192_180] : memref<2x256xf32, #tpu.memory_space<vmem>>, vector<2x32xf32>
    tpu.vector_store %arg10[%c0_179, %c192_180], %444 {strides = array<i32>} : memref<2x256xf32, #tpu.memory_space<vmem>>, vector<2x32xf32>,
    %447 = vector.extract_strided_slice %392 {offsets = [0, 384], sizes = [2, 128], strides = [1, 1]} : vector<2x512xf32> to vector<2x128xf32>
    %448 = arith.negf %447 : vector<2x128xf32>
    %449 = math.exp %448 : vector<2x128xf32>
    %cst_181 = arith.constant 1.000000e+00 : f32
    %450 = vector.broadcast %cst_181 : f32 to vector<2x128xf32>
    %451 = arith.addf %450, %449 : vector<2x128xf32>
    %452 = arith.divf %450, %451 : vector<2x128xf32>
    %453 = math.tanh %447 : vector<2x128xf32>
    %454 = vector.extract_strided_slice %452 {offsets = [0, 0], sizes = [2, 32], strides = [1, 1]} : vector<2x128xf32> to vector<2x32xf32>
    %455 = vector.extract_strided_slice %452 {offsets = [0, 32], sizes = [2, 32], strides = [1, 1]} : vector<2x128xf32> to vector<2x32xf32>
    %456 = vector.extract_strided_slice %453 {offsets = [0, 64], sizes = [2, 32], strides = [1, 1]} : vector<2x128xf32> to vector<2x32xf32>
    %457 = vector.extract_strided_slice %452 {offsets = [0, 96], sizes = [2, 32], strides = [1, 1]} : vector<2x128xf32> to vector<2x32xf32>
    %458 = arith.mulf %455, %379 : vector<2x32xf32>
    %459 = arith.mulf %454, %456 : vector<2x32xf32>
    %460 = arith.addf %458, %459 : vector<2x32xf32>
    %461 = math.tanh %460 : vector<2x32xf32>
    %462 = arith.mulf %457, %461 : vector<2x32xf32>
    %c0_182 = arith.constant 0 : index
    %c224_183 = arith.constant 224 : index
    %463 = vector.load %arg10[%c0_182, %c224_183] : memref<2x256xf32, #tpu.memory_space<vmem>>, vector<2x32xf32>
    tpu.vector_store %arg10[%c0_182, %c224_183], %462 {strides = array<i32>} : memref<2x256xf32, #tpu.memory_space<vmem>>, vector<2x32xf32>,
    %c0_184 = arith.constant 0 : index
    %c96_185 = arith.constant 96 : index
    %464 = vector.load %arg11[%c0_184, %c96_185] : memref<2x256xf32, #tpu.memory_space<vmem>>, vector<2x32xf32>
    tpu.vector_store %arg11[%c0_184, %c96_185], %462 {strides = array<i32>} : memref<2x256xf32, #tpu.memory_space<vmem>>, vector<2x32xf32>,
    %c0_186 = arith.constant 0 : index
    %c7 = arith.constant 7 : index
    %c0_187 = arith.constant 0 : index
    %465 = vector.load %arg0[%c0_186, %c7, %c0_187] : memref<2x8x32xf32, #tpu.memory_space<vmem>>, vector<2x1x32xf32>
    %466 = vector.shape_cast %465 : vector<2x1x32xf32> to vector<2x32xf32>
    %c0_188 = arith.constant 0 : index
    %c0_189 = arith.constant 0 : index
    %467 = vector.load %arg10[%c0_188, %c0_189] : memref<2x256xf32, #tpu.memory_space<vmem>>, vector<2x32xf32>
    tpu.vector_store %arg10[%c0_188, %c0_189], %466 {strides = array<i32>} : memref<2x256xf32, #tpu.memory_space<vmem>>, vector<2x32xf32>,
    %c0_190 = arith.constant 0 : index
    %c0_191 = arith.constant 0 : index
    %468 = vector.load %arg10[%c0_190, %c0_191] : memref<2x256xf32, #tpu.memory_space<vmem>>, vector<2x256xf32>
    %c0_192 = arith.constant 0 : index
    %c0_193 = arith.constant 0 : index
    %469 = vector.load %arg1[%c0_192, %c0_193] : memref<256x512xf32, #tpu.memory_space<vmem>>, vector<256x512xf32>
    %cst_194 = arith.constant dense<0.000000e+00> : vector<2x512xf32>
    %470 = tpu.matmul %468, %469, %cst_194 {dimension_numbers = #tpu.dot_dimension_numbers<[1], [0], [0], [1], [0, 0, 1, 1], [], []>} : vector<2x256xf32>, vector<256x512xf32>, vector<2x512xf32> -> vector<2x512xf32>
    %c0_195 = arith.constant 0 : index
    %c0_196 = arith.constant 0 : index
    %471 = vector.load %arg2[%c0_195, %c0_196] : memref<1x512xf32, #tpu.memory_space<vmem>>, vector<1x512xf32>
    %472 = vector.broadcast %471 : vector<1x512xf32> to vector<2x512xf32>
    %473 = arith.addf %470, %472 : vector<2x512xf32>
    %474 = vector.extract_strided_slice %473 {offsets = [0, 0], sizes = [2, 128], strides = [1, 1]} : vector<2x512xf32> to vector<2x128xf32>
    %475 = arith.negf %474 : vector<2x128xf32>
    %476 = math.exp %475 : vector<2x128xf32>
    %cst_197 = arith.constant 1.000000e+00 : f32
    %477 = vector.broadcast %cst_197 : f32 to vector<2x128xf32>
    %478 = arith.addf %477, %476 : vector<2x128xf32>
    %479 = arith.divf %477, %478 : vector<2x128xf32>
    %480 = math.tanh %474 : vector<2x128xf32>
    %481 = vector.extract_strided_slice %479 {offsets = [0, 0], sizes = [2, 32], strides = [1, 1]} : vector<2x128xf32> to vector<2x32xf32>
    %482 = vector.extract_strided_slice %479 {offsets = [0, 32], sizes = [2, 32], strides = [1, 1]} : vector<2x128xf32> to vector<2x32xf32>
    %483 = vector.extract_strided_slice %480 {offsets = [0, 64], sizes = [2, 32], strides = [1, 1]} : vector<2x128xf32> to vector<2x32xf32>
    %484 = vector.extract_strided_slice %479 {offsets = [0, 96], sizes = [2, 32], strides = [1, 1]} : vector<2x128xf32> to vector<2x32xf32>
    %485 = arith.mulf %482, %406 : vector<2x32xf32>
    %486 = arith.mulf %481, %483 : vector<2x32xf32>
    %487 = arith.addf %485, %486 : vector<2x32xf32>
    %488 = math.tanh %487 : vector<2x32xf32>
    %489 = arith.mulf %484, %488 : vector<2x32xf32>
    %c0_198 = arith.constant 0 : index
    %c32_199 = arith.constant 32 : index
    %490 = vector.load %arg10[%c0_198, %c32_199] : memref<2x256xf32, #tpu.memory_space<vmem>>, vector<2x32xf32>
    tpu.vector_store %arg10[%c0_198, %c32_199], %489 {strides = array<i32>} : memref<2x256xf32, #tpu.memory_space<vmem>>, vector<2x32xf32>,
    %c0_200 = arith.constant 0 : index
    %c64_201 = arith.constant 64 : index
    %491 = vector.load %arg10[%c0_200, %c64_201] : memref<2x256xf32, #tpu.memory_space<vmem>>, vector<2x32xf32>
    tpu.vector_store %arg10[%c0_200, %c64_201], %489 {strides = array<i32>} : memref<2x256xf32, #tpu.memory_space<vmem>>, vector<2x32xf32>,
    %492 = vector.extract_strided_slice %473 {offsets = [0, 128], sizes = [2, 128], strides = [1, 1]} : vector<2x512xf32> to vector<2x128xf32>
    %493 = arith.negf %492 : vector<2x128xf32>
    %494 = math.exp %493 : vector<2x128xf32>
    %cst_202 = arith.constant 1.000000e+00 : f32
    %495 = vector.broadcast %cst_202 : f32 to vector<2x128xf32>
    %496 = arith.addf %495, %494 : vector<2x128xf32>
    %497 = arith.divf %495, %496 : vector<2x128xf32>
    %498 = math.tanh %492 : vector<2x128xf32>
    %499 = vector.extract_strided_slice %497 {offsets = [0, 0], sizes = [2, 32], strides = [1, 1]} : vector<2x128xf32> to vector<2x32xf32>
    %500 = vector.extract_strided_slice %497 {offsets = [0, 32], sizes = [2, 32], strides = [1, 1]} : vector<2x128xf32> to vector<2x32xf32>
    %501 = vector.extract_strided_slice %498 {offsets = [0, 64], sizes = [2, 32], strides = [1, 1]} : vector<2x128xf32> to vector<2x32xf32>
    %502 = vector.extract_strided_slice %497 {offsets = [0, 96], sizes = [2, 32], strides = [1, 1]} : vector<2x128xf32> to vector<2x32xf32>
    %503 = arith.mulf %500, %424 : vector<2x32xf32>
    %504 = arith.mulf %499, %501 : vector<2x32xf32>
    %505 = arith.addf %503, %504 : vector<2x32xf32>
    %506 = math.tanh %505 : vector<2x32xf32>
    %507 = arith.mulf %502, %506 : vector<2x32xf32>
    %c0_203 = arith.constant 0 : index
    %c96_204 = arith.constant 96 : index
    %508 = vector.load %arg10[%c0_203, %c96_204] : memref<2x256xf32, #tpu.memory_space<vmem>>, vector<2x32xf32>
    tpu.vector_store %arg10[%c0_203, %c96_204], %507 {strides = array<i32>} : memref<2x256xf32, #tpu.memory_space<vmem>>, vector<2x32xf32>,
    %c0_205 = arith.constant 0 : index
    %c128_206 = arith.constant 128 : index
    %509 = vector.load %arg10[%c0_205, %c128_206] : memref<2x256xf32, #tpu.memory_space<vmem>>, vector<2x32xf32>
    tpu.vector_store %arg10[%c0_205, %c128_206], %507 {strides = array<i32>} : memref<2x256xf32, #tpu.memory_space<vmem>>, vector<2x32xf32>,
    %510 = vector.extract_strided_slice %473 {offsets = [0, 256], sizes = [2, 128], strides = [1, 1]} : vector<2x512xf32> to vector<2x128xf32>
    %511 = arith.negf %510 : vector<2x128xf32>
    %512 = math.exp %511 : vector<2x128xf32>
    %cst_207 = arith.constant 1.000000e+00 : f32
    %513 = vector.broadcast %cst_207 : f32 to vector<2x128xf32>
    %514 = arith.addf %513, %512 : vector<2x128xf32>
    %515 = arith.divf %513, %514 : vector<2x128xf32>
    %516 = math.tanh %510 : vector<2x128xf32>
    %517 = vector.extract_strided_slice %515 {offsets = [0, 0], sizes = [2, 32], strides = [1, 1]} : vector<2x128xf32> to vector<2x32xf32>
    %518 = vector.extract_strided_slice %515 {offsets = [0, 32], sizes = [2, 32], strides = [1, 1]} : vector<2x128xf32> to vector<2x32xf32>
    %519 = vector.extract_strided_slice %516 {offsets = [0, 64], sizes = [2, 32], strides = [1, 1]} : vector<2x128xf32> to vector<2x32xf32>
    %520 = vector.extract_strided_slice %515 {offsets = [0, 96], sizes = [2, 32], strides = [1, 1]} : vector<2x128xf32> to vector<2x32xf32>
    %521 = arith.mulf %518, %442 : vector<2x32xf32>
    %522 = arith.mulf %517, %519 : vector<2x32xf32>
    %523 = arith.addf %521, %522 : vector<2x32xf32>
    %524 = math.tanh %523 : vector<2x32xf32>
    %525 = arith.mulf %520, %524 : vector<2x32xf32>
    %c0_208 = arith.constant 0 : index
    %c160_209 = arith.constant 160 : index
    %526 = vector.load %arg10[%c0_208, %c160_209] : memref<2x256xf32, #tpu.memory_space<vmem>>, vector<2x32xf32>
    tpu.vector_store %arg10[%c0_208, %c160_209], %525 {strides = array<i32>} : memref<2x256xf32, #tpu.memory_space<vmem>>, vector<2x32xf32>,
    %c0_210 = arith.constant 0 : index
    %c192_211 = arith.constant 192 : index
    %527 = vector.load %arg10[%c0_210, %c192_211] : memref<2x256xf32, #tpu.memory_space<vmem>>, vector<2x32xf32>
    tpu.vector_store %arg10[%c0_210, %c192_211], %525 {strides = array<i32>} : memref<2x256xf32, #tpu.memory_space<vmem>>, vector<2x32xf32>,
    %528 = vector.extract_strided_slice %473 {offsets = [0, 384], sizes = [2, 128], strides = [1, 1]} : vector<2x512xf32> to vector<2x128xf32>
    %529 = arith.negf %528 : vector<2x128xf32>
    %530 = math.exp %529 : vector<2x128xf32>
    %cst_212 = arith.constant 1.000000e+00 : f32
    %531 = vector.broadcast %cst_212 : f32 to vector<2x128xf32>
    %532 = arith.addf %531, %530 : vector<2x128xf32>
    %533 = arith.divf %531, %532 : vector<2x128xf32>
    %534 = math.tanh %528 : vector<2x128xf32>
    %535 = vector.extract_strided_slice %533 {offsets = [0, 0], sizes = [2, 32], strides = [1, 1]} : vector<2x128xf32> to vector<2x32xf32>
    %536 = vector.extract_strided_slice %533 {offsets = [0, 32], sizes = [2, 32], strides = [1, 1]} : vector<2x128xf32> to vector<2x32xf32>
    %537 = vector.extract_strided_slice %534 {offsets = [0, 64], sizes = [2, 32], strides = [1, 1]} : vector<2x128xf32> to vector<2x32xf32>
    %538 = vector.extract_strided_slice %533 {offsets = [0, 96], sizes = [2, 32], strides = [1, 1]} : vector<2x128xf32> to vector<2x32xf32>
    %539 = arith.mulf %536, %460 : vector<2x32xf32>
    %540 = arith.mulf %535, %537 : vector<2x32xf32>
    %541 = arith.addf %539, %540 : vector<2x32xf32>
    %542 = math.tanh %541 : vector<2x32xf32>
    %543 = arith.mulf %538, %542 : vector<2x32xf32>
    %c0_213 = arith.constant 0 : index
    %c224_214 = arith.constant 224 : index
    %544 = vector.load %arg10[%c0_213, %c224_214] : memref<2x256xf32, #tpu.memory_space<vmem>>, vector<2x32xf32>
    tpu.vector_store %arg10[%c0_213, %c224_214], %543 {strides = array<i32>} : memref<2x256xf32, #tpu.memory_space<vmem>>, vector<2x32xf32>,
    %c0_215 = arith.constant 0 : index
    %c128_216 = arith.constant 128 : index
    %545 = vector.load %arg11[%c0_215, %c128_216] : memref<2x256xf32, #tpu.memory_space<vmem>>, vector<2x32xf32>
    tpu.vector_store %arg11[%c0_215, %c128_216], %543 {strides = array<i32>} : memref<2x256xf32, #tpu.memory_space<vmem>>, vector<2x32xf32>,
    %c0_217 = arith.constant 0 : index
    %c0_218 = arith.constant 0 : index
    %546 = vector.load %arg10[%c0_217, %c0_218] : memref<2x256xf32, #tpu.memory_space<vmem>>, vector<2x256xf32>
    %c0_219 = arith.constant 0 : index
    %c0_220 = arith.constant 0 : index
    %547 = vector.load %arg1[%c0_219, %c0_220] : memref<256x512xf32, #tpu.memory_space<vmem>>, vector<256x512xf32>
    %cst_221 = arith.constant dense<0.000000e+00> : vector<2x512xf32>
    %548 = tpu.matmul %546, %547, %cst_221 {dimension_numbers = #tpu.dot_dimension_numbers<[1], [0], [0], [1], [0, 0, 1, 1], [], []>} : vector<2x256xf32>, vector<256x512xf32>, vector<2x512xf32> -> vector<2x512xf32>
    %c0_222 = arith.constant 0 : index
    %c0_223 = arith.constant 0 : index
    %549 = vector.load %arg2[%c0_222, %c0_223] : memref<1x512xf32, #tpu.memory_space<vmem>>, vector<1x512xf32>
    %550 = vector.broadcast %549 : vector<1x512xf32> to vector<2x512xf32>
    %551 = arith.addf %548, %550 : vector<2x512xf32>
    %552 = vector.extract_strided_slice %551 {offsets = [0, 128], sizes = [2, 128], strides = [1, 1]} : vector<2x512xf32> to vector<2x128xf32>
    %553 = arith.negf %552 : vector<2x128xf32>
    %554 = math.exp %553 : vector<2x128xf32>
    %cst_224 = arith.constant 1.000000e+00 : f32
    %555 = vector.broadcast %cst_224 : f32 to vector<2x128xf32>
    %556 = arith.addf %555, %554 : vector<2x128xf32>
    %557 = arith.divf %555, %556 : vector<2x128xf32>
    %558 = math.tanh %552 : vector<2x128xf32>
    %559 = vector.extract_strided_slice %557 {offsets = [0, 0], sizes = [2, 32], strides = [1, 1]} : vector<2x128xf32> to vector<2x32xf32>
    %560 = vector.extract_strided_slice %557 {offsets = [0, 32], sizes = [2, 32], strides = [1, 1]} : vector<2x128xf32> to vector<2x32xf32>
    %561 = vector.extract_strided_slice %558 {offsets = [0, 64], sizes = [2, 32], strides = [1, 1]} : vector<2x128xf32> to vector<2x32xf32>
    %562 = vector.extract_strided_slice %557 {offsets = [0, 96], sizes = [2, 32], strides = [1, 1]} : vector<2x128xf32> to vector<2x32xf32>
    %563 = arith.mulf %560, %505 : vector<2x32xf32>
    %564 = arith.mulf %559, %561 : vector<2x32xf32>
    %565 = arith.addf %563, %564 : vector<2x32xf32>
    %566 = math.tanh %565 : vector<2x32xf32>
    %567 = arith.mulf %562, %566 : vector<2x32xf32>
    %c0_225 = arith.constant 0 : index
    %c96_226 = arith.constant 96 : index
    %568 = vector.load %arg10[%c0_225, %c96_226] : memref<2x256xf32, #tpu.memory_space<vmem>>, vector<2x32xf32>
    tpu.vector_store %arg10[%c0_225, %c96_226], %567 {strides = array<i32>} : memref<2x256xf32, #tpu.memory_space<vmem>>, vector<2x32xf32>,
    %c0_227 = arith.constant 0 : index
    %c128_228 = arith.constant 128 : index
    %569 = vector.load %arg10[%c0_227, %c128_228] : memref<2x256xf32, #tpu.memory_space<vmem>>, vector<2x32xf32>
    tpu.vector_store %arg10[%c0_227, %c128_228], %567 {strides = array<i32>} : memref<2x256xf32, #tpu.memory_space<vmem>>, vector<2x32xf32>,
    %570 = vector.extract_strided_slice %551 {offsets = [0, 256], sizes = [2, 128], strides = [1, 1]} : vector<2x512xf32> to vector<2x128xf32>
    %571 = arith.negf %570 : vector<2x128xf32>
    %572 = math.exp %571 : vector<2x128xf32>
    %cst_229 = arith.constant 1.000000e+00 : f32
    %573 = vector.broadcast %cst_229 : f32 to vector<2x128xf32>
    %574 = arith.addf %573, %572 : vector<2x128xf32>
    %575 = arith.divf %573, %574 : vector<2x128xf32>
    %576 = math.tanh %570 : vector<2x128xf32>
    %577 = vector.extract_strided_slice %575 {offsets = [0, 0], sizes = [2, 32], strides = [1, 1]} : vector<2x128xf32> to vector<2x32xf32>
    %578 = vector.extract_strided_slice %575 {offsets = [0, 32], sizes = [2, 32], strides = [1, 1]} : vector<2x128xf32> to vector<2x32xf32>
    %579 = vector.extract_strided_slice %576 {offsets = [0, 64], sizes = [2, 32], strides = [1, 1]} : vector<2x128xf32> to vector<2x32xf32>
    %580 = vector.extract_strided_slice %575 {offsets = [0, 96], sizes = [2, 32], strides = [1, 1]} : vector<2x128xf32> to vector<2x32xf32>
    %581 = arith.mulf %578, %523 : vector<2x32xf32>
    %582 = arith.mulf %577, %579 : vector<2x32xf32>
    %583 = arith.addf %581, %582 : vector<2x32xf32>
    %584 = math.tanh %583 : vector<2x32xf32>
    %585 = arith.mulf %580, %584 : vector<2x32xf32>
    %c0_230 = arith.constant 0 : index
    %c160_231 = arith.constant 160 : index
    %586 = vector.load %arg10[%c0_230, %c160_231] : memref<2x256xf32, #tpu.memory_space<vmem>>, vector<2x32xf32>
    tpu.vector_store %arg10[%c0_230, %c160_231], %585 {strides = array<i32>} : memref<2x256xf32, #tpu.memory_space<vmem>>, vector<2x32xf32>,
    %c0_232 = arith.constant 0 : index
    %c192_233 = arith.constant 192 : index
    %587 = vector.load %arg10[%c0_232, %c192_233] : memref<2x256xf32, #tpu.memory_space<vmem>>, vector<2x32xf32>
    tpu.vector_store %arg10[%c0_232, %c192_233], %585 {strides = array<i32>} : memref<2x256xf32, #tpu.memory_space<vmem>>, vector<2x32xf32>,
    %588 = vector.extract_strided_slice %551 {offsets = [0, 384], sizes = [2, 128], strides = [1, 1]} : vector<2x512xf32> to vector<2x128xf32>
    %589 = arith.negf %588 : vector<2x128xf32>
    %590 = math.exp %589 : vector<2x128xf32>
    %cst_234 = arith.constant 1.000000e+00 : f32
    %591 = vector.broadcast %cst_234 : f32 to vector<2x128xf32>
    %592 = arith.addf %591, %590 : vector<2x128xf32>
    %593 = arith.divf %591, %592 : vector<2x128xf32>
    %594 = math.tanh %588 : vector<2x128xf32>
    %595 = vector.extract_strided_slice %593 {offsets = [0, 0], sizes = [2, 32], strides = [1, 1]} : vector<2x128xf32> to vector<2x32xf32>
    %596 = vector.extract_strided_slice %593 {offsets = [0, 32], sizes = [2, 32], strides = [1, 1]} : vector<2x128xf32> to vector<2x32xf32>
    %597 = vector.extract_strided_slice %594 {offsets = [0, 64], sizes = [2, 32], strides = [1, 1]} : vector<2x128xf32> to vector<2x32xf32>
    %598 = vector.extract_strided_slice %593 {offsets = [0, 96], sizes = [2, 32], strides = [1, 1]} : vector<2x128xf32> to vector<2x32xf32>
    %599 = arith.mulf %596, %541 : vector<2x32xf32>
    %600 = arith.mulf %595, %597 : vector<2x32xf32>
    %601 = arith.addf %599, %600 : vector<2x32xf32>
    %602 = math.tanh %601 : vector<2x32xf32>
    %603 = arith.mulf %598, %602 : vector<2x32xf32>
    %c0_235 = arith.constant 0 : index
    %c224_236 = arith.constant 224 : index
    %604 = vector.load %arg10[%c0_235, %c224_236] : memref<2x256xf32, #tpu.memory_space<vmem>>, vector<2x32xf32>
    tpu.vector_store %arg10[%c0_235, %c224_236], %603 {strides = array<i32>} : memref<2x256xf32, #tpu.memory_space<vmem>>, vector<2x32xf32>,
    %c0_237 = arith.constant 0 : index
    %c160_238 = arith.constant 160 : index
    %605 = vector.load %arg11[%c0_237, %c160_238] : memref<2x256xf32, #tpu.memory_space<vmem>>, vector<2x32xf32>
    tpu.vector_store %arg11[%c0_237, %c160_238], %603 {strides = array<i32>} : memref<2x256xf32, #tpu.memory_space<vmem>>, vector<2x32xf32>,
    %c0_239 = arith.constant 0 : index
    %c0_240 = arith.constant 0 : index
    %606 = vector.load %arg10[%c0_239, %c0_240] : memref<2x256xf32, #tpu.memory_space<vmem>>, vector<2x256xf32>
    %c0_241 = arith.constant 0 : index
    %c0_242 = arith.constant 0 : index
    %607 = vector.load %arg1[%c0_241, %c0_242] : memref<256x512xf32, #tpu.memory_space<vmem>>, vector<256x512xf32>
    %cst_243 = arith.constant dense<0.000000e+00> : vector<2x512xf32>
    %608 = tpu.matmul %606, %607, %cst_243 {dimension_numbers = #tpu.dot_dimension_numbers<[1], [0], [0], [1], [0, 0, 1, 1], [], []>} : vector<2x256xf32>, vector<256x512xf32>, vector<2x512xf32> -> vector<2x512xf32>
    %c0_244 = arith.constant 0 : index
    %c0_245 = arith.constant 0 : index
    %609 = vector.load %arg2[%c0_244, %c0_245] : memref<1x512xf32, #tpu.memory_space<vmem>>, vector<1x512xf32>
    %610 = vector.broadcast %609 : vector<1x512xf32> to vector<2x512xf32>
    %611 = arith.addf %608, %610 : vector<2x512xf32>
    %612 = vector.extract_strided_slice %611 {offsets = [0, 256], sizes = [2, 128], strides = [1, 1]} : vector<2x512xf32> to vector<2x128xf32>
    %613 = arith.negf %612 : vector<2x128xf32>
    %614 = math.exp %613 : vector<2x128xf32>
    %cst_246 = arith.constant 1.000000e+00 : f32
    %615 = vector.broadcast %cst_246 : f32 to vector<2x128xf32>
    %616 = arith.addf %615, %614 : vector<2x128xf32>
    %617 = arith.divf %615, %616 : vector<2x128xf32>
    %618 = math.tanh %612 : vector<2x128xf32>
    %619 = vector.extract_strided_slice %617 {offsets = [0, 0], sizes = [2, 32], strides = [1, 1]} : vector<2x128xf32> to vector<2x32xf32>
    %620 = vector.extract_strided_slice %617 {offsets = [0, 32], sizes = [2, 32], strides = [1, 1]} : vector<2x128xf32> to vector<2x32xf32>
    %621 = vector.extract_strided_slice %618 {offsets = [0, 64], sizes = [2, 32], strides = [1, 1]} : vector<2x128xf32> to vector<2x32xf32>
    %622 = vector.extract_strided_slice %617 {offsets = [0, 96], sizes = [2, 32], strides = [1, 1]} : vector<2x128xf32> to vector<2x32xf32>
    %623 = arith.mulf %620, %583 : vector<2x32xf32>
    %624 = arith.mulf %619, %621 : vector<2x32xf32>
    %625 = arith.addf %623, %624 : vector<2x32xf32>
    %626 = math.tanh %625 : vector<2x32xf32>
    %627 = arith.mulf %622, %626 : vector<2x32xf32>
    %c0_247 = arith.constant 0 : index
    %c160_248 = arith.constant 160 : index
    %628 = vector.load %arg10[%c0_247, %c160_248] : memref<2x256xf32, #tpu.memory_space<vmem>>, vector<2x32xf32>
    tpu.vector_store %arg10[%c0_247, %c160_248], %627 {strides = array<i32>} : memref<2x256xf32, #tpu.memory_space<vmem>>, vector<2x32xf32>,
    %c0_249 = arith.constant 0 : index
    %c192_250 = arith.constant 192 : index
    %629 = vector.load %arg10[%c0_249, %c192_250] : memref<2x256xf32, #tpu.memory_space<vmem>>, vector<2x32xf32>
    tpu.vector_store %arg10[%c0_249, %c192_250], %627 {strides = array<i32>} : memref<2x256xf32, #tpu.memory_space<vmem>>, vector<2x32xf32>,
    %630 = vector.extract_strided_slice %611 {offsets = [0, 384], sizes = [2, 128], strides = [1, 1]} : vector<2x512xf32> to vector<2x128xf32>
    %631 = arith.negf %630 : vector<2x128xf32>
    %632 = math.exp %631 : vector<2x128xf32>
    %cst_251 = arith.constant 1.000000e+00 : f32
    %633 = vector.broadcast %cst_251 : f32 to vector<2x128xf32>
    %634 = arith.addf %633, %632 : vector<2x128xf32>
    %635 = arith.divf %633, %634 : vector<2x128xf32>
    %636 = math.tanh %630 : vector<2x128xf32>
    %637 = vector.extract_strided_slice %635 {offsets = [0, 0], sizes = [2, 32], strides = [1, 1]} : vector<2x128xf32> to vector<2x32xf32>
    %638 = vector.extract_strided_slice %635 {offsets = [0, 32], sizes = [2, 32], strides = [1, 1]} : vector<2x128xf32> to vector<2x32xf32>
    %639 = vector.extract_strided_slice %636 {offsets = [0, 64], sizes = [2, 32], strides = [1, 1]} : vector<2x128xf32> to vector<2x32xf32>
    %640 = vector.extract_strided_slice %635 {offsets = [0, 96], sizes = [2, 32], strides = [1, 1]} : vector<2x128xf32> to vector<2x32xf32>
    %641 = arith.mulf %638, %601 : vector<2x32xf32>
    %642 = arith.mulf %637, %639 : vector<2x32xf32>
    %643 = arith.addf %641, %642 : vector<2x32xf32>
    %644 = math.tanh %643 : vector<2x32xf32>
    %645 = arith.mulf %640, %644 : vector<2x32xf32>
    %c0_252 = arith.constant 0 : index
    %c224_253 = arith.constant 224 : index
    %646 = vector.load %arg10[%c0_252, %c224_253] : memref<2x256xf32, #tpu.memory_space<vmem>>, vector<2x32xf32>
    tpu.vector_store %arg10[%c0_252, %c224_253], %645 {strides = array<i32>} : memref<2x256xf32, #tpu.memory_space<vmem>>, vector<2x32xf32>,
    %c0_254 = arith.constant 0 : index
    %c192_255 = arith.constant 192 : index
    %647 = vector.load %arg11[%c0_254, %c192_255] : memref<2x256xf32, #tpu.memory_space<vmem>>, vector<2x32xf32>
    tpu.vector_store %arg11[%c0_254, %c192_255], %645 {strides = array<i32>} : memref<2x256xf32, #tpu.memory_space<vmem>>, vector<2x32xf32>,
    %c0_256 = arith.constant 0 : index
    %c0_257 = arith.constant 0 : index
    %648 = vector.load %arg10[%c0_256, %c0_257] : memref<2x256xf32, #tpu.memory_space<vmem>>, vector<2x256xf32>
    %c0_258 = arith.constant 0 : index
    %c0_259 = arith.constant 0 : index
    %649 = vector.load %arg1[%c0_258, %c0_259] : memref<256x512xf32, #tpu.memory_space<vmem>>, vector<256x512xf32>
    %cst_260 = arith.constant dense<0.000000e+00> : vector<2x512xf32>
    %650 = tpu.matmul %648, %649, %cst_260 {dimension_numbers = #tpu.dot_dimension_numbers<[1], [0], [0], [1], [0, 0, 1, 1], [], []>} : vector<2x256xf32>, vector<256x512xf32>, vector<2x512xf32> -> vector<2x512xf32>
    %c0_261 = arith.constant 0 : index
    %c0_262 = arith.constant 0 : index
    %651 = vector.load %arg2[%c0_261, %c0_262] : memref<1x512xf32, #tpu.memory_space<vmem>>, vector<1x512xf32>
    %652 = vector.broadcast %651 : vector<1x512xf32> to vector<2x512xf32>
    %653 = arith.addf %650, %652 : vector<2x512xf32>
    %654 = vector.extract_strided_slice %653 {offsets = [0, 384], sizes = [2, 128], strides = [1, 1]} : vector<2x512xf32> to vector<2x128xf32>
    %655 = arith.negf %654 : vector<2x128xf32>
    %656 = math.exp %655 : vector<2x128xf32>
    %cst_263 = arith.constant 1.000000e+00 : f32
    %657 = vector.broadcast %cst_263 : f32 to vector<2x128xf32>
    %658 = arith.addf %657, %656 : vector<2x128xf32>
    %659 = arith.divf %657, %658 : vector<2x128xf32>
    %660 = math.tanh %654 : vector<2x128xf32>
    %661 = vector.extract_strided_slice %659 {offsets = [0, 0], sizes = [2, 32], strides = [1, 1]} : vector<2x128xf32> to vector<2x32xf32>
    %662 = vector.extract_strided_slice %659 {offsets = [0, 32], sizes = [2, 32], strides = [1, 1]} : vector<2x128xf32> to vector<2x32xf32>
    %663 = vector.extract_strided_slice %660 {offsets = [0, 64], sizes = [2, 32], strides = [1, 1]} : vector<2x128xf32> to vector<2x32xf32>
    %664 = vector.extract_strided_slice %659 {offsets = [0, 96], sizes = [2, 32], strides = [1, 1]} : vector<2x128xf32> to vector<2x32xf32>
    %665 = arith.mulf %662, %643 : vector<2x32xf32>
    %666 = arith.mulf %661, %663 : vector<2x32xf32>
    %667 = arith.addf %665, %666 : vector<2x32xf32>
    %668 = math.tanh %667 : vector<2x32xf32>
    %669 = arith.mulf %664, %668 : vector<2x32xf32>
    %c0_264 = arith.constant 0 : index
    %c224_265 = arith.constant 224 : index
    %670 = vector.load %arg10[%c0_264, %c224_265] : memref<2x256xf32, #tpu.memory_space<vmem>>, vector<2x32xf32>
    tpu.vector_store %arg10[%c0_264, %c224_265], %669 {strides = array<i32>} : memref<2x256xf32, #tpu.memory_space<vmem>>, vector<2x32xf32>,
    %c0_266 = arith.constant 0 : index
    %c224_267 = arith.constant 224 : index
    %671 = vector.load %arg11[%c0_266, %c224_267] : memref<2x256xf32, #tpu.memory_space<vmem>>, vector<2x32xf32>
    tpu.vector_store %arg11[%c0_266, %c224_267], %669 {strides = array<i32>} : memref<2x256xf32, #tpu.memory_space<vmem>>, vector<2x32xf32>,
    %c0_268 = arith.constant 0 : index
    %c0_269 = arith.constant 0 : index
    %672 = vector.load %arg11[%c0_268, %c0_269] : memref<2x256xf32, #tpu.memory_space<vmem>>, vector<2x256xf32>
    %c0_270 = arith.constant 0 : index
    %c0_271 = arith.constant 0 : index
    %673 = vector.load %arg3[%c0_270, %c0_271] : memref<256x128xf32, #tpu.memory_space<vmem>>, vector<256x128xf32>
    %cst_272 = arith.constant dense<0.000000e+00> : vector<2x128xf32>
    %674 = tpu.matmul %672, %673, %cst_272 {dimension_numbers = #tpu.dot_dimension_numbers<[1], [0], [0], [1], [0, 0, 1, 1], [], []>} : vector<2x256xf32>, vector<256x128xf32>, vector<2x128xf32> -> vector<2x128xf32>
    %c0_273 = arith.constant 0 : index
    %c0_274 = arith.constant 0 : index
    %675 = vector.load %arg4[%c0_273, %c0_274] : memref<1x128xf32, #tpu.memory_space<vmem>>, vector<1x128xf32>
    %676 = vector.broadcast %675 : vector<1x128xf32> to vector<2x128xf32>
    %677 = arith.addf %674, %676 : vector<2x128xf32>
    %c0_275 = arith.constant 0 : index
    %c0_276 = arith.constant 0 : index
    %678 = vector.load %arg5[%c0_275, %c0_276] : memref<128x64xf32, #tpu.memory_space<vmem>>, vector<128x64xf32>
    %cst_277 = arith.constant dense<0.000000e+00> : vector<2x64xf32>
    %679 = tpu.matmul %677, %678, %cst_277 {dimension_numbers = #tpu.dot_dimension_numbers<[1], [0], [0], [1], [0, 0, 1, 1], [], []>} : vector<2x128xf32>, vector<128x64xf32>, vector<2x64xf32> -> vector<2x64xf32>
    %c0_278 = arith.constant 0 : index
    %c0_279 = arith.constant 0 : index
    %680 = vector.load %arg6[%c0_278, %c0_279] : memref<1x64xf32, #tpu.memory_space<vmem>>, vector<1x64xf32>
    %681 = vector.broadcast %680 : vector<1x64xf32> to vector<2x64xf32>
    %682 = arith.addf %679, %681 : vector<2x64xf32>
    %c0_280 = arith.constant 0 : index
    %c0_281 = arith.constant 0 : index
    %683 = vector.load %arg7[%c0_280, %c0_281] : memref<64x4xf32, #tpu.memory_space<vmem>>, vector<64x4xf32>
    %cst_282 = arith.constant dense<0.000000e+00> : vector<2x4xf32>
    %684 = tpu.matmul %682, %683, %cst_282 {dimension_numbers = #tpu.dot_dimension_numbers<[1], [0], [0], [1], [0, 0, 1, 1], [], []>} : vector<2x64xf32>, vector<64x4xf32>, vector<2x4xf32> -> vector<2x4xf32>
    %c0_283 = arith.constant 0 : index
    %c0_284 = arith.constant 0 : index
    %685 = vector.load %arg8[%c0_283, %c0_284] : memref<1x4xf32, #tpu.memory_space<vmem>>, vector<1x4xf32>
    %686 = vector.broadcast %685 : vector<1x4xf32> to vector<2x4xf32>
    %687 = arith.addf %684, %686 : vector<2x4xf32>
    %c0_285 = arith.constant 0 : index
    %c0_286 = arith.constant 0 : index
    %688 = vector.load %arg9[%c0_285, %c0_286] : memref<2x4xf32, #tpu.memory_space<vmem>>, vector<2x4xf32>
    tpu.vector_store %arg9[%c0_285, %c0_286], %687 {strides = array<i32>} : memref<2x4xf32, #tpu.memory_space<vmem>>, vector<2x4xf32>,
    return
  }
}

</mosaic_0001>

<llo_original>
// kernel: forward_pallas.1
$region0: #{forward_pallas.1}
  #allocation0 [shape = 'u32[]', space=smem, size = 0x4, offset = 0x4, fixed_abs, tag = 'smem constant byte address 0x4 - core index']
  #allocation1 [shape = 'u32[72,128]{1,0:T(1,128)}', space=vmem, size = 0x9000, scoped, tag = 'internal scratch']
  #allocation2 [shape = 'f32[2,256]{1,0:T(2,128)}', space=vmem, size = 0x800, scoped, tag = 'scratch operand']
  #allocation3 [shape = 'f32[2,256]{1,0:T(2,128)}', space=vmem, size = 0x800, scoped, tag = 'scratch operand']
  %s0 = inlined_call_operand.vmem [shape: f32[2,8,32], index: 0, kind: input, shape index: {}]
  %s1 = inlined_call_operand.hbm [shape: f32[256,512], index: 1, kind: input, shape index: {}]
  %s2 = inlined_call_operand.vmem [shape: f32[1,512], index: 2, kind: input, shape index: {}]
  %s3 = inlined_call_operand.hbm [shape: f32[256,128], index: 3, kind: input, shape index: {}]
  %s4 = inlined_call_operand.vmem [shape: f32[1,128], index: 4, kind: input, shape index: {}]
  %s5 = inlined_call_operand.vmem [shape: f32[128,64], index: 5, kind: input, shape index: {}]
  %s6 = inlined_call_operand.vmem [shape: f32[1,64], index: 6, kind: input, shape index: {}]
  %s7 = inlined_call_operand.vmem [shape: f32[64,4], index: 7, kind: input, shape index: {}]
  %s8 = inlined_call_operand.vmem [shape: f32[1,4], index: 8, kind: input, shape index: {}]
  %s9 = inlined_call_operand.hbm [shape: f32[2,4], index: 9, kind: output, shape index: {}]
  %s10 = sld [smem:[#allocation0]]
  $region54: #{forward_pallas.1} parent=0
    _
  %s12 = ssub.s32 1, %s10
  %s13 = scalar_select 0, %s12, %s10
  $region1: #{forward_pallas.1} parent=0
    #allocation4 [shape = 'u8[524288]{0}', space=vmem, size = 0x80000, scoped, tag = 'input window, operand 1, single buffered']
    #allocation5 [shape = 's32[1]{0}', space=sflag, size = 0x4, scoped, tag = 'scoped memory for forward_pallas.1']
    #allocation6 [shape = 's32[1]{0}', space=sflag, size = 0x4, scoped, tag = 'scoped memory for forward_pallas.1']
    #allocation7 [shape = 'u8[131072]{0}', space=vmem, size = 0x20000, scoped, tag = 'input window, operand 3, single buffered']
    #allocation8 [shape = 's32[1]{0}', space=sflag, size = 0x4, scoped, tag = 'scoped memory for forward_pallas.1']
    #allocation9 [shape = 'u8[1024]{0}', space=vmem, size = 0x400, scoped, tag = 'output window, operand 0, single buffered']
    %14 = vsyncpa [#allocation5], 0
    %15 = vsyncpa [#allocation8], 0
    %16 = vsyncpa [#allocation6], 0
    // Predicated region
    $region2: #{forward_pallas.1} parent=1 // pred_check
      _
    $region3: #{forward_pallas.1} parent=1 // pred_check_branch
      %18 = sbr.rel (0) target = $region5
    $region4: #{forward_pallas.1} parent=1 // pred_region
      _
    $region5: #{forward_pallas.1} parent=1 // pred_fallthru
      _
    // Predicated region
    $region6: #{forward_pallas.1} parent=1 // pred_check
      _
    $region7: #{forward_pallas.1} parent=1 // pred_check_branch
      %20 = sbr.rel (0) target = $region9
    $region8: #{forward_pallas.1} parent=1 // pred_region
      %22 = vsyncadd [#allocation5], 0
      %s23 = sshll.u32 %s1, 4
      %s24 = int_to_ptr.hbm [resolvable:$true] %s23
      %s25 = sshll.u32 [#allocation4], 4
      %s26 = int_to_ptr.vmem [resolvable:$true] %s25
      %31 = dma.hbm_to_vmem [thread:$0]  %s24, 16384, %s26, [#allocation5], 512, 512, 32
    $region9: #{forward_pallas.1} parent=1 // pred_fallthru
      _
    // Predicated region
    $region10: #{forward_pallas.1} parent=1 // pred_check
      _
    $region11: #{forward_pallas.1} parent=1 // pred_check_branch
      %33 = sbr.rel (0) target = $region13
    $region12: #{forward_pallas.1} parent=1 // pred_region
      _
    $region13: #{forward_pallas.1} parent=1 // pred_fallthru
      _
    // Predicated region
    $region14: #{forward_pallas.1} parent=1 // pred_check
      _
    $region15: #{forward_pallas.1} parent=1 // pred_check_branch
      %35 = sbr.rel (0) target = $region17
    $region16: #{forward_pallas.1} parent=1 // pred_region
      %37 = vsyncadd [#allocation8], 0
      %s38 = sshll.u32 %s3, 4
      %s39 = int_to_ptr.hbm [resolvable:$true] %s38
      %s40 = sshll.u32 [#allocation7], 4
      %s41 = int_to_ptr.vmem [resolvable:$true] %s40
      %46 = dma.hbm_to_vmem [thread:$0]  %s39, 4096, %s41, [#allocation8], 128, 128, 8
    $region17: #{forward_pallas.1} parent=1 // pred_fallthru
      _
    // Predicated region
    $region18: #{forward_pallas.1} parent=1 // pred_check
      _
    $region19: #{forward_pallas.1} parent=1 // pred_check_branch
      %48 = sbr.rel (0) target = $region21
    $region20: #{forward_pallas.1} parent=1 // pred_region
      _
    $region21: #{forward_pallas.1} parent=1 // pred_fallthru
      _
    // Predicated region
    $region22: #{forward_pallas.1} parent=1 // pred_check
      _
    $region23: #{forward_pallas.1} parent=1 // pred_check_branch
      %50 = sbr.rel (0) target = $region25
    $region24: #{forward_pallas.1} parent=1 // pred_region
      _
    $region25: #{forward_pallas.1} parent=1 // pred_fallthru
      _
    // Predicated region
    $region26: #{forward_pallas.1} parent=1 // pred_check
      _
    $region27: #{forward_pallas.1} parent=1 // pred_check_branch
      %52 = sbr.rel (0) target = $region29
    $region28: #{forward_pallas.1} parent=1 // pred_region
      _
    $region29: #{forward_pallas.1} parent=1 // pred_fallthru
      _
    // Predicated region
    $region30: #{forward_pallas.1} parent=1 // pred_check
      _
    $region31: #{forward_pallas.1} parent=1 // pred_check_branch
      %54 = sbr.rel (0) target = $region33
    $region32: #{forward_pallas.1} parent=1 // pred_region
      _
    $region33: #{forward_pallas.1} parent=1 // pred_fallthru
      _
    // Predicated region
    $region34: #{forward_pallas.1} parent=1 // pred_check
      _
    $region35: #{forward_pallas.1} parent=1 // pred_check_branch
      %56 = sbr.rel (0) target = $region37
    $region36: #{forward_pallas.1} parent=1 // pred_region
      _
    $region37: #{forward_pallas.1} parent=1 // pred_fallthru
      _
    // Predicated region
    $region38: #{forward_pallas.1} parent=1 // pred_check
      _
    $region39: #{forward_pallas.1} parent=1 // pred_check_branch
      %58 = sbr.rel (0) target = $region41
    $region40: #{forward_pallas.1} parent=1 // pred_region
      %60 = dma.done [#allocation5], 16384
    $region41: #{forward_pallas.1} parent=1 // pred_fallthru
      _
    // Predicated region
    $region42: #{forward_pallas.1} parent=1 // pred_check
      _
    $region43: #{forward_pallas.1} parent=1 // pred_check_branch
      %62 = sbr.rel (0) target = $region45
    $region44: #{forward_pallas.1} parent=1 // pred_region
      %64 = dma.done [#allocation8], 4096
    $region45: #{forward_pallas.1} parent=1 // pred_fallthru
      _
    %65 = vst [vmem:[#allocation2] sm:$0xf] 0.0
    %v66 = vld [vmem:[%s0] sm:$0x1]
    %v67 = vld [vmem:[%s0 + $0x8] sm:$0x1]
    %vm70 = vcmask 1044484
    %v71 = vsel %vm70, %v66, %v66
    %vm72 = vcmask 1046534
    %v73 = vsel %vm72, %v66, %v71
    %v74 = vrot.slane %v67, 7
    %vm75 = vcmask 1041409
    %v76 = vsel %vm75, %v74, %v73
    %vm77 = vcmask 1043459
    %v78 = vsel %vm77, %v74, %v76
    %vm79 = vcmask 1045509
    %v80 = vsel %vm79, %v74, %v78
    %vm81 = vcmask 1047559
    %v82 = vsel %vm81, %v74, %v80
    %vm84 = vcmask 254976
    %85 = vst.msk [vmem:[#allocation2] sm:$0x3] %vm84, %v82
    %v86 = vld [vmem:[#allocation2] sm:$0xf]
    %v87 = vld [vmem:[#allocation4] sm:$0xff]
    %v88 = vld [vmem:[#allocation4 + $0x20] sm:$0xff]
    %v89 = vld [vmem:[#allocation4 + $0x40] sm:$0xff]
    %v90 = vld [vmem:[#allocation4 + $0x60] sm:$0xff]
    %v91 = vld [vmem:[#allocation4 + $0x80] sm:$0xff]
    %v92 = vld [vmem:[#allocation4 + $0xa0] sm:$0xff]
    %v93 = vld [vmem:[#allocation4 + $0xc0] sm:$0xff]
    %v94 = vld [vmem:[#allocation4 + $0xe0] sm:$0xff]
    %v95 = vld [vmem:[#allocation4 + $0x100] sm:$0xff]
    %v96 = vld [vmem:[#allocation4 + $0x120] sm:$0xff]
    %v97 = vld [vmem:[#allocation4 + $0x140] sm:$0xff]
    %v98 = vld [vmem:[#allocation4 + $0x160] sm:$0xff]
    %v99 = vld [vmem:[#allocation4 + $0x180] sm:$0xff]
    %v100 = vld [vmem:[#allocation4 + $0x1a0] sm:$0xff]
    %v101 = vld [vmem:[#allocation4 + $0x1c0] sm:$0xff]
    %v102 = vld [vmem:[#allocation4 + $0x1e0] sm:$0xff]
    %v103 = vld [vmem:[#allocation4 + $0x200] sm:$0xff]
    %v104 = vld [vmem:[#allocation4 + $0x220] sm:$0xff]
    %v105 = vld [vmem:[#allocation4 + $0x240] sm:$0xff]
    %v106 = vld [vmem:[#allocation4 + $0x260] sm:$0xff]
    %v107 = vld [vmem:[#allocation4 + $0x280] sm:$0xff]
    %v108 = vld [vmem:[#allocation4 + $0x2a0] sm:$0xff]
    %v109 = vld [vmem:[#allocation4 + $0x2c0] sm:$0xff]
    %v110 = vld [vmem:[#allocation4 + $0x2e0] sm:$0xff]
    %v111 = vld [vmem:[#allocation4 + $0x300] sm:$0xff]
    %v112 = vld [vmem:[#allocation4 + $0x320] sm:$0xff]
    %v113 = vld [vmem:[#allocation4 + $0x340] sm:$0xff]
    %v114 = vld [vmem:[#allocation4 + $0x360] sm:$0xff]
    %v115 = vld [vmem:[#allocation4 + $0x380] sm:$0xff]
    %v116 = vld [vmem:[#allocation4 + $0x3a0] sm:$0xff]
    %v117 = vld [vmem:[#allocation4 + $0x3c0] sm:$0xff]
    %v118 = vld [vmem:[#allocation4 + $0x3e0] sm:$0xff]
    %v119 = vld [vmem:[%s2] sm:$0xf]
    %v121 = vperm.slane %v119, 0
    %124 = vst [vmem:[#allocation1] ss:$4 sm:$0xff] %v86
    %v125 = vld.sshfl [vmem:[#allocation1] sm:$0xff pattern:$0x73625140]
    %v126 = vld.sshfl [vmem:[#allocation1 + $0x8] sm:$0xff pattern:$0x73625140]
    %129 = vmatpush.msra.mxu0 %v102
    %130 = vmatpush.msra.mxu0 %v101
    %131 = vmatpush.msra.mxu0 %v100
    %132 = vmatpush.msra.mxu0 %v99
    %133 = vmatpush.msra.mxu0 %v98
    %134 = vmatpush.msra.mxu0 %v97
    %135 = vmatpush.msra.mxu0 %v96
    %136 = vmatpush.msra.mxu0 %v95
    %137 = vmatpush.msra.mxu0 %v94
    %138 = vmatpush.msra.mxu0 %v93
    %139 = vmatpush.msra.mxu0 %v92
    %140 = vmatpush.msra.mxu0 %v91
    %141 = vmatpush.msra.mxu0 %v90
    %142 = vmatpush.msra.mxu0 %v89
    %143 = vmatpush.msra.mxu0 %v88
    %144 = vmatpush.msra.mxu0 %v87
    %145 = vmatmul.f32.gmra.mxu0 %v125
    %v146 = vpop.f32.mrf.mxu0
    %v147 = vadd.f32 %v121, %v146
    %148 = vdwg.mxu0
    %149 = vmatpush.msra.mxu0 %v118
    %150 = vmatpush.msra.mxu0 %v117
    %151 = vmatpush.msra.mxu0 %v116
    %152 = vmatpush.msra.mxu0 %v115
    %153 = vmatpush.msra.mxu0 %v114
    %154 = vmatpush.msra.mxu0 %v113
    %155 = vmatpush.msra.mxu0 %v112
    %156 = vmatpush.msra.mxu0 %v111
    %157 = vmatpush.msra.mxu0 %v110
    %158 = vmatpush.msra.mxu0 %v109
    %159 = vmatpush.msra.mxu0 %v108
    %160 = vmatpush.msra.mxu0 %v107
    %161 = vmatpush.msra.mxu0 %v106
    %162 = vmatpush.msra.mxu0 %v105
    %163 = vmatpush.msra.mxu0 %v104
    %164 = vmatpush.msra.mxu0 %v103
    %165 = vmatmul.f32.gmra.mxu0 %v126
    %v166 = vpop.f32.mrf.mxu0
    %v167 = vadd.f32 %v147, %v166
    %168 = vdwg.mxu0
    %v169 = vxor.u32 %v167, 2147483648
    %v170 = vmul.f32 %v169, 1.442695
    %v171 = vpow.pop %v170
    %v172 = vadd.f32 %v171, 1.0
    %v173 = vrcp.pop %v172
    %v174 = vmul.f32 %v172, %v173
    %v175 = vsub.f32 1.0, %v174
    %v176 = vmul.f32 %v173, %v175
    %v177 = vadd.f32 %v173, %v176
    %vm178 = vweird.f32 %v172
    %vm179 = vweird.f32 %v173
    %vm180 = vmor %vm178, %vm179
    %v181 = vsel %vm180, %v173, %v177
    %v182 = vand.u32 2147483647, %v172
    %vm183 = vcmp.eq.f32.partialorder %v182, 8.507059e+37
    %v184 = vand.u32 %v172, 2147483648
    %v185 = vor.u32 1.1754944e-38, %v184
    %v186 = vsel %vm183, %v185, %v181
    %v187 = vmul.f32 1.0, %v186
    %v188 = vtanh.pop %v167
    %v189 = vmul.f32 %v187, 0.0
    %191 = vrot.lane.b32.xlu0 %v188, 64
    %v192 = vpop.permute.xlu0 %191
    %v194 = vmul.f32 %v187, %v192
    %196 = vrot.lane.b32.xlu0 %v194, 32
    %v197 = vpop.permute.xlu0 %196
    %v199 = vadd.f32 %v189, %v197
    %v200 = vtanh.pop %v199
    %202 = vrot.lane.b32.xlu0 %v200, 64
    %v203 = vpop.permute.xlu0 %202
    %v205 = vmul.f32 %v187, %v203
    %207 = vrot.lane.b32.xlu0 %v205, 64
    %v208 = vpop.permute.xlu0 %207
    %vm210 = vcmask 517376
    %211 = vst.msk [vmem:[#allocation2] sm:$0x3] %vm210, %v208
    %212 = vrot.lane.b32.xlu0 %v205, 96
    %v213 = vpop.permute.xlu0 %212
    %vm215 = vcmask 779776
    %216 = vst.msk [vmem:[#allocation2] sm:$0x3] %vm215, %v213
    %v217 = vld [vmem:[%s0 + $0x1] sm:$0x1]
    %v218 = vld [vmem:[%s0 + $0x9] sm:$0x1]
    %v221 = vsel %vm70, %v217, %v217
    %v222 = vsel %vm72, %v217, %v221
    %v223 = vrot.slane %v218, 7
    %v224 = vsel %vm75, %v223, %v222
    %v225 = vsel %vm77, %v223, %v224
    %v226 = vsel %vm79, %v223, %v225
    %v227 = vsel %vm81, %v223, %v226
    %229 = vst.msk [vmem:[#allocation2] sm:$0x3] %vm84, %v227
    %v230 = vld [vmem:[#allocation2] sm:$0xf]
    %v231 = vld [vmem:[#allocation4] sm:$0xff]
    %v232 = vld [vmem:[#allocation4 + $0x8] sm:$0xff]
    %v233 = vld [vmem:[#allocation4 + $0x20] sm:$0xff]
    %v234 = vld [vmem:[#allocation4 + $0x28] sm:$0xff]
    %v235 = vld [vmem:[#allocation4 + $0x40] sm:$0xff]
    %v236 = vld [vmem:[#allocation4 + $0x48] sm:$0xff]
    %v237 = vld [vmem:[#allocation4 + $0x60] sm:$0xff]
    %v238 = vld [vmem:[#allocation4 + $0x68] sm:$0xff]
    %v239 = vld [vmem:[#allocation4 + $0x80] sm:$0xff]
    %v240 = vld [vmem:[#allocation4 + $0x88] sm:$0xff]
    %v241 = vld [vmem:[#allocation4 + $0xa0] sm:$0xff]
    %v242 = vld [vmem:[#allocation4 + $0xa8] sm:$0xff]
    %v243 = vld [vmem:[#allocation4 + $0xc0] sm:$0xff]
    %v244 = vld [vmem:[#allocation4 + $0xc8] sm:$0xff]
    %v245 = vld [vmem:[#allocation4 + $0xe0] sm:$0xff]
    %v246 = vld [vmem:[#allocation4 + $0xe8] sm:$0xff]
    %v247 = vld [vmem:[#allocation4 + $0x100] sm:$0xff]
    %v248 = vld [vmem:[#allocation4 + $0x108] sm:$0xff]
    %v249 = vld [vmem:[#allocation4 + $0x120] sm:$0xff]
    %v250 = vld [vmem:[#allocation4 + $0x128] sm:$0xff]
    %v251 = vld [vmem:[#allocation4 + $0x140] sm:$0xff]
    %v252 = vld [vmem:[#allocation4 + $0x148] sm:$0xff]
    %v253 = vld [vmem:[#allocation4 + $0x160] sm:$0xff]
    %v254 = vld [vmem:[#allocation4 + $0x168] sm:$0xff]
    %v255 = vld [vmem:[#allocation4 + $0x180] sm:$0xff]
    %v256 = vld [vmem:[#allocation4 + $0x188] sm:$0xff]
    %v257 = vld [vmem:[#allocation4 + $0x1a0] sm:$0xff]
    %v258 = vld [vmem:[#allocation4 + $0x1a8] sm:$0xff]
    %v259 = vld [vmem:[#allocation4 + $0x1c0] sm:$0xff]
    %v260 = vld [vmem:[#allocation4 + $0x1c8] sm:$0xff]
    %v261 = vld [vmem:[#allocation4 + $0x1e0] sm:$0xff]
    %v262 = vld [vmem:[#allocation4 + $0x1e8] sm:$0xff]
    %v263 = vld [vmem:[#allocation4 + $0x200] sm:$0xff]
    %v264 = vld [vmem:[#allocation4 + $0x208] sm:$0xff]
    %v265 = vld [vmem:[#allocation4 + $0x220] sm:$0xff]
    %v266 = vld [vmem:[#allocation4 + $0x228] sm:$0xff]
    %v267 = vld [vmem:[#allocation4 + $0x240] sm:$0xff]
    %v268 = vld [vmem:[#allocation4 + $0x248] sm:$0xff]
    %v269 = vld [vmem:[#allocation4 + $0x260] sm:$0xff]
    %v270 = vld [vmem:[#allocation4 + $0x268] sm:$0xff]
    %v271 = vld [vmem:[#allocation4 + $0x280] sm:$0xff]
    %v272 = vld [vmem:[#allocation4 + $0x288] sm:$0xff]
    %v273 = vld [vmem:[#allocation4 + $0x2a0] sm:$0xff]
    %v274 = vld [vmem:[#allocation4 + $0x2a8] sm:$0xff]
    %v275 = vld [vmem:[#allocation4 + $0x2c0] sm:$0xff]
    %v276 = vld [vmem:[#allocation4 + $0x2c8] sm:$0xff]
    %v277 = vld [vmem:[#allocation4 + $0x2e0] sm:$0xff]
    %v278 = vld [vmem:[#allocation4 + $0x2e8] sm:$0xff]
    %v279 = vld [vmem:[#allocation4 + $0x300] sm:$0xff]
    %v280 = vld [vmem:[#allocation4 + $0x308] sm:$0xff]
    %v281 = vld [vmem:[#allocation4 + $0x320] sm:$0xff]
    %v282 = vld [vmem:[#allocation4 + $0x328] sm:$0xff]
    %v283 = vld [vmem:[#allocation4 + $0x340] sm:$0xff]
    %v284 = vld [vmem:[#allocation4 + $0x348] sm:$0xff]
    %v285 = vld [vmem:[#allocation4 + $0x360] sm:$0xff]
    %v286 = vld [vmem:[#allocation4 + $0x368] sm:$0xff]
    %v287 = vld [vmem:[#allocation4 + $0x380] sm:$0xff]
    %v288 = vld [vmem:[#allocation4 + $0x388] sm:$0xff]
    %v289 = vld [vmem:[#allocation4 + $0x3a0] sm:$0xff]
    %v290 = vld [vmem:[#allocation4 + $0x3a8] sm:$0xff]
    %v291 = vld [vmem:[#allocation4 + $0x3c0] sm:$0xff]
    %v292 = vld [vmem:[#allocation4 + $0x3c8] sm:$0xff]
    %v293 = vld [vmem:[#allocation4 + $0x3e0] sm:$0xff]
    %v294 = vld [vmem:[#allocation4 + $0x3e8] sm:$0xff]
    %v295 = vld [vmem:[%s2] sm:$0xf]
    %v297 = vperm.slane %v295, 0
    %v298 = vperm.slane %v295, 1
    %302 = vst [vmem:[#allocation1] ss:$4 sm:$0xff] %v230
    %v303 = vld.sshfl [vmem:[#allocation1] sm:$0xff pattern:$0x73625140]
    %v304 = vld.sshfl [vmem:[#allocation1 + $0x8] sm:$0xff pattern:$0x73625140]
    %307 = vmatpush.msra.mxu0 %v261
    %308 = vmatpush.msra.mxu0 %v259
    %309 = vmatpush.msra.mxu0 %v257
    %310 = vmatpush.msra.mxu0 %v255
    %311 = vmatpush.msra.mxu0 %v253
    %312 = vmatpush.msra.mxu0 %v251
    %313 = vmatpush.msra.mxu0 %v249
    %314 = vmatpush.msra.mxu0 %v247
    %315 = vmatpush.msra.mxu0 %v245
    %316 = vmatpush.msra.mxu0 %v243
    %317 = vmatpush.msra.mxu0 %v241
    %318 = vmatpush.msra.mxu0 %v239
    %319 = vmatpush.msra.mxu0 %v237
    %320 = vmatpush.msra.mxu0 %v235
    %321 = vmatpush.msra.mxu0 %v233
    %322 = vmatpush.msra.mxu0 %v231
    %323 = vmatmul.f32.gmra.mxu0 %v303
    %v324 = vpop.f32.mrf.mxu0
    %v325 = vadd.f32 %v297, %v324
    %326 = vdwg.mxu0
    %327 = vmatpush.msra.mxu0 %v293
    %328 = vmatpush.msra.mxu0 %v291
    %329 = vmatpush.msra.mxu0 %v289
    %330 = vmatpush.msra.mxu0 %v287
    %331 = vmatpush.msra.mxu0 %v285
    %332 = vmatpush.msra.mxu0 %v283
    %333 = vmatpush.msra.mxu0 %v281
    %334 = vmatpush.msra.mxu0 %v279
    %335 = vmatpush.msra.mxu0 %v277
    %336 = vmatpush.msra.mxu0 %v275
    %337 = vmatpush.msra.mxu0 %v273
    %338 = vmatpush.msra.mxu0 %v271
    %339 = vmatpush.msra.mxu0 %v269
    %340 = vmatpush.msra.mxu0 %v267
    %341 = vmatpush.msra.mxu0 %v265
    %342 = vmatpush.msra.mxu0 %v263
    %343 = vmatmul.f32.gmra.mxu0 %v304
    %v344 = vpop.f32.mrf.mxu0
    %v345 = vadd.f32 %v325, %v344
    %346 = vdwg.mxu0
    %347 = vmatpush.msra.mxu0 %v262
    %348 = vmatpush.msra.mxu0 %v260
    %349 = vmatpush.msra.mxu0 %v258
    %350 = vmatpush.msra.mxu0 %v256
    %351 = vmatpush.msra.mxu0 %v254
    %352 = vmatpush.msra.mxu0 %v252
    %353 = vmatpush.msra.mxu0 %v250
    %354 = vmatpush.msra.mxu0 %v248
    %355 = vmatpush.msra.mxu0 %v246
    %356 = vmatpush.msra.mxu0 %v244
    %357 = vmatpush.msra.mxu0 %v242
    %358 = vmatpush.msra.mxu0 %v240
    %359 = vmatpush.msra.mxu0 %v238
    %360 = vmatpush.msra.mxu0 %v236
    %361 = vmatpush.msra.mxu0 %v234
    %362 = vmatpush.msra.mxu0 %v232
    %363 = vmatmul.f32.gmra.mxu0 %v303
    %v364 = vpop.f32.mrf.mxu0
    %v365 = vadd.f32 %v298, %v364
    %366 = vdwg.mxu0
    %367 = vmatpush.msra.mxu0 %v294
    %368 = vmatpush.msra.mxu0 %v292
    %369 = vmatpush.msra.mxu0 %v290
    %370 = vmatpush.msra.mxu0 %v288
    %371 = vmatpush.msra.mxu0 %v286
    %372 = vmatpush.msra.mxu0 %v284
    %373 = vmatpush.msra.mxu0 %v282
    %374 = vmatpush.msra.mxu0 %v280
    %375 = vmatpush.msra.mxu0 %v278
    %376 = vmatpush.msra.mxu0 %v276
    %377 = vmatpush.msra.mxu0 %v274
    %378 = vmatpush.msra.mxu0 %v272
    %379 = vmatpush.msra.mxu0 %v270
    %380 = vmatpush.msra.mxu0 %v268
    %381 = vmatpush.msra.mxu0 %v266
    %382 = vmatpush.msra.mxu0 %v264
    %383 = vmatmul.f32.gmra.mxu0 %v304
    %v384 = vpop.f32.mrf.mxu0
    %v385 = vadd.f32 %v365, %v384
    %386 = vdwg.mxu0
    %v387 = vxor.u32 %v345, 2147483648
    %v388 = vmul.f32 %v387, 1.442695
    %v389 = vpow.pop %v388
    %v390 = vadd.f32 %v389, 1.0
    %v391 = vrcp.pop %v390
    %v392 = vmul.f32 %v390, %v391
    %v393 = vsub.f32 1.0, %v392
    %v394 = vmul.f32 %v391, %v393
    %v395 = vadd.f32 %v391, %v394
    %vm396 = vweird.f32 %v390
    %vm397 = vweird.f32 %v391
    %vm398 = vmor %vm396, %vm397
    %v399 = vsel %vm398, %v391, %v395
    %v400 = vand.u32 2147483647, %v390
    %vm401 = vcmp.eq.f32.partialorder %v400, 8.507059e+37
    %v402 = vand.u32 %v390, 2147483648
    %v403 = vor.u32 1.1754944e-38, %v402
    %v404 = vsel %vm401, %v403, %v399
    %v405 = vmul.f32 1.0, %v404
    %v406 = vtanh.pop %v345
    %v407 = vmul.f32 %v405, %v199
    %409 = vrot.lane.b32.xlu0 %v406, 64
    %v410 = vpop.permute.xlu0 %409
    %v412 = vmul.f32 %v405, %v410
    %414 = vrot.lane.b32.xlu0 %v412, 32
    %v415 = vpop.permute.xlu0 %414
    %v417 = vadd.f32 %v407, %v415
    %v418 = vtanh.pop %v417
    %420 = vrot.lane.b32.xlu0 %v418, 64
    %v421 = vpop.permute.xlu0 %420
    %v423 = vmul.f32 %v405, %v421
    %425 = vrot.lane.b32.xlu0 %v423, 64
    %v426 = vpop.permute.xlu0 %425
    %428 = vst.msk [vmem:[#allocation2] sm:$0x3] %vm210, %v426
    %429 = vrot.lane.b32.xlu0 %v423, 96
    %v430 = vpop.permute.xlu0 %429
    %432 = vst.msk [vmem:[#allocation2] sm:$0x3] %vm215, %v430
    %v433 = vxor.u32 %v385, 2147483648
    %v434 = vmul.f32 %v433, 1.442695
    %v435 = vpow.pop %v434
    %v436 = vadd.f32 %v435, 1.0
    %v437 = vrcp.pop %v436
    %v438 = vmul.f32 %v436, %v437
    %v439 = vsub.f32 1.0, %v438
    %v440 = vmul.f32 %v437, %v439
    %v441 = vadd.f32 %v437, %v440
    %vm442 = vweird.f32 %v436
    %vm443 = vweird.f32 %v437
    %vm444 = vmor %vm442, %vm443
    %v445 = vsel %vm444, %v437, %v441
    %v446 = vand.u32 2147483647, %v436
    %vm447 = vcmp.eq.f32.partialorder %v446, 8.507059e+37
    %v448 = vand.u32 %v436, 2147483648
    %v449 = vor.u32 1.1754944e-38, %v448
    %v450 = vsel %vm447, %v449, %v445
    %v451 = vmul.f32 1.0, %v450
    %v452 = vtanh.pop %v385
    %v453 = vmul.f32 %v451, 0.0
    %455 = vrot.lane.b32.xlu0 %v452, 64
    %v456 = vpop.permute.xlu0 %455
    %v458 = vmul.f32 %v451, %v456
    %460 = vrot.lane.b32.xlu0 %v458, 32
    %v461 = vpop.permute.xlu0 %460
    %v463 = vadd.f32 %v453, %v461
    %v464 = vtanh.pop %v463
    %466 = vrot.lane.b32.xlu0 %v464, 64
    %v467 = vpop.permute.xlu0 %466
    %v469 = vmul.f32 %v451, %v467
    %vm470 = vcmask 1042176
    %471 = vst.msk [vmem:[#allocation2] sm:$0x3] %vm470, %v469
    %473 = vrot.lane.b32.xlu0 %v469, 32
    %v474 = vpop.permute.xlu0 %473
    %476 = vst.msk [vmem:[#allocation2 + $0x2] sm:$0x3] %vm84, %v474
    %v477 = vld [vmem:[%s0 + $0x2] sm:$0x1]
    %v478 = vld [vmem:[%s0 + $0xa] sm:$0x1]
    %v481 = vsel %vm70, %v477, %v477
    %v482 = vsel %vm72, %v477, %v481
    %v483 = vrot.slane %v478, 7
    %v484 = vsel %vm75, %v483, %v482
    %v485 = vsel %vm77, %v483, %v484
    %v486 = vsel %vm79, %v483, %v485
    %v487 = vsel %vm81, %v483, %v486
    %489 = vst.msk [vmem:[#allocation2] sm:$0x3] %vm84, %v487
    %v490 = vld [vmem:[#allocation2] sm:$0xf]
    %v491 = vld [vmem:[#allocation4] sm:$0xff]
    %v492 = vld [vmem:[#allocation4 + $0x8] sm:$0xff]
    %v493 = vld [vmem:[#allocation4 + $0x10] sm:$0xff]
    %v494 = vld [vmem:[#allocation4 + $0x20] sm:$0xff]
    %v495 = vld [vmem:[#allocation4 + $0x28] sm:$0xff]
    %v496 = vld [vmem:[#allocation4 + $0x30] sm:$0xff]
    %v497 = vld [vmem:[#allocation4 + $0x40] sm:$0xff]
    %v498 = vld [vmem:[#allocation4 + $0x48] sm:$0xff]
    %v499 = vld [vmem:[#allocation4 + $0x50] sm:$0xff]
    %v500 = vld [vmem:[#allocation4 + $0x60] sm:$0xff]
    %v501 = vld [vmem:[#allocation4 + $0x68] sm:$0xff]
    %v502 = vld [vmem:[#allocation4 + $0x70] sm:$0xff]
    %v503 = vld [vmem:[#allocation4 + $0x80] sm:$0xff]
    %v504 = vld [vmem:[#allocation4 + $0x88] sm:$0xff]
    %v505 = vld [vmem:[#allocation4 + $0x90] sm:$0xff]
    %v506 = vld [vmem:[#allocation4 + $0xa0] sm:$0xff]
    %v507 = vld [vmem:[#allocation4 + $0xa8] sm:$0xff]
    %v508 = vld [vmem:[#allocation4 + $0xb0] sm:$0xff]
    %v509 = vld [vmem:[#allocation4 + $0xc0] sm:$0xff]
    %v510 = vld [vmem:[#allocation4 + $0xc8] sm:$0xff]
    %v511 = vld [vmem:[#allocation4 + $0xd0] sm:$0xff]
    %v512 = vld [vmem:[#allocation4 + $0xe0] sm:$0xff]
    %v513 = vld [vmem:[#allocation4 + $0xe8] sm:$0xff]
    %v514 = vld [vmem:[#allocation4 + $0xf0] sm:$0xff]
    %v515 = vld [vmem:[#allocation4 + $0x100] sm:$0xff]
    %v516 = vld [vmem:[#allocation4 + $0x108] sm:$0xff]
    %v517 = vld [vmem:[#allocation4 + $0x110] sm:$0xff]
    %v518 = vld [vmem:[#allocation4 + $0x120] sm:$0xff]
    %v519 = vld [vmem:[#allocation4 + $0x128] sm:$0xff]
    %v520 = vld [vmem:[#allocation4 + $0x130] sm:$0xff]
    %v521 = vld [vmem:[#allocation4 + $0x140] sm:$0xff]
    %v522 = vld [vmem:[#allocation4 + $0x148] sm:$0xff]
    %v523 = vld [vmem:[#allocation4 + $0x150] sm:$0xff]
    %v524 = vld [vmem:[#allocation4 + $0x160] sm:$0xff]
    %v525 = vld [vmem:[#allocation4 + $0x168] sm:$0xff]
    %v526 = vld [vmem:[#allocation4 + $0x170] sm:$0xff]
    %v527 = vld [vmem:[#allocation4 + $0x180] sm:$0xff]
    %v528 = vld [vmem:[#allocation4 + $0x188] sm:$0xff]
    %v529 = vld [vmem:[#allocation4 + $0x190] sm:$0xff]
    %v530 = vld [vmem:[#allocation4 + $0x1a0] sm:$0xff]
    %v531 = vld [vmem:[#allocation4 + $0x1a8] sm:$0xff]
    %v532 = vld [vmem:[#allocation4 + $0x1b0] sm:$0xff]
    %v533 = vld [vmem:[#allocation4 + $0x1c0] sm:$0xff]
    %v534 = vld [vmem:[#allocation4 + $0x1c8] sm:$0xff]
    %v535 = vld [vmem:[#allocation4 + $0x1d0] sm:$0xff]
    %v536 = vld [vmem:[#allocation4 + $0x1e0] sm:$0xff]
    %v537 = vld [vmem:[#allocation4 + $0x1e8] sm:$0xff]
    %v538 = vld [vmem:[#allocation4 + $0x1f0] sm:$0xff]
    %v539 = vld [vmem:[#allocation4 + $0x200] sm:$0xff]
    %v540 = vld [vmem:[#allocation4 + $0x208] sm:$0xff]
    %v541 = vld [vmem:[#allocation4 + $0x210] sm:$0xff]
    %v542 = vld [vmem:[#allocation4 + $0x220] sm:$0xff]
    %v543 = vld [vmem:[#allocation4 + $0x228] sm:$0xff]
    %v544 = vld [vmem:[#allocation4 + $0x230] sm:$0xff]
    %v545 = vld [vmem:[#allocation4 + $0x240] sm:$0xff]
    %v546 = vld [vmem:[#allocation4 + $0x248] sm:$0xff]
    %v547 = vld [vmem:[#allocation4 + $0x250] sm:$0xff]
    %v548 = vld [vmem:[#allocation4 + $0x260] sm:$0xff]
    %v549 = vld [vmem:[#allocation4 + $0x268] sm:$0xff]
    %v550 = vld [vmem:[#allocation4 + $0x270] sm:$0xff]
    %v551 = vld [vmem:[#allocation4 + $0x280] sm:$0xff]
    %v552 = vld [vmem:[#allocation4 + $0x288] sm:$0xff]
    %v553 = vld [vmem:[#allocation4 + $0x290] sm:$0xff]
    %v554 = vld [vmem:[#allocation4 + $0x2a0] sm:$0xff]
    %v555 = vld [vmem:[#allocation4 + $0x2a8] sm:$0xff]
    %v556 = vld [vmem:[#allocation4 + $0x2b0] sm:$0xff]
    %v557 = vld [vmem:[#allocation4 + $0x2c0] sm:$0xff]
    %v558 = vld [vmem:[#allocation4 + $0x2c8] sm:$0xff]
    %v559 = vld [vmem:[#allocation4 + $0x2d0] sm:$0xff]
    %v560 = vld [vmem:[#allocation4 + $0x2e0] sm:$0xff]
    %v561 = vld [vmem:[#allocation4 + $0x2e8] sm:$0xff]
    %v562 = vld [vmem:[#allocation4 + $0x2f0] sm:$0xff]
    %v563 = vld [vmem:[#allocation4 + $0x300] sm:$0xff]
    %v564 = vld [vmem:[#allocation4 + $0x308] sm:$0xff]
    %v565 = vld [vmem:[#allocation4 + $0x310] sm:$0xff]
    %v566 = vld [vmem:[#allocation4 + $0x320] sm:$0xff]
    %v567 = vld [vmem:[#allocation4 + $0x328] sm:$0xff]
    %v568 = vld [vmem:[#allocation4 + $0x330] sm:$0xff]
    %v569 = vld [vmem:[#allocation4 + $0x340] sm:$0xff]
    %v570 = vld [vmem:[#allocation4 + $0x348] sm:$0xff]
    %v571 = vld [vmem:[#allocation4 + $0x350] sm:$0xff]
    %v572 = vld [vmem:[#allocation4 + $0x360] sm:$0xff]
    %v573 = vld [vmem:[#allocation4 + $0x368] sm:$0xff]
    %v574 = vld [vmem:[#allocation4 + $0x370] sm:$0xff]
    %v575 = vld [vmem:[#allocation4 + $0x380] sm:$0xff]
    %v576 = vld [vmem:[#allocation4 + $0x388] sm:$0xff]
    %v577 = vld [vmem:[#allocation4 + $0x390] sm:$0xff]
    %v578 = vld [vmem:[#allocation4 + $0x3a0] sm:$0xff]
    %v579 = vld [vmem:[#allocation4 + $0x3a8] sm:$0xff]
    %v580 = vld [vmem:[#allocation4 + $0x3b0] sm:$0xff]
    %v581 = vld [vmem:[#allocation4 + $0x3c0] sm:$0xff]
    %v582 = vld [vmem:[#allocation4 + $0x3c8] sm:$0xff]
    %v583 = vld [vmem:[#allocation4 + $0x3d0] sm:$0xff]
    %v584 = vld [vmem:[#allocation4 + $0x3e0] sm:$0xff]
    %v585 = vld [vmem:[#allocation4 + $0x3e8] sm:$0xff]
    %v586 = vld [vmem:[#allocation4 + $0x3f0] sm:$0xff]
    %v587 = vld [vmem:[%s2] sm:$0xf]
    %v589 = vperm.slane %v587, 0
    %v590 = vperm.slane %v587, 1
    %v591 = vperm.slane %v587, 2
    %596 = vst [vmem:[#allocation1] ss:$4 sm:$0xff] %v490
    %v597 = vld.sshfl [vmem:[#allocation1] sm:$0xff pattern:$0x73625140]
    %v598 = vld.sshfl [vmem:[#allocation1 + $0x8] sm:$0xff pattern:$0x73625140]
    %601 = vmatpush.msra.mxu0 %v536
    %602 = vmatpush.msra.mxu0 %v533
    %603 = vmatpush.msra.mxu0 %v530
    %604 = vmatpush.msra.mxu0 %v527
    %605 = vmatpush.msra.mxu0 %v524
    %606 = vmatpush.msra.mxu0 %v521
    %607 = vmatpush.msra.mxu0 %v518
    %608 = vmatpush.msra.mxu0 %v515
    %609 = vmatpush.msra.mxu0 %v512
    %610 = vmatpush.msra.mxu0 %v509
    %611 = vmatpush.msra.mxu0 %v506
    %612 = vmatpush.msra.mxu0 %v503
    %613 = vmatpush.msra.mxu0 %v500
    %614 = vmatpush.msra.mxu0 %v497
    %615 = vmatpush.msra.mxu0 %v494
    %616 = vmatpush.msra.mxu0 %v491
    %617 = vmatmul.f32.gmra.mxu0 %v597
    %v618 = vpop.f32.mrf.mxu0
    %v619 = vadd.f32 %v589, %v618
    %620 = vdwg.mxu0
    %621 = vmatpush.msra.mxu0 %v584
    %622 = vmatpush.msra.mxu0 %v581
    %623 = vmatpush.msra.mxu0 %v578
    %624 = vmatpush.msra.mxu0 %v575
    %625 = vmatpush.msra.mxu0 %v572
    %626 = vmatpush.msra.mxu0 %v569
    %627 = vmatpush.msra.mxu0 %v566
    %628 = vmatpush.msra.mxu0 %v563
    %629 = vmatpush.msra.mxu0 %v560
    %630 = vmatpush.msra.mxu0 %v557
    %631 = vmatpush.msra.mxu0 %v554
    %632 = vmatpush.msra.mxu0 %v551
    %633 = vmatpush.msra.mxu0 %v548
    %634 = vmatpush.msra.mxu0 %v545
    %635 = vmatpush.msra.mxu0 %v542
    %636 = vmatpush.msra.mxu0 %v539
    %637 = vmatmul.f32.gmra.mxu0 %v598
    %v638 = vpop.f32.mrf.mxu0
    %v639 = vadd.f32 %v619, %v638
    %640 = vdwg.mxu0
    %641 = vmatpush.msra.mxu0 %v537
    %642 = vmatpush.msra.mxu0 %v534
    %643 = vmatpush.msra.mxu0 %v531
    %644 = vmatpush.msra.mxu0 %v528
    %645 = vmatpush.msra.mxu0 %v525
    %646 = vmatpush.msra.mxu0 %v522
    %647 = vmatpush.msra.mxu0 %v519
    %648 = vmatpush.msra.mxu0 %v516
    %649 = vmatpush.msra.mxu0 %v513
    %650 = vmatpush.msra.mxu0 %v510
    %651 = vmatpush.msra.mxu0 %v507
    %652 = vmatpush.msra.mxu0 %v504
    %653 = vmatpush.msra.mxu0 %v501
    %654 = vmatpush.msra.mxu0 %v498
    %655 = vmatpush.msra.mxu0 %v495
    %656 = vmatpush.msra.mxu0 %v492
    %657 = vmatmul.f32.gmra.mxu0 %v597
    %v658 = vpop.f32.mrf.mxu0
    %v659 = vadd.f32 %v590, %v658
    %660 = vdwg.mxu0
    %661 = vmatpush.msra.mxu0 %v585
    %662 = vmatpush.msra.mxu0 %v582
    %663 = vmatpush.msra.mxu0 %v579
    %664 = vmatpush.msra.mxu0 %v576
    %665 = vmatpush.msra.mxu0 %v573
    %666 = vmatpush.msra.mxu0 %v570
    %667 = vmatpush.msra.mxu0 %v567
    %668 = vmatpush.msra.mxu0 %v564
    %669 = vmatpush.msra.mxu0 %v561
    %670 = vmatpush.msra.mxu0 %v558
    %671 = vmatpush.msra.mxu0 %v555
    %672 = vmatpush.msra.mxu0 %v552
    %673 = vmatpush.msra.mxu0 %v549
    %674 = vmatpush.msra.mxu0 %v546
    %675 = vmatpush.msra.mxu0 %v543
    %676 = vmatpush.msra.mxu0 %v540
    %677 = vmatmul.f32.gmra.mxu0 %v598
    %v678 = vpop.f32.mrf.mxu0
    %v679 = vadd.f32 %v659, %v678
    %680 = vdwg.mxu0
    %681 = vmatpush.msra.mxu0 %v538
    %682 = vmatpush.msra.mxu0 %v535
    %683 = vmatpush.msra.mxu0 %v532
    %684 = vmatpush.msra.mxu0 %v529
    %685 = vmatpush.msra.mxu0 %v526
    %686 = vmatpush.msra.mxu0 %v523
    %687 = vmatpush.msra.mxu0 %v520
    %688 = vmatpush.msra.mxu0 %v517
    %689 = vmatpush.msra.mxu0 %v514
    %690 = vmatpush.msra.mxu0 %v511
    %691 = vmatpush.msra.mxu0 %v508
    %692 = vmatpush.msra.mxu0 %v505
    %693 = vmatpush.msra.mxu0 %v502
    %694 = vmatpush.msra.mxu0 %v499
    %695 = vmatpush.msra.mxu0 %v496
    %696 = vmatpush.msra.mxu0 %v493
    %697 = vmatmul.f32.gmra.mxu0 %v597
    %v698 = vpop.f32.mrf.mxu0
    %v699 = vadd.f32 %v591, %v698
    %700 = vdwg.mxu0
    %701 = vmatpush.msra.mxu0 %v586
    %702 = vmatpush.msra.mxu0 %v583
    %703 = vmatpush.msra.mxu0 %v580
    %704 = vmatpush.msra.mxu0 %v577
    %705 = vmatpush.msra.mxu0 %v574
    %706 = vmatpush.msra.mxu0 %v571
    %707 = vmatpush.msra.mxu0 %v568
    %708 = vmatpush.msra.mxu0 %v565
    %709 = vmatpush.msra.mxu0 %v562
    %710 = vmatpush.msra.mxu0 %v559
    %711 = vmatpush.msra.mxu0 %v556
    %712 = vmatpush.msra.mxu0 %v553
    %713 = vmatpush.msra.mxu0 %v550
    %714 = vmatpush.msra.mxu0 %v547
    %715 = vmatpush.msra.mxu0 %v544
    %716 = vmatpush.msra.mxu0 %v541
    %717 = vmatmul.f32.gmra.mxu0 %v598
    %v718 = vpop.f32.mrf.mxu0
    %v719 = vadd.f32 %v699, %v718
    %720 = vdwg.mxu0
    %v721 = vxor.u32 %v639, 2147483648
    %v722 = vmul.f32 %v721, 1.442695
    %v723 = vpow.pop %v722
    %v724 = vadd.f32 %v723, 1.0
    %v725 = vrcp.pop %v724
    %v726 = vmul.f32 %v724, %v725
    %v727 = vsub.f32 1.0, %v726
    %v728 = vmul.f32 %v725, %v727
    %v729 = vadd.f32 %v725, %v728
    %vm730 = vweird.f32 %v724
    %vm731 = vweird.f32 %v725
    %vm732 = vmor %vm730, %vm731
    %v733 = vsel %vm732, %v725, %v729
    %v734 = vand.u32 2147483647, %v724
    %vm735 = vcmp.eq.f32.partialorder %v734, 8.507059e+37
    %v736 = vand.u32 %v724, 2147483648
    %v737 = vor.u32 1.1754944e-38, %v736
    %v738 = vsel %vm735, %v737, %v733
    %v739 = vmul.f32 1.0, %v738
    %v740 = vtanh.pop %v639
    %v741 = vmul.f32 %v739, %v417
    %743 = vrot.lane.b32.xlu0 %v740, 64
    %v744 = vpop.permute.xlu0 %743
    %v746 = vmul.f32 %v739, %v744
    %748 = vrot.lane.b32.xlu0 %v746, 32
    %v749 = vpop.permute.xlu0 %748
    %v751 = vadd.f32 %v741, %v749
    %v752 = vtanh.pop %v751
    %754 = vrot.lane.b32.xlu0 %v752, 64
    %v755 = vpop.permute.xlu0 %754
    %v757 = vmul.f32 %v739, %v755
    %759 = vrot.lane.b32.xlu0 %v757, 64
    %v760 = vpop.permute.xlu0 %759
    %762 = vst.msk [vmem:[#allocation2] sm:$0x3] %vm210, %v760
    %763 = vrot.lane.b32.xlu0 %v757, 96
    %v764 = vpop.permute.xlu0 %763
    %766 = vst.msk [vmem:[#allocation2] sm:$0x3] %vm215, %v764
    %v767 = vxor.u32 %v679, 2147483648
    %v768 = vmul.f32 %v767, 1.442695
    %v769 = vpow.pop %v768
    %v770 = vadd.f32 %v769, 1.0
    %v771 = vrcp.pop %v770
    %v772 = vmul.f32 %v770, %v771
    %v773 = vsub.f32 1.0, %v772
    %v774 = vmul.f32 %v771, %v773
    %v775 = vadd.f32 %v771, %v774
    %vm776 = vweird.f32 %v770
    %vm777 = vweird.f32 %v771
    %vm778 = vmor %vm776, %vm777
    %v779 = vsel %vm778, %v771, %v775
    %v780 = vand.u32 2147483647, %v770
    %vm781 = vcmp.eq.f32.partialorder %v780, 8.507059e+37
    %v782 = vand.u32 %v770, 2147483648
    %v783 = vor.u32 1.1754944e-38, %v782
    %v784 = vsel %vm781, %v783, %v779
    %v785 = vmul.f32 1.0, %v784
    %v786 = vtanh.pop %v679
    %v787 = vmul.f32 %v785, %v463
    %789 = vrot.lane.b32.xlu0 %v786, 64
    %v790 = vpop.permute.xlu0 %789
    %v792 = vmul.f32 %v785, %v790
    %794 = vrot.lane.b32.xlu0 %v792, 32
    %v795 = vpop.permute.xlu0 %794
    %v797 = vadd.f32 %v787, %v795
    %v798 = vtanh.pop %v797
    %800 = vrot.lane.b32.xlu0 %v798, 64
    %v801 = vpop.permute.xlu0 %800
    %v803 = vmul.f32 %v785, %v801
    %804 = vst.msk [vmem:[#allocation2] sm:$0x3] %vm470, %v803
    %806 = vrot.lane.b32.xlu0 %v803, 32
    %v807 = vpop.permute.xlu0 %806
    %809 = vst.msk [vmem:[#allocation2 + $0x2] sm:$0x3] %vm84, %v807
    %v810 = vxor.u32 %v719, 2147483648
    %v811 = vmul.f32 %v810, 1.442695
    %v812 = vpow.pop %v811
    %v813 = vadd.f32 %v812, 1.0
    %v814 = vrcp.pop %v813
    %v815 = vmul.f32 %v813, %v814
    %v816 = vsub.f32 1.0, %v815
    %v817 = vmul.f32 %v814, %v816
    %v818 = vadd.f32 %v814, %v817
    %vm819 = vweird.f32 %v813
    %vm820 = vweird.f32 %v814
    %vm821 = vmor %vm819, %vm820
    %v822 = vsel %vm821, %v814, %v818
    %v823 = vand.u32 2147483647, %v813
    %vm824 = vcmp.eq.f32.partialorder %v823, 8.507059e+37
    %v825 = vand.u32 %v813, 2147483648
    %v826 = vor.u32 1.1754944e-38, %v825
    %v827 = vsel %vm824, %v826, %v822
    %v828 = vmul.f32 1.0, %v827
    %v829 = vtanh.pop %v719
    %v830 = vmul.f32 %v828, 0.0
    %832 = vrot.lane.b32.xlu0 %v829, 64
    %v833 = vpop.permute.xlu0 %832
    %v835 = vmul.f32 %v828, %v833
    %837 = vrot.lane.b32.xlu0 %v835, 32
    %v838 = vpop.permute.xlu0 %837
    %v840 = vadd.f32 %v830, %v838
    %v841 = vtanh.pop %v840
    %843 = vrot.lane.b32.xlu0 %v841, 64
    %v844 = vpop.permute.xlu0 %843
    %v846 = vmul.f32 %v828, %v844
    %848 = vrot.lane.b32.xlu0 %v846, 64
    %v849 = vpop.permute.xlu0 %848
    %851 = vst.msk [vmem:[#allocation2 + $0x2] sm:$0x3] %vm210, %v849
    %852 = vrot.lane.b32.xlu0 %v846, 96
    %v853 = vpop.permute.xlu0 %852
    %855 = vst.msk [vmem:[#allocation2 + $0x2] sm:$0x3] %vm215, %v853
    %v856 = vld [vmem:[%s0 + $0x3] sm:$0x1]
    %v857 = vld [vmem:[%s0 + $0xb] sm:$0x1]
    %v860 = vsel %vm70, %v856, %v856
    %v861 = vsel %vm72, %v856, %v860
    %v862 = vrot.slane %v857, 7
    %v863 = vsel %vm75, %v862, %v861
    %v864 = vsel %vm77, %v862, %v863
    %v865 = vsel %vm79, %v862, %v864
    %v866 = vsel %vm81, %v862, %v865
    %868 = vst.msk [vmem:[#allocation2] sm:$0x3] %vm84, %v866
    %v869 = vld [vmem:[#allocation2] sm:$0xf]
    %v870 = vld [vmem:[#allocation4] sm:$0xff]
    %v871 = vld [vmem:[#allocation4 + $0x8] sm:$0xff]
    %v872 = vld [vmem:[#allocation4 + $0x10] sm:$0xff]
    %v873 = vld [vmem:[#allocation4 + $0x18] sm:$0xff]
    %v874 = vld [vmem:[#allocation4 + $0x20] sm:$0xff]
    %v875 = vld [vmem:[#allocation4 + $0x28] sm:$0xff]
    %v876 = vld [vmem:[#allocation4 + $0x30] sm:$0xff]
    %v877 = vld [vmem:[#allocation4 + $0x38] sm:$0xff]
    %v878 = vld [vmem:[#allocation4 + $0x40] sm:$0xff]
    %v879 = vld [vmem:[#allocation4 + $0x48] sm:$0xff]
    %v880 = vld [vmem:[#allocation4 + $0x50] sm:$0xff]
    %v881 = vld [vmem:[#allocation4 + $0x58] sm:$0xff]
    %v882 = vld [vmem:[#allocation4 + $0x60] sm:$0xff]
    %v883 = vld [vmem:[#allocation4 + $0x68] sm:$0xff]
    %v884 = vld [vmem:[#allocation4 + $0x70] sm:$0xff]
    %v885 = vld [vmem:[#allocation4 + $0x78] sm:$0xff]
    %v886 = vld [vmem:[#allocation4 + $0x80] sm:$0xff]
    %v887 = vld [vmem:[#allocation4 + $0x88] sm:$0xff]
    %v888 = vld [vmem:[#allocation4 + $0x90] sm:$0xff]
    %v889 = vld [vmem:[#allocation4 + $0x98] sm:$0xff]
    %v890 = vld [vmem:[#allocation4 + $0xa0] sm:$0xff]
    %v891 = vld [vmem:[#allocation4 + $0xa8] sm:$0xff]
    %v892 = vld [vmem:[#allocation4 + $0xb0] sm:$0xff]
    %v893 = vld [vmem:[#allocation4 + $0xb8] sm:$0xff]
    %v894 = vld [vmem:[#allocation4 + $0xc0] sm:$0xff]
    %v895 = vld [vmem:[#allocation4 + $0xc8] sm:$0xff]
    %v896 = vld [vmem:[#allocation4 + $0xd0] sm:$0xff]
    %v897 = vld [vmem:[#allocation4 + $0xd8] sm:$0xff]
    %v898 = vld [vmem:[#allocation4 + $0xe0] sm:$0xff]
    %v899 = vld [vmem:[#allocation4 + $0xe8] sm:$0xff]
    %v900 = vld [vmem:[#allocation4 + $0xf0] sm:$0xff]
    %v901 = vld [vmem:[#allocation4 + $0xf8] sm:$0xff]
    %v902 = vld [vmem:[#allocation4 + $0x100] sm:$0xff]
    %v903 = vld [vmem:[#allocation4 + $0x108] sm:$0xff]
    %v904 = vld [vmem:[#allocation4 + $0x110] sm:$0xff]
    %v905 = vld [vmem:[#allocation4 + $0x118] sm:$0xff]
    %v906 = vld [vmem:[#allocation4 + $0x120] sm:$0xff]
    %v907 = vld [vmem:[#allocation4 + $0x128] sm:$0xff]
    %v908 = vld [vmem:[#allocation4 + $0x130] sm:$0xff]
    %v909 = vld [vmem:[#allocation4 + $0x138] sm:$0xff]
    %v910 = vld [vmem:[#allocation4 + $0x140] sm:$0xff]
    %v911 = vld [vmem:[#allocation4 + $0x148] sm:$0xff]
    %v912 = vld [vmem:[#allocation4 + $0x150] sm:$0xff]
    %v913 = vld [vmem:[#allocation4 + $0x158] sm:$0xff]
    %v914 = vld [vmem:[#allocation4 + $0x160] sm:$0xff]
    %v915 = vld [vmem:[#allocation4 + $0x168] sm:$0xff]
    %v916 = vld [vmem:[#allocation4 + $0x170] sm:$0xff]
    %v917 = vld [vmem:[#allocation4 + $0x178] sm:$0xff]
    %v918 = vld [vmem:[#allocation4 + $0x180] sm:$0xff]
    %v919 = vld [vmem:[#allocation4 + $0x188] sm:$0xff]
    %v920 = vld [vmem:[#allocation4 + $0x190] sm:$0xff]
    %v921 = vld [vmem:[#allocation4 + $0x198] sm:$0xff]
    %v922 = vld [vmem:[#allocation4 + $0x1a0] sm:$0xff]
    %v923 = vld [vmem:[#allocation4 + $0x1a8] sm:$0xff]
    %v924 = vld [vmem:[#allocation4 + $0x1b0] sm:$0xff]
    %v925 = vld [vmem:[#allocation4 + $0x1b8] sm:$0xff]
    %v926 = vld [vmem:[#allocation4 + $0x1c0] sm:$0xff]
    %v927 = vld [vmem:[#allocation4 + $0x1c8] sm:$0xff]
    %v928 = vld [vmem:[#allocation4 + $0x1d0] sm:$0xff]
    %v929 = vld [vmem:[#allocation4 + $0x1d8] sm:$0xff]
    %v930 = vld [vmem:[#allocation4 + $0x1e0] sm:$0xff]
    %v931 = vld [vmem:[#allocation4 + $0x1e8] sm:$0xff]
    %v932 = vld [vmem:[#allocation4 + $0x1f0] sm:$0xff]
    %v933 = vld [vmem:[#allocation4 + $0x1f8] sm:$0xff]
    %v934 = vld [vmem:[#allocation4 + $0x200] sm:$0xff]
    %v935 = vld [vmem:[#allocation4 + $0x208] sm:$0xff]
    %v936 = vld [vmem:[#allocation4 + $0x210] sm:$0xff]
    %v937 = vld [vmem:[#allocation4 + $0x218] sm:$0xff]
    %v938 = vld [vmem:[#allocation4 + $0x220] sm:$0xff]
    %v939 = vld [vmem:[#allocation4 + $0x228] sm:$0xff]
    %v940 = vld [vmem:[#allocation4 + $0x230] sm:$0xff]
    %v941 = vld [vmem:[#allocation4 + $0x238] sm:$0xff]
    %v942 = vld [vmem:[#allocation4 + $0x240] sm:$0xff]
    %v943 = vld [vmem:[#allocation4 + $0x248] sm:$0xff]
    %v944 = vld [vmem:[#allocation4 + $0x250] sm:$0xff]
    %v945 = vld [vmem:[#allocation4 + $0x258] sm:$0xff]
    %v946 = vld [vmem:[#allocation4 + $0x260] sm:$0xff]
    %v947 = vld [vmem:[#allocation4 + $0x268] sm:$0xff]
    %v948 = vld [vmem:[#allocation4 + $0x270] sm:$0xff]
    %v949 = vld [vmem:[#allocation4 + $0x278] sm:$0xff]
    %v950 = vld [vmem:[#allocation4 + $0x280] sm:$0xff]
    %v951 = vld [vmem:[#allocation4 + $0x288] sm:$0xff]
    %v952 = vld [vmem:[#allocation4 + $0x290] sm:$0xff]
    %v953 = vld [vmem:[#allocation4 + $0x298] sm:$0xff]
    %v954 = vld [vmem:[#allocation4 + $0x2a0] sm:$0xff]
    %v955 = vld [vmem:[#allocation4 + $0x2a8] sm:$0xff]
    %v956 = vld [vmem:[#allocation4 + $0x2b0] sm:$0xff]
    %v957 = vld [vmem:[#allocation4 + $0x2b8] sm:$0xff]
    %v958 = vld [vmem:[#allocation4 + $0x2c0] sm:$0xff]
    %v959 = vld [vmem:[#allocation4 + $0x2c8] sm:$0xff]
    %v960 = vld [vmem:[#allocation4 + $0x2d0] sm:$0xff]
    %v961 = vld [vmem:[#allocation4 + $0x2d8] sm:$0xff]
    %v962 = vld [vmem:[#allocation4 + $0x2e0] sm:$0xff]
    %v963 = vld [vmem:[#allocation4 + $0x2e8] sm:$0xff]
    %v964 = vld [vmem:[#allocation4 + $0x2f0] sm:$0xff]
    %v965 = vld [vmem:[#allocation4 + $0x2f8] sm:$0xff]
    %v966 = vld [vmem:[#allocation4 + $0x300] sm:$0xff]
    %v967 = vld [vmem:[#allocation4 + $0x308] sm:$0xff]
    %v968 = vld [vmem:[#allocation4 + $0x310] sm:$0xff]
    %v969 = vld [vmem:[#allocation4 + $0x318] sm:$0xff]
    %v970 = vld [vmem:[#allocation4 + $0x320] sm:$0xff]
    %v971 = vld [vmem:[#allocation4 + $0x328] sm:$0xff]
    %v972 = vld [vmem:[#allocation4 + $0x330] sm:$0xff]
    %v973 = vld [vmem:[#allocation4 + $0x338] sm:$0xff]
    %v974 = vld [vmem:[#allocation4 + $0x340] sm:$0xff]
    %v975 = vld [vmem:[#allocation4 + $0x348] sm:$0xff]
    %v976 = vld [vmem:[#allocation4 + $0x350] sm:$0xff]
    %v977 = vld [vmem:[#allocation4 + $0x358] sm:$0xff]
    %v978 = vld [vmem:[#allocation4 + $0x360] sm:$0xff]
    %v979 = vld [vmem:[#allocation4 + $0x368] sm:$0xff]
    %v980 = vld [vmem:[#allocation4 + $0x370] sm:$0xff]
    %v981 = vld [vmem:[#allocation4 + $0x378] sm:$0xff]
    %v982 = vld [vmem:[#allocation4 + $0x380] sm:$0xff]
    %v983 = vld [vmem:[#allocation4 + $0x388] sm:$0xff]
    %v984 = vld [vmem:[#allocation4 + $0x390] sm:$0xff]
    %v985 = vld [vmem:[#allocation4 + $0x398] sm:$0xff]
    %v986 = vld [vmem:[#allocation4 + $0x3a0] sm:$0xff]
    %v987 = vld [vmem:[#allocation4 + $0x3a8] sm:$0xff]
    %v988 = vld [vmem:[#allocation4 + $0x3b0] sm:$0xff]
    %v989 = vld [vmem:[#allocation4 + $0x3b8] sm:$0xff]
    %v990 = vld [vmem:[#allocation4 + $0x3c0] sm:$0xff]
    %v991 = vld [vmem:[#allocation4 + $0x3c8] sm:$0xff]
    %v992 = vld [vmem:[#allocation4 + $0x3d0] sm:$0xff]
    %v993 = vld [vmem:[#allocation4 + $0x3d8] sm:$0xff]
    %v994 = vld [vmem:[#allocation4 + $0x3e0] sm:$0xff]
    %v995 = vld [vmem:[#allocation4 + $0x3e8] sm:$0xff]
    %v996 = vld [vmem:[#allocation4 + $0x3f0] sm:$0xff]
    %v997 = vld [vmem:[#allocation4 + $0x3f8] sm:$0xff]
    %v998 = vld [vmem:[%s2] sm:$0xf]
    %v1000 = vperm.slane %v998, 0
    %v1001 = vperm.slane %v998, 1
    %v1002 = vperm.slane %v998, 2
    %v1003 = vperm.slane %v998, 3
    %1009 = vst [vmem:[#allocation1] ss:$4 sm:$0xff] %v869
    %v1010 = vld.sshfl [vmem:[#allocation1] sm:$0xff pattern:$0x73625140]
    %v1011 = vld.sshfl [vmem:[#allocation1 + $0x8] sm:$0xff pattern:$0x73625140]
    %1014 = vmatpush.msra.mxu0 %v930
    %1015 = vmatpush.msra.mxu0 %v926
    %1016 = vmatpush.msra.mxu0 %v922
    %1017 = vmatpush.msra.mxu0 %v918
    %1018 = vmatpush.msra.mxu0 %v914
    %1019 = vmatpush.msra.mxu0 %v910
    %1020 = vmatpush.msra.mxu0 %v906
    %1021 = vmatpush.msra.mxu0 %v902
    %1022 = vmatpush.msra.mxu0 %v898
    %1023 = vmatpush.msra.mxu0 %v894
    %1024 = vmatpush.msra.mxu0 %v890
    %1025 = vmatpush.msra.mxu0 %v886
    %1026 = vmatpush.msra.mxu0 %v882
    %1027 = vmatpush.msra.mxu0 %v878
    %1028 = vmatpush.msra.mxu0 %v874
    %1029 = vmatpush.msra.mxu0 %v870
    %1030 = vmatmul.f32.gmra.mxu0 %v1010
    %v1031 = vpop.f32.mrf.mxu0
    %v1032 = vadd.f32 %v1000, %v1031
    %1033 = vdwg.mxu0
    %1034 = vmatpush.msra.mxu0 %v994
    %1035 = vmatpush.msra.mxu0 %v990
    %1036 = vmatpush.msra.mxu0 %v986
    %1037 = vmatpush.msra.mxu0 %v982
    %1038 = vmatpush.msra.mxu0 %v978
    %1039 = vmatpush.msra.mxu0 %v974
    %1040 = vmatpush.msra.mxu0 %v970
    %1041 = vmatpush.msra.mxu0 %v966
    %1042 = vmatpush.msra.mxu0 %v962
    %1043 = vmatpush.msra.mxu0 %v958
    %1044 = vmatpush.msra.mxu0 %v954
    %1045 = vmatpush.msra.mxu0 %v950
    %1046 = vmatpush.msra.mxu0 %v946
    %1047 = vmatpush.msra.mxu0 %v942
    %1048 = vmatpush.msra.mxu0 %v938
    %1049 = vmatpush.msra.mxu0 %v934
    %1050 = vmatmul.f32.gmra.mxu0 %v1011
    %v1051 = vpop.f32.mrf.mxu0
    %v1052 = vadd.f32 %v1032, %v1051
    %1053 = vdwg.mxu0
    %1054 = vmatpush.msra.mxu0 %v931
    %1055 = vmatpush.msra.mxu0 %v927
    %1056 = vmatpush.msra.mxu0 %v923
    %1057 = vmatpush.msra.mxu0 %v919
    %1058 = vmatpush.msra.mxu0 %v915
    %1059 = vmatpush.msra.mxu0 %v911
    %1060 = vmatpush.msra.mxu0 %v907
    %1061 = vmatpush.msra.mxu0 %v903
    %1062 = vmatpush.msra.mxu0 %v899
    %1063 = vmatpush.msra.mxu0 %v895
    %1064 = vmatpush.msra.mxu0 %v891
    %1065 = vmatpush.msra.mxu0 %v887
    %1066 = vmatpush.msra.mxu0 %v883
    %1067 = vmatpush.msra.mxu0 %v879
    %1068 = vmatpush.msra.mxu0 %v875
    %1069 = vmatpush.msra.mxu0 %v871
    %1070 = vmatmul.f32.gmra.mxu0 %v1010
    %v1071 = vpop.f32.mrf.mxu0
    %v1072 = vadd.f32 %v1001, %v1071
    %1073 = vdwg.mxu0
    %1074 = vmatpush.msra.mxu0 %v995
    %1075 = vmatpush.msra.mxu0 %v991
    %1076 = vmatpush.msra.mxu0 %v987
    %1077 = vmatpush.msra.mxu0 %v983
    %1078 = vmatpush.msra.mxu0 %v979
    %1079 = vmatpush.msra.mxu0 %v975
    %1080 = vmatpush.msra.mxu0 %v971
    %1081 = vmatpush.msra.mxu0 %v967
    %1082 = vmatpush.msra.mxu0 %v963
    %1083 = vmatpush.msra.mxu0 %v959
    %1084 = vmatpush.msra.mxu0 %v955
    %1085 = vmatpush.msra.mxu0 %v951
    %1086 = vmatpush.msra.mxu0 %v947
    %1087 = vmatpush.msra.mxu0 %v943
    %1088 = vmatpush.msra.mxu0 %v939
    %1089 = vmatpush.msra.mxu0 %v935
    %1090 = vmatmul.f32.gmra.mxu0 %v1011
    %v1091 = vpop.f32.mrf.mxu0
    %v1092 = vadd.f32 %v1072, %v1091
    %1093 = vdwg.mxu0
    %1094 = vmatpush.msra.mxu0 %v932
    %1095 = vmatpush.msra.mxu0 %v928
    %1096 = vmatpush.msra.mxu0 %v924
    %1097 = vmatpush.msra.mxu0 %v920
    %1098 = vmatpush.msra.mxu0 %v916
    %1099 = vmatpush.msra.mxu0 %v912
    %1100 = vmatpush.msra.mxu0 %v908
    %1101 = vmatpush.msra.mxu0 %v904
    %1102 = vmatpush.msra.mxu0 %v900
    %1103 = vmatpush.msra.mxu0 %v896
    %1104 = vmatpush.msra.mxu0 %v892
    %1105 = vmatpush.msra.mxu0 %v888
    %1106 = vmatpush.msra.mxu0 %v884
    %1107 = vmatpush.msra.mxu0 %v880
    %1108 = vmatpush.msra.mxu0 %v876
    %1109 = vmatpush.msra.mxu0 %v872
    %1110 = vmatmul.f32.gmra.mxu0 %v1010
    %v1111 = vpop.f32.mrf.mxu0
    %v1112 = vadd.f32 %v1002, %v1111
    %1113 = vdwg.mxu0
    %1114 = vmatpush.msra.mxu0 %v996
    %1115 = vmatpush.msra.mxu0 %v992
    %1116 = vmatpush.msra.mxu0 %v988
    %1117 = vmatpush.msra.mxu0 %v984
    %1118 = vmatpush.msra.mxu0 %v980
    %1119 = vmatpush.msra.mxu0 %v976
    %1120 = vmatpush.msra.mxu0 %v972
    %1121 = vmatpush.msra.mxu0 %v968
    %1122 = vmatpush.msra.mxu0 %v964
    %1123 = vmatpush.msra.mxu0 %v960
    %1124 = vmatpush.msra.mxu0 %v956
    %1125 = vmatpush.msra.mxu0 %v952
    %1126 = vmatpush.msra.mxu0 %v948
    %1127 = vmatpush.msra.mxu0 %v944
    %1128 = vmatpush.msra.mxu0 %v940
    %1129 = vmatpush.msra.mxu0 %v936
    %1130 = vmatmul.f32.gmra.mxu0 %v1011
    %v1131 = vpop.f32.mrf.mxu0
    %v1132 = vadd.f32 %v1112, %v1131
    %1133 = vdwg.mxu0
    %1134 = vmatpush.msra.mxu0 %v933
    %1135 = vmatpush.msra.mxu0 %v929
    %1136 = vmatpush.msra.mxu0 %v925
    %1137 = vmatpush.msra.mxu0 %v921
    %1138 = vmatpush.msra.mxu0 %v917
    %1139 = vmatpush.msra.mxu0 %v913
    %1140 = vmatpush.msra.mxu0 %v909
    %1141 = vmatpush.msra.mxu0 %v905
    %1142 = vmatpush.msra.mxu0 %v901
    %1143 = vmatpush.msra.mxu0 %v897
    %1144 = vmatpush.msra.mxu0 %v893
    %1145 = vmatpush.msra.mxu0 %v889
    %1146 = vmatpush.msra.mxu0 %v885
    %1147 = vmatpush.msra.mxu0 %v881
    %1148 = vmatpush.msra.mxu0 %v877
    %1149 = vmatpush.msra.mxu0 %v873
    %1150 = vmatmul.f32.gmra.mxu0 %v1010
    %v1151 = vpop.f32.mrf.mxu0
    %v1152 = vadd.f32 %v1003, %v1151
    %1153 = vdwg.mxu0
    %1154 = vmatpush.msra.mxu0 %v997
    %1155 = vmatpush.msra.mxu0 %v993
    %1156 = vmatpush.msra.mxu0 %v989
    %1157 = vmatpush.msra.mxu0 %v985
    %1158 = vmatpush.msra.mxu0 %v981
    %1159 = vmatpush.msra.mxu0 %v977
    %1160 = vmatpush.msra.mxu0 %v973
    %1161 = vmatpush.msra.mxu0 %v969
    %1162 = vmatpush.msra.mxu0 %v965
    %1163 = vmatpush.msra.mxu0 %v961
    %1164 = vmatpush.msra.mxu0 %v957
    %1165 = vmatpush.msra.mxu0 %v953
    %1166 = vmatpush.msra.mxu0 %v949
    %1167 = vmatpush.msra.mxu0 %v945
    %1168 = vmatpush.msra.mxu0 %v941
    %1169 = vmatpush.msra.mxu0 %v937
    %1170 = vmatmul.f32.gmra.mxu0 %v1011
    %v1171 = vpop.f32.mrf.mxu0
    %v1172 = vadd.f32 %v1152, %v1171
    %1173 = vdwg.mxu0
    %v1174 = vxor.u32 %v1052, 2147483648
    %v1175 = vmul.f32 %v1174, 1.442695
    %v1176 = vpow.pop %v1175
    %v1177 = vadd.f32 %v1176, 1.0
    %v1178 = vrcp.pop %v1177
    %v1179 = vmul.f32 %v1177, %v1178
    %v1180 = vsub.f32 1.0, %v1179
    %v1181 = vmul.f32 %v1178, %v1180
    %v1182 = vadd.f32 %v1178, %v1181
    %vm1183 = vweird.f32 %v1177
    %vm1184 = vweird.f32 %v1178
    %vm1185 = vmor %vm1183, %vm1184
    %v1186 = vsel %vm1185, %v1178, %v1182
    %v1187 = vand.u32 2147483647, %v1177
    %vm1188 = vcmp.eq.f32.partialorder %v1187, 8.507059e+37
    %v1189 = vand.u32 %v1177, 2147483648
    %v1190 = vor.u32 1.1754944e-38, %v1189
    %v1191 = vsel %vm1188, %v1190, %v1186
    %v1192 = vmul.f32 1.0, %v1191
    %v1193 = vtanh.pop %v1052
    %v1194 = vmul.f32 %v1192, %v751
    %1196 = vrot.lane.b32.xlu0 %v1193, 64
    %v1197 = vpop.permute.xlu0 %1196
    %v1199 = vmul.f32 %v1192, %v1197
    %1201 = vrot.lane.b32.xlu0 %v1199, 32
    %v1202 = vpop.permute.xlu0 %1201
    %v1204 = vadd.f32 %v1194, %v1202
    %v1205 = vtanh.pop %v1204
    %1207 = vrot.lane.b32.xlu0 %v1205, 64
    %v1208 = vpop.permute.xlu0 %1207
    %v1210 = vmul.f32 %v1192, %v1208
    %1212 = vrot.lane.b32.xlu0 %v1210, 64
    %v1213 = vpop.permute.xlu0 %1212
    %1215 = vst.msk [vmem:[#allocation2] sm:$0x3] %vm210, %v1213
    %1216 = vrot.lane.b32.xlu0 %v1210, 96
    %v1217 = vpop.permute.xlu0 %1216
    %1219 = vst.msk [vmem:[#allocation2] sm:$0x3] %vm215, %v1217
    %v1220 = vxor.u32 %v1092, 2147483648
    %v1221 = vmul.f32 %v1220, 1.442695
    %v1222 = vpow.pop %v1221
    %v1223 = vadd.f32 %v1222, 1.0
    %v1224 = vrcp.pop %v1223
    %v1225 = vmul.f32 %v1223, %v1224
    %v1226 = vsub.f32 1.0, %v1225
    %v1227 = vmul.f32 %v1224, %v1226
    %v1228 = vadd.f32 %v1224, %v1227
    %vm1229 = vweird.f32 %v1223
    %vm1230 = vweird.f32 %v1224
    %vm1231 = vmor %vm1229, %vm1230
    %v1232 = vsel %vm1231, %v1224, %v1228
    %v1233 = vand.u32 2147483647, %v1223
    %vm1234 = vcmp.eq.f32.partialorder %v1233, 8.507059e+37
    %v1235 = vand.u32 %v1223, 2147483648
    %v1236 = vor.u32 1.1754944e-38, %v1235
    %v1237 = vsel %vm1234, %v1236, %v1232
    %v1238 = vmul.f32 1.0, %v1237
    %v1239 = vtanh.pop %v1092
    %v1240 = vmul.f32 %v1238, %v797
    %1242 = vrot.lane.b32.xlu0 %v1239, 64
    %v1243 = vpop.permute.xlu0 %1242
    %v1245 = vmul.f32 %v1238, %v1243
    %1247 = vrot.lane.b32.xlu0 %v1245, 32
    %v1248 = vpop.permute.xlu0 %1247
    %v1250 = vadd.f32 %v1240, %v1248
    %v1251 = vtanh.pop %v1250
    %1253 = vrot.lane.b32.xlu0 %v1251, 64
    %v1254 = vpop.permute.xlu0 %1253
    %v1256 = vmul.f32 %v1238, %v1254
    %1257 = vst.msk [vmem:[#allocation2] sm:$0x3] %vm470, %v1256
    %1259 = vrot.lane.b32.xlu0 %v1256, 32
    %v1260 = vpop.permute.xlu0 %1259
    %1262 = vst.msk [vmem:[#allocation2 + $0x2] sm:$0x3] %vm84, %v1260
    %v1263 = vxor.u32 %v1132, 2147483648
    %v1264 = vmul.f32 %v1263, 1.442695
    %v1265 = vpow.pop %v1264
    %v1266 = vadd.f32 %v1265, 1.0
    %v1267 = vrcp.pop %v1266
    %v1268 = vmul.f32 %v1266, %v1267
    %v1269 = vsub.f32 1.0, %v1268
    %v1270 = vmul.f32 %v1267, %v1269
    %v1271 = vadd.f32 %v1267, %v1270
    %vm1272 = vweird.f32 %v1266
    %vm1273 = vweird.f32 %v1267
    %vm1274 = vmor %vm1272, %vm1273
    %v1275 = vsel %vm1274, %v1267, %v1271
    %v1276 = vand.u32 2147483647, %v1266
    %vm1277 = vcmp.eq.f32.partialorder %v1276, 8.507059e+37
    %v1278 = vand.u32 %v1266, 2147483648
    %v1279 = vor.u32 1.1754944e-38, %v1278
    %v1280 = vsel %vm1277, %v1279, %v1275
    %v1281 = vmul.f32 1.0, %v1280
    %v1282 = vtanh.pop %v1132
    %v1283 = vmul.f32 %v1281, %v840
    %1285 = vrot.lane.b32.xlu0 %v1282, 64
    %v1286 = vpop.permute.xlu0 %1285
    %v1288 = vmul.f32 %v1281, %v1286
    %1290 = vrot.lane.b32.xlu0 %v1288, 32
    %v1291 = vpop.permute.xlu0 %1290
    %v1293 = vadd.f32 %v1283, %v1291
    %v1294 = vtanh.pop %v1293
    %1296 = vrot.lane.b32.xlu0 %v1294, 64
    %v1297 = vpop.permute.xlu0 %1296
    %v1299 = vmul.f32 %v1281, %v1297
    %1301 = vrot.lane.b32.xlu0 %v1299, 64
    %v1302 = vpop.permute.xlu0 %1301
    %1304 = vst.msk [vmem:[#allocation2 + $0x2] sm:$0x3] %vm210, %v1302
    %1305 = vrot.lane.b32.xlu0 %v1299, 96
    %v1306 = vpop.permute.xlu0 %1305
    %1308 = vst.msk [vmem:[#allocation2 + $0x2] sm:$0x3] %vm215, %v1306
    %v1309 = vxor.u32 %v1172, 2147483648
    %v1310 = vmul.f32 %v1309, 1.442695
    %v1311 = vpow.pop %v1310
    %v1312 = vadd.f32 %v1311, 1.0
    %v1313 = vrcp.pop %v1312
    %v1314 = vmul.f32 %v1312, %v1313
    %v1315 = vsub.f32 1.0, %v1314
    %v1316 = vmul.f32 %v1313, %v1315
    %v1317 = vadd.f32 %v1313, %v1316
    %vm1318 = vweird.f32 %v1312
    %vm1319 = vweird.f32 %v1313
    %vm1320 = vmor %vm1318, %vm1319
    %v1321 = vsel %vm1320, %v1313, %v1317
    %v1322 = vand.u32 2147483647, %v1312
    %vm1323 = vcmp.eq.f32.partialorder %v1322, 8.507059e+37
    %v1324 = vand.u32 %v1312, 2147483648
    %v1325 = vor.u32 1.1754944e-38, %v1324
    %v1326 = vsel %vm1323, %v1325, %v1321
    %v1327 = vmul.f32 1.0, %v1326
    %v1328 = vtanh.pop %v1172
    %v1329 = vmul.f32 %v1327, 0.0
    %1331 = vrot.lane.b32.xlu0 %v1328, 64
    %v1332 = vpop.permute.xlu0 %1331
    %v1334 = vmul.f32 %v1327, %v1332
    %1336 = vrot.lane.b32.xlu0 %v1334, 32
    %v1337 = vpop.permute.xlu0 %1336
    %v1339 = vadd.f32 %v1329, %v1337
    %v1340 = vtanh.pop %v1339
    %1342 = vrot.lane.b32.xlu0 %v1340, 64
    %v1343 = vpop.permute.xlu0 %1342
    %v1345 = vmul.f32 %v1327, %v1343
    %1346 = vst.msk [vmem:[#allocation2 + $0x2] sm:$0x3] %vm470, %v1345
    %1348 = vrot.lane.b32.xlu0 %v1345, 32
    %v1349 = vpop.permute.xlu0 %1348
    %1351 = vst.msk [vmem:[#allocation3] sm:$0x3] %vm84, %v1349
    %v1352 = vld [vmem:[%s0 + $0x4] sm:$0x1]
    %v1353 = vld [vmem:[%s0 + $0xc] sm:$0x1]
    %v1356 = vsel %vm70, %v1352, %v1352
    %v1357 = vsel %vm72, %v1352, %v1356
    %v1358 = vrot.slane %v1353, 7
    %v1359 = vsel %vm75, %v1358, %v1357
    %v1360 = vsel %vm77, %v1358, %v1359
    %v1361 = vsel %vm79, %v1358, %v1360
    %v1362 = vsel %vm81, %v1358, %v1361
    %1364 = vst.msk [vmem:[#allocation2] sm:$0x3] %vm84, %v1362
    %v1365 = vld [vmem:[#allocation2] sm:$0xf]
    %v1366 = vld [vmem:[#allocation4] sm:$0xff]
    %v1367 = vld [vmem:[#allocation4 + $0x8] sm:$0xff]
    %v1368 = vld [vmem:[#allocation4 + $0x10] sm:$0xff]
    %v1369 = vld [vmem:[#allocation4 + $0x18] sm:$0xff]
    %v1370 = vld [vmem:[#allocation4 + $0x20] sm:$0xff]
    %v1371 = vld [vmem:[#allocation4 + $0x28] sm:$0xff]
    %v1372 = vld [vmem:[#allocation4 + $0x30] sm:$0xff]
    %v1373 = vld [vmem:[#allocation4 + $0x38] sm:$0xff]
    %v1374 = vld [vmem:[#allocation4 + $0x40] sm:$0xff]
    %v1375 = vld [vmem:[#allocation4 + $0x48] sm:$0xff]
    %v1376 = vld [vmem:[#allocation4 + $0x50] sm:$0xff]
    %v1377 = vld [vmem:[#allocation4 + $0x58] sm:$0xff]
    %v1378 = vld [vmem:[#allocation4 + $0x60] sm:$0xff]
    %v1379 = vld [vmem:[#allocation4 + $0x68] sm:$0xff]
    %v1380 = vld [vmem:[#allocation4 + $0x70] sm:$0xff]
    %v1381 = vld [vmem:[#allocation4 + $0x78] sm:$0xff]
    %v1382 = vld [vmem:[#allocation4 + $0x80] sm:$0xff]
    %v1383 = vld [vmem:[#allocation4 + $0x88] sm:$0xff]
    %v1384 = vld [vmem:[#allocation4 + $0x90] sm:$0xff]
    %v1385 = vld [vmem:[#allocation4 + $0x98] sm:$0xff]
    %v1386 = vld [vmem:[#allocation4 + $0xa0] sm:$0xff]
    %v1387 = vld [vmem:[#allocation4 + $0xa8] sm:$0xff]
    %v1388 = vld [vmem:[#allocation4 + $0xb0] sm:$0xff]
    %v1389 = vld [vmem:[#allocation4 + $0xb8] sm:$0xff]
    %v1390 = vld [vmem:[#allocation4 + $0xc0] sm:$0xff]
    %v1391 = vld [vmem:[#allocation4 + $0xc8] sm:$0xff]
    %v1392 = vld [vmem:[#allocation4 + $0xd0] sm:$0xff]
    %v1393 = vld [vmem:[#allocation4 + $0xd8] sm:$0xff]
    %v1394 = vld [vmem:[#allocation4 + $0xe0] sm:$0xff]
    %v1395 = vld [vmem:[#allocation4 + $0xe8] sm:$0xff]
    %v1396 = vld [vmem:[#allocation4 + $0xf0] sm:$0xff]
    %v1397 = vld [vmem:[#allocation4 + $0xf8] sm:$0xff]
    %v1398 = vld [vmem:[#allocation4 + $0x100] sm:$0xff]
    %v1399 = vld [vmem:[#allocation4 + $0x108] sm:$0xff]
    %v1400 = vld [vmem:[#allocation4 + $0x110] sm:$0xff]
    %v1401 = vld [vmem:[#allocation4 + $0x118] sm:$0xff]
    %v1402 = vld [vmem:[#allocation4 + $0x120] sm:$0xff]
    %v1403 = vld [vmem:[#allocation4 + $0x128] sm:$0xff]
    %v1404 = vld [vmem:[#allocation4 + $0x130] sm:$0xff]
    %v1405 = vld [vmem:[#allocation4 + $0x138] sm:$0xff]
    %v1406 = vld [vmem:[#allocation4 + $0x140] sm:$0xff]
    %v1407 = vld [vmem:[#allocation4 + $0x148] sm:$0xff]
    %v1408 = vld [vmem:[#allocation4 + $0x150] sm:$0xff]
    %v1409 = vld [vmem:[#allocation4 + $0x158] sm:$0xff]
    %v1410 = vld [vmem:[#allocation4 + $0x160] sm:$0xff]
    %v1411 = vld [vmem:[#allocation4 + $0x168] sm:$0xff]
    %v1412 = vld [vmem:[#allocation4 + $0x170] sm:$0xff]
    %v1413 = vld [vmem:[#allocation4 + $0x178] sm:$0xff]
    %v1414 = vld [vmem:[#allocation4 + $0x180] sm:$0xff]
    %v1415 = vld [vmem:[#allocation4 + $0x188] sm:$0xff]
    %v1416 = vld [vmem:[#allocation4 + $0x190] sm:$0xff]
    %v1417 = vld [vmem:[#allocation4 + $0x198] sm:$0xff]
    %v1418 = vld [vmem:[#allocation4 + $0x1a0] sm:$0xff]
    %v1419 = vld [vmem:[#allocation4 + $0x1a8] sm:$0xff]
    %v1420 = vld [vmem:[#allocation4 + $0x1b0] sm:$0xff]
    %v1421 = vld [vmem:[#allocation4 + $0x1b8] sm:$0xff]
    %v1422 = vld [vmem:[#allocation4 + $0x1c0] sm:$0xff]
    %v1423 = vld [vmem:[#allocation4 + $0x1c8] sm:$0xff]
    %v1424 = vld [vmem:[#allocation4 + $0x1d0] sm:$0xff]
    %v1425 = vld [vmem:[#allocation4 + $0x1d8] sm:$0xff]
    %v1426 = vld [vmem:[#allocation4 + $0x1e0] sm:$0xff]
    %v1427 = vld [vmem:[#allocation4 + $0x1e8] sm:$0xff]
    %v1428 = vld [vmem:[#allocation4 + $0x1f0] sm:$0xff]
    %v1429 = vld [vmem:[#allocation4 + $0x1f8] sm:$0xff]
    %v1430 = vld [vmem:[#allocation4 + $0x200] sm:$0xff]
    %v1431 = vld [vmem:[#allocation4 + $0x208] sm:$0xff]
    %v1432 = vld [vmem:[#allocation4 + $0x210] sm:$0xff]
    %v1433 = vld [vmem:[#allocation4 + $0x218] sm:$0xff]
    %v1434 = vld [vmem:[#allocation4 + $0x220] sm:$0xff]
    %v1435 = vld [vmem:[#allocation4 + $0x228] sm:$0xff]
    %v1436 = vld [vmem:[#allocation4 + $0x230] sm:$0xff]
    %v1437 = vld [vmem:[#allocation4 + $0x238] sm:$0xff]
    %v1438 = vld [vmem:[#allocation4 + $0x240] sm:$0xff]
    %v1439 = vld [vmem:[#allocation4 + $0x248] sm:$0xff]
    %v1440 = vld [vmem:[#allocation4 + $0x250] sm:$0xff]
    %v1441 = vld [vmem:[#allocation4 + $0x258] sm:$0xff]
    %v1442 = vld [vmem:[#allocation4 + $0x260] sm:$0xff]
    %v1443 = vld [vmem:[#allocation4 + $0x268] sm:$0xff]
    %v1444 = vld [vmem:[#allocation4 + $0x270] sm:$0xff]
    %v1445 = vld [vmem:[#allocation4 + $0x278] sm:$0xff]
    %v1446 = vld [vmem:[#allocation4 + $0x280] sm:$0xff]
    %v1447 = vld [vmem:[#allocation4 + $0x288] sm:$0xff]
    %v1448 = vld [vmem:[#allocation4 + $0x290] sm:$0xff]
    %v1449 = vld [vmem:[#allocation4 + $0x298] sm:$0xff]
    %v1450 = vld [vmem:[#allocation4 + $0x2a0] sm:$0xff]
    %v1451 = vld [vmem:[#allocation4 + $0x2a8] sm:$0xff]
    %v1452 = vld [vmem:[#allocation4 + $0x2b0] sm:$0xff]
    %v1453 = vld [vmem:[#allocation4 + $0x2b8] sm:$0xff]
    %v1454 = vld [vmem:[#allocation4 + $0x2c0] sm:$0xff]
    %v1455 = vld [vmem:[#allocation4 + $0x2c8] sm:$0xff]
    %v1456 = vld [vmem:[#allocation4 + $0x2d0] sm:$0xff]
    %v1457 = vld [vmem:[#allocation4 + $0x2d8] sm:$0xff]
    %v1458 = vld [vmem:[#allocation4 + $0x2e0] sm:$0xff]
    %v1459 = vld [vmem:[#allocation4 + $0x2e8] sm:$0xff]
    %v1460 = vld [vmem:[#allocation4 + $0x2f0] sm:$0xff]
    %v1461 = vld [vmem:[#allocation4 + $0x2f8] sm:$0xff]
    %v1462 = vld [vmem:[#allocation4 + $0x300] sm:$0xff]
    %v1463 = vld [vmem:[#allocation4 + $0x308] sm:$0xff]
    %v1464 = vld [vmem:[#allocation4 + $0x310] sm:$0xff]
    %v1465 = vld [vmem:[#allocation4 + $0x318] sm:$0xff]
    %v1466 = vld [vmem:[#allocation4 + $0x320] sm:$0xff]
    %v1467 = vld [vmem:[#allocation4 + $0x328] sm:$0xff]
    %v1468 = vld [vmem:[#allocation4 + $0x330] sm:$0xff]
    %v1469 = vld [vmem:[#allocation4 + $0x338] sm:$0xff]
    %v1470 = vld [vmem:[#allocation4 + $0x340] sm:$0xff]
    %v1471 = vld [vmem:[#allocation4 + $0x348] sm:$0xff]
    %v1472 = vld [vmem:[#allocation4 + $0x350] sm:$0xff]
    %v1473 = vld [vmem:[#allocation4 + $0x358] sm:$0xff]
    %v1474 = vld [vmem:[#allocation4 + $0x360] sm:$0xff]
    %v1475 = vld [vmem:[#allocation4 + $0x368] sm:$0xff]
    %v1476 = vld [vmem:[#allocation4 + $0x370] sm:$0xff]
    %v1477 = vld [vmem:[#allocation4 + $0x378] sm:$0xff]
    %v1478 = vld [vmem:[#allocation4 + $0x380] sm:$0xff]
    %v1479 = vld [vmem:[#allocation4 + $0x388] sm:$0xff]
    %v1480 = vld [vmem:[#allocation4 + $0x390] sm:$0xff]
    %v1481 = vld [vmem:[#allocation4 + $0x398] sm:$0xff]
    %v1482 = vld [vmem:[#allocation4 + $0x3a0] sm:$0xff]
    %v1483 = vld [vmem:[#allocation4 + $0x3a8] sm:$0xff]
    %v1484 = vld [vmem:[#allocation4 + $0x3b0] sm:$0xff]
    %v1485 = vld [vmem:[#allocation4 + $0x3b8] sm:$0xff]
    %v1486 = vld [vmem:[#allocation4 + $0x3c0] sm:$0xff]
    %v1487 = vld [vmem:[#allocation4 + $0x3c8] sm:$0xff]
    %v1488 = vld [vmem:[#allocation4 + $0x3d0] sm:$0xff]
    %v1489 = vld [vmem:[#allocation4 + $0x3d8] sm:$0xff]
    %v1490 = vld [vmem:[#allocation4 + $0x3e0] sm:$0xff]
    %v1491 = vld [vmem:[#allocation4 + $0x3e8] sm:$0xff]
    %v1492 = vld [vmem:[#allocation4 + $0x3f0] sm:$0xff]
    %v1493 = vld [vmem:[#allocation4 + $0x3f8] sm:$0xff]
    %v1494 = vld [vmem:[%s2] sm:$0xf]
    %v1496 = vperm.slane %v1494, 0
    %v1497 = vperm.slane %v1494, 1
    %v1498 = vperm.slane %v1494, 2
    %v1499 = vperm.slane %v1494, 3
    %1505 = vst [vmem:[#allocation1] ss:$4 sm:$0xff] %v1365
    %v1506 = vld.sshfl [vmem:[#allocation1] sm:$0xff pattern:$0x73625140]
    %v1507 = vld.sshfl [vmem:[#allocation1 + $0x8] sm:$0xff pattern:$0x73625140]
    %1510 = vmatpush.msra.mxu0 %v1426
    %1511 = vmatpush.msra.mxu0 %v1422
    %1512 = vmatpush.msra.mxu0 %v1418
    %1513 = vmatpush.msra.mxu0 %v1414
    %1514 = vmatpush.msra.mxu0 %v1410
    %1515 = vmatpush.msra.mxu0 %v1406
    %1516 = vmatpush.msra.mxu0 %v1402
    %1517 = vmatpush.msra.mxu0 %v1398
    %1518 = vmatpush.msra.mxu0 %v1394
    %1519 = vmatpush.msra.mxu0 %v1390
    %1520 = vmatpush.msra.mxu0 %v1386
    %1521 = vmatpush.msra.mxu0 %v1382
    %1522 = vmatpush.msra.mxu0 %v1378
    %1523 = vmatpush.msra.mxu0 %v1374
    %1524 = vmatpush.msra.mxu0 %v1370
    %1525 = vmatpush.msra.mxu0 %v1366
    %1526 = vmatmul.f32.gmra.mxu0 %v1506
    %v1527 = vpop.f32.mrf.mxu0
    %v1528 = vadd.f32 %v1496, %v1527
    %1529 = vdwg.mxu0
    %1530 = vmatpush.msra.mxu0 %v1490
    %1531 = vmatpush.msra.mxu0 %v1486
    %1532 = vmatpush.msra.mxu0 %v1482
    %1533 = vmatpush.msra.mxu0 %v1478
    %1534 = vmatpush.msra.mxu0 %v1474
    %1535 = vmatpush.msra.mxu0 %v1470
    %1536 = vmatpush.msra.mxu0 %v1466
    %1537 = vmatpush.msra.mxu0 %v1462
    %1538 = vmatpush.msra.mxu0 %v1458
    %1539 = vmatpush.msra.mxu0 %v1454
    %1540 = vmatpush.msra.mxu0 %v1450
    %1541 = vmatpush.msra.mxu0 %v1446
    %1542 = vmatpush.msra.mxu0 %v1442
    %1543 = vmatpush.msra.mxu0 %v1438
    %1544 = vmatpush.msra.mxu0 %v1434
    %1545 = vmatpush.msra.mxu0 %v1430
    %1546 = vmatmul.f32.gmra.mxu0 %v1507
    %v1547 = vpop.f32.mrf.mxu0
    %v1548 = vadd.f32 %v1528, %v1547
    %1549 = vdwg.mxu0
    %1550 = vmatpush.msra.mxu0 %v1427
    %1551 = vmatpush.msra.mxu0 %v1423
    %1552 = vmatpush.msra.mxu0 %v1419
    %1553 = vmatpush.msra.mxu0 %v1415
    %1554 = vmatpush.msra.mxu0 %v1411
    %1555 = vmatpush.msra.mxu0 %v1407
    %1556 = vmatpush.msra.mxu0 %v1403
    %1557 = vmatpush.msra.mxu0 %v1399
    %1558 = vmatpush.msra.mxu0 %v1395
    %1559 = vmatpush.msra.mxu0 %v1391
    %1560 = vmatpush.msra.mxu0 %v1387
    %1561 = vmatpush.msra.mxu0 %v1383
    %1562 = vmatpush.msra.mxu0 %v1379
    %1563 = vmatpush.msra.mxu0 %v1375
    %1564 = vmatpush.msra.mxu0 %v1371
    %1565 = vmatpush.msra.mxu0 %v1367
    %1566 = vmatmul.f32.gmra.mxu0 %v1506
    %v1567 = vpop.f32.mrf.mxu0
    %v1568 = vadd.f32 %v1497, %v1567
    %1569 = vdwg.mxu0
    %1570 = vmatpush.msra.mxu0 %v1491
    %1571 = vmatpush.msra.mxu0 %v1487
    %1572 = vmatpush.msra.mxu0 %v1483
    %1573 = vmatpush.msra.mxu0 %v1479
    %1574 = vmatpush.msra.mxu0 %v1475
    %1575 = vmatpush.msra.mxu0 %v1471
    %1576 = vmatpush.msra.mxu0 %v1467
    %1577 = vmatpush.msra.mxu0 %v1463
    %1578 = vmatpush.msra.mxu0 %v1459
    %1579 = vmatpush.msra.mxu0 %v1455
    %1580 = vmatpush.msra.mxu0 %v1451
    %1581 = vmatpush.msra.mxu0 %v1447
    %1582 = vmatpush.msra.mxu0 %v1443
    %1583 = vmatpush.msra.mxu0 %v1439
    %1584 = vmatpush.msra.mxu0 %v1435
    %1585 = vmatpush.msra.mxu0 %v1431
    %1586 = vmatmul.f32.gmra.mxu0 %v1507
    %v1587 = vpop.f32.mrf.mxu0
    %v1588 = vadd.f32 %v1568, %v1587
    %1589 = vdwg.mxu0
    %1590 = vmatpush.msra.mxu0 %v1428
    %1591 = vmatpush.msra.mxu0 %v1424
    %1592 = vmatpush.msra.mxu0 %v1420
    %1593 = vmatpush.msra.mxu0 %v1416
    %1594 = vmatpush.msra.mxu0 %v1412
    %1595 = vmatpush.msra.mxu0 %v1408
    %1596 = vmatpush.msra.mxu0 %v1404
    %1597 = vmatpush.msra.mxu0 %v1400
    %1598 = vmatpush.msra.mxu0 %v1396
    %1599 = vmatpush.msra.mxu0 %v1392
    %1600 = vmatpush.msra.mxu0 %v1388
    %1601 = vmatpush.msra.mxu0 %v1384
    %1602 = vmatpush.msra.mxu0 %v1380
    %1603 = vmatpush.msra.mxu0 %v1376
    %1604 = vmatpush.msra.mxu0 %v1372
    %1605 = vmatpush.msra.mxu0 %v1368
    %1606 = vmatmul.f32.gmra.mxu0 %v1506
    %v1607 = vpop.f32.mrf.mxu0
    %v1608 = vadd.f32 %v1498, %v1607
    %1609 = vdwg.mxu0
    %1610 = vmatpush.msra.mxu0 %v1492
    %1611 = vmatpush.msra.mxu0 %v1488
    %1612 = vmatpush.msra.mxu0 %v1484
    %1613 = vmatpush.msra.mxu0 %v1480
    %1614 = vmatpush.msra.mxu0 %v1476
    %1615 = vmatpush.msra.mxu0 %v1472
    %1616 = vmatpush.msra.mxu0 %v1468
    %1617 = vmatpush.msra.mxu0 %v1464
    %1618 = vmatpush.msra.mxu0 %v1460
    %1619 = vmatpush.msra.mxu0 %v1456
    %1620 = vmatpush.msra.mxu0 %v1452
    %1621 = vmatpush.msra.mxu0 %v1448
    %1622 = vmatpush.msra.mxu0 %v1444
    %1623 = vmatpush.msra.mxu0 %v1440
    %1624 = vmatpush.msra.mxu0 %v1436
    %1625 = vmatpush.msra.mxu0 %v1432
    %1626 = vmatmul.f32.gmra.mxu0 %v1507
    %v1627 = vpop.f32.mrf.mxu0
    %v1628 = vadd.f32 %v1608, %v1627
    %1629 = vdwg.mxu0
    %1630 = vmatpush.msra.mxu0 %v1429
    %1631 = vmatpush.msra.mxu0 %v1425
    %1632 = vmatpush.msra.mxu0 %v1421
    %1633 = vmatpush.msra.mxu0 %v1417
    %1634 = vmatpush.msra.mxu0 %v1413
    %1635 = vmatpush.msra.mxu0 %v1409
    %1636 = vmatpush.msra.mxu0 %v1405
    %1637 = vmatpush.msra.mxu0 %v1401
    %1638 = vmatpush.msra.mxu0 %v1397
    %1639 = vmatpush.msra.mxu0 %v1393
    %1640 = vmatpush.msra.mxu0 %v1389
    %1641 = vmatpush.msra.mxu0 %v1385
    %1642 = vmatpush.msra.mxu0 %v1381
    %1643 = vmatpush.msra.mxu0 %v1377
    %1644 = vmatpush.msra.mxu0 %v1373
    %1645 = vmatpush.msra.mxu0 %v1369
    %1646 = vmatmul.f32.gmra.mxu0 %v1506
    %v1647 = vpop.f32.mrf.mxu0
    %v1648 = vadd.f32 %v1499, %v1647
    %1649 = vdwg.mxu0
    %1650 = vmatpush.msra.mxu0 %v1493
    %1651 = vmatpush.msra.mxu0 %v1489
    %1652 = vmatpush.msra.mxu0 %v1485
    %1653 = vmatpush.msra.mxu0 %v1481
    %1654 = vmatpush.msra.mxu0 %v1477
    %1655 = vmatpush.msra.mxu0 %v1473
    %1656 = vmatpush.msra.mxu0 %v1469
    %1657 = vmatpush.msra.mxu0 %v1465
    %1658 = vmatpush.msra.mxu0 %v1461
    %1659 = vmatpush.msra.mxu0 %v1457
    %1660 = vmatpush.msra.mxu0 %v1453
    %1661 = vmatpush.msra.mxu0 %v1449
    %1662 = vmatpush.msra.mxu0 %v1445
    %1663 = vmatpush.msra.mxu0 %v1441
    %1664 = vmatpush.msra.mxu0 %v1437
    %1665 = vmatpush.msra.mxu0 %v1433
    %1666 = vmatmul.f32.gmra.mxu0 %v1507
    %v1667 = vpop.f32.mrf.mxu0
    %v1668 = vadd.f32 %v1648, %v1667
    %1669 = vdwg.mxu0
    %v1670 = vxor.u32 %v1548, 2147483648
    %v1671 = vmul.f32 %v1670, 1.442695
    %v1672 = vpow.pop %v1671
    %v1673 = vadd.f32 %v1672, 1.0
    %v1674 = vrcp.pop %v1673
    %v1675 = vmul.f32 %v1673, %v1674
    %v1676 = vsub.f32 1.0, %v1675
    %v1677 = vmul.f32 %v1674, %v1676
    %v1678 = vadd.f32 %v1674, %v1677
    %vm1679 = vweird.f32 %v1673
    %vm1680 = vweird.f32 %v1674
    %vm1681 = vmor %vm1679, %vm1680
    %v1682 = vsel %vm1681, %v1674, %v1678
    %v1683 = vand.u32 2147483647, %v1673
    %vm1684 = vcmp.eq.f32.partialorder %v1683, 8.507059e+37
    %v1685 = vand.u32 %v1673, 2147483648
    %v1686 = vor.u32 1.1754944e-38, %v1685
    %v1687 = vsel %vm1684, %v1686, %v1682
    %v1688 = vmul.f32 1.0, %v1687
    %v1689 = vtanh.pop %v1548
    %v1690 = vmul.f32 %v1688, %v1204
    %1692 = vrot.lane.b32.xlu0 %v1689, 64
    %v1693 = vpop.permute.xlu0 %1692
    %v1695 = vmul.f32 %v1688, %v1693
    %1697 = vrot.lane.b32.xlu0 %v1695, 32
    %v1698 = vpop.permute.xlu0 %1697
    %v1700 = vadd.f32 %v1690, %v1698
    %v1701 = vtanh.pop %v1700
    %1703 = vrot.lane.b32.xlu0 %v1701, 64
    %v1704 = vpop.permute.xlu0 %1703
    %v1706 = vmul.f32 %v1688, %v1704
    %1708 = vrot.lane.b32.xlu0 %v1706, 64
    %v1709 = vpop.permute.xlu0 %1708
    %1711 = vst.msk [vmem:[#allocation2] sm:$0x3] %vm210, %v1709
    %1712 = vrot.lane.b32.xlu0 %v1706, 96
    %v1713 = vpop.permute.xlu0 %1712
    %1715 = vst.msk [vmem:[#allocation2] sm:$0x3] %vm215, %v1713
    %v1716 = vxor.u32 %v1588, 2147483648
    %v1717 = vmul.f32 %v1716, 1.442695
    %v1718 = vpow.pop %v1717
    %v1719 = vadd.f32 %v1718, 1.0
    %v1720 = vrcp.pop %v1719
    %v1721 = vmul.f32 %v1719, %v1720
    %v1722 = vsub.f32 1.0, %v1721
    %v1723 = vmul.f32 %v1720, %v1722
    %v1724 = vadd.f32 %v1720, %v1723
    %vm1725 = vweird.f32 %v1719
    %vm1726 = vweird.f32 %v1720
    %vm1727 = vmor %vm1725, %vm1726
    %v1728 = vsel %vm1727, %v1720, %v1724
    %v1729 = vand.u32 2147483647, %v1719
    %vm1730 = vcmp.eq.f32.partialorder %v1729, 8.507059e+37
    %v1731 = vand.u32 %v1719, 2147483648
    %v1732 = vor.u32 1.1754944e-38, %v1731
    %v1733 = vsel %vm1730, %v1732, %v1728
    %v1734 = vmul.f32 1.0, %v1733
    %v1735 = vtanh.pop %v1588
    %v1736 = vmul.f32 %v1734, %v1250
    %1738 = vrot.lane.b32.xlu0 %v1735, 64
    %v1739 = vpop.permute.xlu0 %1738
    %v1741 = vmul.f32 %v1734, %v1739
    %1743 = vrot.lane.b32.xlu0 %v1741, 32
    %v1744 = vpop.permute.xlu0 %1743
    %v1746 = vadd.f32 %v1736, %v1744
    %v1747 = vtanh.pop %v1746
    %1749 = vrot.lane.b32.xlu0 %v1747, 64
    %v1750 = vpop.permute.xlu0 %1749
    %v1752 = vmul.f32 %v1734, %v1750
    %1753 = vst.msk [vmem:[#allocation2] sm:$0x3] %vm470, %v1752
    %1755 = vrot.lane.b32.xlu0 %v1752, 32
    %v1756 = vpop.permute.xlu0 %1755
    %1758 = vst.msk [vmem:[#allocation2 + $0x2] sm:$0x3] %vm84, %v1756
    %v1759 = vxor.u32 %v1628, 2147483648
    %v1760 = vmul.f32 %v1759, 1.442695
    %v1761 = vpow.pop %v1760
    %v1762 = vadd.f32 %v1761, 1.0
    %v1763 = vrcp.pop %v1762
    %v1764 = vmul.f32 %v1762, %v1763
    %v1765 = vsub.f32 1.0, %v1764
    %v1766 = vmul.f32 %v1763, %v1765
    %v1767 = vadd.f32 %v1763, %v1766
    %vm1768 = vweird.f32 %v1762
    %vm1769 = vweird.f32 %v1763
    %vm1770 = vmor %vm1768, %vm1769
    %v1771 = vsel %vm1770, %v1763, %v1767
    %v1772 = vand.u32 2147483647, %v1762
    %vm1773 = vcmp.eq.f32.partialorder %v1772, 8.507059e+37
    %v1774 = vand.u32 %v1762, 2147483648
    %v1775 = vor.u32 1.1754944e-38, %v1774
    %v1776 = vsel %vm1773, %v1775, %v1771
    %v1777 = vmul.f32 1.0, %v1776
    %v1778 = vtanh.pop %v1628
    %v1779 = vmul.f32 %v1777, %v1293
    %1781 = vrot.lane.b32.xlu0 %v1778, 64
    %v1782 = vpop.permute.xlu0 %1781
    %v1784 = vmul.f32 %v1777, %v1782
    %1786 = vrot.lane.b32.xlu0 %v1784, 32
    %v1787 = vpop.permute.xlu0 %1786
    %v1789 = vadd.f32 %v1779, %v1787
    %v1790 = vtanh.pop %v1789
    %1792 = vrot.lane.b32.xlu0 %v1790, 64
    %v1793 = vpop.permute.xlu0 %1792
    %v1795 = vmul.f32 %v1777, %v1793
    %1797 = vrot.lane.b32.xlu0 %v1795, 64
    %v1798 = vpop.permute.xlu0 %1797
    %1800 = vst.msk [vmem:[#allocation2 + $0x2] sm:$0x3] %vm210, %v1798
    %1801 = vrot.lane.b32.xlu0 %v1795, 96
    %v1802 = vpop.permute.xlu0 %1801
    %1804 = vst.msk [vmem:[#allocation2 + $0x2] sm:$0x3] %vm215, %v1802
    %v1805 = vxor.u32 %v1668, 2147483648
    %v1806 = vmul.f32 %v1805, 1.442695
    %v1807 = vpow.pop %v1806
    %v1808 = vadd.f32 %v1807, 1.0
    %v1809 = vrcp.pop %v1808
    %v1810 = vmul.f32 %v1808, %v1809
    %v1811 = vsub.f32 1.0, %v1810
    %v1812 = vmul.f32 %v1809, %v1811
    %v1813 = vadd.f32 %v1809, %v1812
    %vm1814 = vweird.f32 %v1808
    %vm1815 = vweird.f32 %v1809
    %vm1816 = vmor %vm1814, %vm1815
    %v1817 = vsel %vm1816, %v1809, %v1813
    %v1818 = vand.u32 2147483647, %v1808
    %vm1819 = vcmp.eq.f32.partialorder %v1818, 8.507059e+37
    %v1820 = vand.u32 %v1808, 2147483648
    %v1821 = vor.u32 1.1754944e-38, %v1820
    %v1822 = vsel %vm1819, %v1821, %v1817
    %v1823 = vmul.f32 1.0, %v1822
    %v1824 = vtanh.pop %v1668
    %v1825 = vmul.f32 %v1823, %v1339
    %1827 = vrot.lane.b32.xlu0 %v1824, 64
    %v1828 = vpop.permute.xlu0 %1827
    %v1830 = vmul.f32 %v1823, %v1828
    %1832 = vrot.lane.b32.xlu0 %v1830, 32
    %v1833 = vpop.permute.xlu0 %1832
    %v1835 = vadd.f32 %v1825, %v1833
    %v1836 = vtanh.pop %v1835
    %1838 = vrot.lane.b32.xlu0 %v1836, 64
    %v1839 = vpop.permute.xlu0 %1838
    %v1841 = vmul.f32 %v1823, %v1839
    %1842 = vst.msk [vmem:[#allocation2 + $0x2] sm:$0x3] %vm470, %v1841
    %1844 = vrot.lane.b32.xlu0 %v1841, 64
    %v1845 = vpop.permute.xlu0 %1844
    %1847 = vst.msk [vmem:[#allocation3] sm:$0x3] %vm210, %v1845
    %v1848 = vld [vmem:[%s0 + $0x5] sm:$0x1]
    %v1849 = vld [vmem:[%s0 + $0xd] sm:$0x1]
    %v1852 = vsel %vm70, %v1848, %v1848
    %v1853 = vsel %vm72, %v1848, %v1852
    %v1854 = vrot.slane %v1849, 7
    %v1855 = vsel %vm75, %v1854, %v1853
    %v1856 = vsel %vm77, %v1854, %v1855
    %v1857 = vsel %vm79, %v1854, %v1856
    %v1858 = vsel %vm81, %v1854, %v1857
    %1860 = vst.msk [vmem:[#allocation2] sm:$0x3] %vm84, %v1858
    %v1861 = vld [vmem:[#allocation2] sm:$0xf]
    %v1862 = vld [vmem:[#allocation4] sm:$0xff]
    %v1863 = vld [vmem:[#allocation4 + $0x8] sm:$0xff]
    %v1864 = vld [vmem:[#allocation4 + $0x10] sm:$0xff]
    %v1865 = vld [vmem:[#allocation4 + $0x18] sm:$0xff]
    %v1866 = vld [vmem:[#allocation4 + $0x20] sm:$0xff]
    %v1867 = vld [vmem:[#allocation4 + $0x28] sm:$0xff]
    %v1868 = vld [vmem:[#allocation4 + $0x30] sm:$0xff]
    %v1869 = vld [vmem:[#allocation4 + $0x38] sm:$0xff]
    %v1870 = vld [vmem:[#allocation4 + $0x40] sm:$0xff]
    %v1871 = vld [vmem:[#allocation4 + $0x48] sm:$0xff]
    %v1872 = vld [vmem:[#allocation4 + $0x50] sm:$0xff]
    %v1873 = vld [vmem:[#allocation4 + $0x58] sm:$0xff]
    %v1874 = vld [vmem:[#allocation4 + $0x60] sm:$0xff]
    %v1875 = vld [vmem:[#allocation4 + $0x68] sm:$0xff]
    %v1876 = vld [vmem:[#allocation4 + $0x70] sm:$0xff]
    %v1877 = vld [vmem:[#allocation4 + $0x78] sm:$0xff]
    %v1878 = vld [vmem:[#allocation4 + $0x80] sm:$0xff]
    %v1879 = vld [vmem:[#allocation4 + $0x88] sm:$0xff]
    %v1880 = vld [vmem:[#allocation4 + $0x90] sm:$0xff]
    %v1881 = vld [vmem:[#allocation4 + $0x98] sm:$0xff]
    %v1882 = vld [vmem:[#allocation4 + $0xa0] sm:$0xff]
    %v1883 = vld [vmem:[#allocation4 + $0xa8] sm:$0xff]
    %v1884 = vld [vmem:[#allocation4 + $0xb0] sm:$0xff]
    %v1885 = vld [vmem:[#allocation4 + $0xb8] sm:$0xff]
    %v1886 = vld [vmem:[#allocation4 + $0xc0] sm:$0xff]
    %v1887 = vld [vmem:[#allocation4 + $0xc8] sm:$0xff]
    %v1888 = vld [vmem:[#allocation4 + $0xd0] sm:$0xff]
    %v1889 = vld [vmem:[#allocation4 + $0xd8] sm:$0xff]
    %v1890 = vld [vmem:[#allocation4 + $0xe0] sm:$0xff]
    %v1891 = vld [vmem:[#allocation4 + $0xe8] sm:$0xff]
    %v1892 = vld [vmem:[#allocation4 + $0xf0] sm:$0xff]
    %v1893 = vld [vmem:[#allocation4 + $0xf8] sm:$0xff]
    %v1894 = vld [vmem:[#allocation4 + $0x100] sm:$0xff]
    %v1895 = vld [vmem:[#allocation4 + $0x108] sm:$0xff]
    %v1896 = vld [vmem:[#allocation4 + $0x110] sm:$0xff]
    %v1897 = vld [vmem:[#allocation4 + $0x118] sm:$0xff]
    %v1898 = vld [vmem:[#allocation4 + $0x120] sm:$0xff]
    %v1899 = vld [vmem:[#allocation4 + $0x128] sm:$0xff]
    %v1900 = vld [vmem:[#allocation4 + $0x130] sm:$0xff]
    %v1901 = vld [vmem:[#allocation4 + $0x138] sm:$0xff]
    %v1902 = vld [vmem:[#allocation4 + $0x140] sm:$0xff]
    %v1903 = vld [vmem:[#allocation4 + $0x148] sm:$0xff]
    %v1904 = vld [vmem:[#allocation4 + $0x150] sm:$0xff]
    %v1905 = vld [vmem:[#allocation4 + $0x158] sm:$0xff]
    %v1906 = vld [vmem:[#allocation4 + $0x160] sm:$0xff]
    %v1907 = vld [vmem:[#allocation4 + $0x168] sm:$0xff]
    %v1908 = vld [vmem:[#allocation4 + $0x170] sm:$0xff]
    %v1909 = vld [vmem:[#allocation4 + $0x178] sm:$0xff]
    %v1910 = vld [vmem:[#allocation4 + $0x180] sm:$0xff]
    %v1911 = vld [vmem:[#allocation4 + $0x188] sm:$0xff]
    %v1912 = vld [vmem:[#allocation4 + $0x190] sm:$0xff]
    %v1913 = vld [vmem:[#allocation4 + $0x198] sm:$0xff]
    %v1914 = vld [vmem:[#allocation4 + $0x1a0] sm:$0xff]
    %v1915 = vld [vmem:[#allocation4 + $0x1a8] sm:$0xff]
    %v1916 = vld [vmem:[#allocation4 + $0x1b0] sm:$0xff]
    %v1917 = vld [vmem:[#allocation4 + $0x1b8] sm:$0xff]
    %v1918 = vld [vmem:[#allocation4 + $0x1c0] sm:$0xff]
    %v1919 = vld [vmem:[#allocation4 + $0x1c8] sm:$0xff]
    %v1920 = vld [vmem:[#allocation4 + $0x1d0] sm:$0xff]
    %v1921 = vld [vmem:[#allocation4 + $0x1d8] sm:$0xff]
    %v1922 = vld [vmem:[#allocation4 + $0x1e0] sm:$0xff]
    %v1923 = vld [vmem:[#allocation4 + $0x1e8] sm:$0xff]
    %v1924 = vld [vmem:[#allocation4 + $0x1f0] sm:$0xff]
    %v1925 = vld [vmem:[#allocation4 + $0x1f8] sm:$0xff]
    %v1926 = vld [vmem:[#allocation4 + $0x200] sm:$0xff]
    %v1927 = vld [vmem:[#allocation4 + $0x208] sm:$0xff]
    %v1928 = vld [vmem:[#allocation4 + $0x210] sm:$0xff]
    %v1929 = vld [vmem:[#allocation4 + $0x218] sm:$0xff]
    %v1930 = vld [vmem:[#allocation4 + $0x220] sm:$0xff]
    %v1931 = vld [vmem:[#allocation4 + $0x228] sm:$0xff]
    %v1932 = vld [vmem:[#allocation4 + $0x230] sm:$0xff]
    %v1933 = vld [vmem:[#allocation4 + $0x238] sm:$0xff]
    %v1934 = vld [vmem:[#allocation4 + $0x240] sm:$0xff]
    %v1935 = vld [vmem:[#allocation4 + $0x248] sm:$0xff]
    %v1936 = vld [vmem:[#allocation4 + $0x250] sm:$0xff]
    %v1937 = vld [vmem:[#allocation4 + $0x258] sm:$0xff]
    %v1938 = vld [vmem:[#allocation4 + $0x260] sm:$0xff]
    %v1939 = vld [vmem:[#allocation4 + $0x268] sm:$0xff]
    %v1940 = vld [vmem:[#allocation4 + $0x270] sm:$0xff]
    %v1941 = vld [vmem:[#allocation4 + $0x278] sm:$0xff]
    %v1942 = vld [vmem:[#allocation4 + $0x280] sm:$0xff]
    %v1943 = vld [vmem:[#allocation4 + $0x288] sm:$0xff]
    %v1944 = vld [vmem:[#allocation4 + $0x290] sm:$0xff]
    %v1945 = vld [vmem:[#allocation4 + $0x298] sm:$0xff]
    %v1946 = vld [vmem:[#allocation4 + $0x2a0] sm:$0xff]
    %v1947 = vld [vmem:[#allocation4 + $0x2a8] sm:$0xff]
    %v1948 = vld [vmem:[#allocation4 + $0x2b0] sm:$0xff]
    %v1949 = vld [vmem:[#allocation4 + $0x2b8] sm:$0xff]
    %v1950 = vld [vmem:[#allocation4 + $0x2c0] sm:$0xff]
    %v1951 = vld [vmem:[#allocation4 + $0x2c8] sm:$0xff]
    %v1952 = vld [vmem:[#allocation4 + $0x2d0] sm:$0xff]
    %v1953 = vld [vmem:[#allocation4 + $0x2d8] sm:$0xff]
    %v1954 = vld [vmem:[#allocation4 + $0x2e0] sm:$0xff]
    %v1955 = vld [vmem:[#allocation4 + $0x2e8] sm:$0xff]
    %v1956 = vld [vmem:[#allocation4 + $0x2f0] sm:$0xff]
    %v1957 = vld [vmem:[#allocation4 + $0x2f8] sm:$0xff]
    %v1958 = vld [vmem:[#allocation4 + $0x300] sm:$0xff]
    %v1959 = vld [vmem:[#allocation4 + $0x308] sm:$0xff]
    %v1960 = vld [vmem:[#allocation4 + $0x310] sm:$0xff]
    %v1961 = vld [vmem:[#allocation4 + $0x318] sm:$0xff]
    %v1962 = vld [vmem:[#allocation4 + $0x320] sm:$0xff]
    %v1963 = vld [vmem:[#allocation4 + $0x328] sm:$0xff]
    %v1964 = vld [vmem:[#allocation4 + $0x330] sm:$0xff]
    %v1965 = vld [vmem:[#allocation4 + $0x338] sm:$0xff]
    %v1966 = vld [vmem:[#allocation4 + $0x340] sm:$0xff]
    %v1967 = vld [vmem:[#allocation4 + $0x348] sm:$0xff]
    %v1968 = vld [vmem:[#allocation4 + $0x350] sm:$0xff]
    %v1969 = vld [vmem:[#allocation4 + $0x358] sm:$0xff]
    %v1970 = vld [vmem:[#allocation4 + $0x360] sm:$0xff]
    %v1971 = vld [vmem:[#allocation4 + $0x368] sm:$0xff]
    %v1972 = vld [vmem:[#allocation4 + $0x370] sm:$0xff]
    %v1973 = vld [vmem:[#allocation4 + $0x378] sm:$0xff]
    %v1974 = vld [vmem:[#allocation4 + $0x380] sm:$0xff]
    %v1975 = vld [vmem:[#allocation4 + $0x388] sm:$0xff]
    %v1976 = vld [vmem:[#allocation4 + $0x390] sm:$0xff]
    %v1977 = vld [vmem:[#allocation4 + $0x398] sm:$0xff]
    %v1978 = vld [vmem:[#allocation4 + $0x3a0] sm:$0xff]
    %v1979 = vld [vmem:[#allocation4 + $0x3a8] sm:$0xff]
    %v1980 = vld [vmem:[#allocation4 + $0x3b0] sm:$0xff]
    %v1981 = vld [vmem:[#allocation4 + $0x3b8] sm:$0xff]
    %v1982 = vld [vmem:[#allocation4 + $0x3c0] sm:$0xff]
    %v1983 = vld [vmem:[#allocation4 + $0x3c8] sm:$0xff]
    %v1984 = vld [vmem:[#allocation4 + $0x3d0] sm:$0xff]
    %v1985 = vld [vmem:[#allocation4 + $0x3d8] sm:$0xff]
    %v1986 = vld [vmem:[#allocation4 + $0x3e0] sm:$0xff]
    %v1987 = vld [vmem:[#allocation4 + $0x3e8] sm:$0xff]
    %v1988 = vld [vmem:[#allocation4 + $0x3f0] sm:$0xff]
    %v1989 = vld [vmem:[#allocation4 + $0x3f8] sm:$0xff]
    %v1990 = vld [vmem:[%s2] sm:$0xf]
    %v1992 = vperm.slane %v1990, 0
    %v1993 = vperm.slane %v1990, 1
    %v1994 = vperm.slane %v1990, 2
    %v1995 = vperm.slane %v1990, 3
    %2001 = vst [vmem:[#allocation1] ss:$4 sm:$0xff] %v1861
    %v2002 = vld.sshfl [vmem:[#allocation1] sm:$0xff pattern:$0x73625140]
    %v2003 = vld.sshfl [vmem:[#allocation1 + $0x8] sm:$0xff pattern:$0x73625140]
    %2006 = vmatpush.msra.mxu0 %v1922
    %2007 = vmatpush.msra.mxu0 %v1918
    %2008 = vmatpush.msra.mxu0 %v1914
    %2009 = vmatpush.msra.mxu0 %v1910
    %2010 = vmatpush.msra.mxu0 %v1906
    %2011 = vmatpush.msra.mxu0 %v1902
    %2012 = vmatpush.msra.mxu0 %v1898
    %2013 = vmatpush.msra.mxu0 %v1894
    %2014 = vmatpush.msra.mxu0 %v1890
    %2015 = vmatpush.msra.mxu0 %v1886
    %2016 = vmatpush.msra.mxu0 %v1882
    %2017 = vmatpush.msra.mxu0 %v1878
    %2018 = vmatpush.msra.mxu0 %v1874
    %2019 = vmatpush.msra.mxu0 %v1870
    %2020 = vmatpush.msra.mxu0 %v1866
    %2021 = vmatpush.msra.mxu0 %v1862
    %2022 = vmatmul.f32.gmra.mxu0 %v2002
    %v2023 = vpop.f32.mrf.mxu0
    %v2024 = vadd.f32 %v1992, %v2023
    %2025 = vdwg.mxu0
    %2026 = vmatpush.msra.mxu0 %v1986
    %2027 = vmatpush.msra.mxu0 %v1982
    %2028 = vmatpush.msra.mxu0 %v1978
    %2029 = vmatpush.msra.mxu0 %v1974
    %2030 = vmatpush.msra.mxu0 %v1970
    %2031 = vmatpush.msra.mxu0 %v1966
    %2032 = vmatpush.msra.mxu0 %v1962
    %2033 = vmatpush.msra.mxu0 %v1958
    %2034 = vmatpush.msra.mxu0 %v1954
    %2035 = vmatpush.msra.mxu0 %v1950
    %2036 = vmatpush.msra.mxu0 %v1946
    %2037 = vmatpush.msra.mxu0 %v1942
    %2038 = vmatpush.msra.mxu0 %v1938
    %2039 = vmatpush.msra.mxu0 %v1934
    %2040 = vmatpush.msra.mxu0 %v1930
    %2041 = vmatpush.msra.mxu0 %v1926
    %2042 = vmatmul.f32.gmra.mxu0 %v2003
    %v2043 = vpop.f32.mrf.mxu0
    %v2044 = vadd.f32 %v2024, %v2043
    %2045 = vdwg.mxu0
    %2046 = vmatpush.msra.mxu0 %v1923
    %2047 = vmatpush.msra.mxu0 %v1919
    %2048 = vmatpush.msra.mxu0 %v1915
    %2049 = vmatpush.msra.mxu0 %v1911
    %2050 = vmatpush.msra.mxu0 %v1907
    %2051 = vmatpush.msra.mxu0 %v1903
    %2052 = vmatpush.msra.mxu0 %v1899
    %2053 = vmatpush.msra.mxu0 %v1895
    %2054 = vmatpush.msra.mxu0 %v1891
    %2055 = vmatpush.msra.mxu0 %v1887
    %2056 = vmatpush.msra.mxu0 %v1883
    %2057 = vmatpush.msra.mxu0 %v1879
    %2058 = vmatpush.msra.mxu0 %v1875
    %2059 = vmatpush.msra.mxu0 %v1871
    %2060 = vmatpush.msra.mxu0 %v1867
    %2061 = vmatpush.msra.mxu0 %v1863
    %2062 = vmatmul.f32.gmra.mxu0 %v2002
    %v2063 = vpop.f32.mrf.mxu0
    %v2064 = vadd.f32 %v1993, %v2063
    %2065 = vdwg.mxu0
    %2066 = vmatpush.msra.mxu0 %v1987
    %2067 = vmatpush.msra.mxu0 %v1983
    %2068 = vmatpush.msra.mxu0 %v1979
    %2069 = vmatpush.msra.mxu0 %v1975
    %2070 = vmatpush.msra.mxu0 %v1971
    %2071 = vmatpush.msra.mxu0 %v1967
    %2072 = vmatpush.msra.mxu0 %v1963
    %2073 = vmatpush.msra.mxu0 %v1959
    %2074 = vmatpush.msra.mxu0 %v1955
    %2075 = vmatpush.msra.mxu0 %v1951
    %2076 = vmatpush.msra.mxu0 %v1947
    %2077 = vmatpush.msra.mxu0 %v1943
    %2078 = vmatpush.msra.mxu0 %v1939
    %2079 = vmatpush.msra.mxu0 %v1935
    %2080 = vmatpush.msra.mxu0 %v1931
    %2081 = vmatpush.msra.mxu0 %v1927
    %2082 = vmatmul.f32.gmra.mxu0 %v2003
    %v2083 = vpop.f32.mrf.mxu0
    %v2084 = vadd.f32 %v2064, %v2083
    %2085 = vdwg.mxu0
    %2086 = vmatpush.msra.mxu0 %v1924
    %2087 = vmatpush.msra.mxu0 %v1920
    %2088 = vmatpush.msra.mxu0 %v1916
    %2089 = vmatpush.msra.mxu0 %v1912
    %2090 = vmatpush.msra.mxu0 %v1908
    %2091 = vmatpush.msra.mxu0 %v1904
    %2092 = vmatpush.msra.mxu0 %v1900
    %2093 = vmatpush.msra.mxu0 %v1896
    %2094 = vmatpush.msra.mxu0 %v1892
    %2095 = vmatpush.msra.mxu0 %v1888
    %2096 = vmatpush.msra.mxu0 %v1884
    %2097 = vmatpush.msra.mxu0 %v1880
    %2098 = vmatpush.msra.mxu0 %v1876
    %2099 = vmatpush.msra.mxu0 %v1872
    %2100 = vmatpush.msra.mxu0 %v1868
    %2101 = vmatpush.msra.mxu0 %v1864
    %2102 = vmatmul.f32.gmra.mxu0 %v2002
    %v2103 = vpop.f32.mrf.mxu0
    %v2104 = vadd.f32 %v1994, %v2103
    %2105 = vdwg.mxu0
    %2106 = vmatpush.msra.mxu0 %v1988
    %2107 = vmatpush.msra.mxu0 %v1984
    %2108 = vmatpush.msra.mxu0 %v1980
    %2109 = vmatpush.msra.mxu0 %v1976
    %2110 = vmatpush.msra.mxu0 %v1972
    %2111 = vmatpush.msra.mxu0 %v1968
    %2112 = vmatpush.msra.mxu0 %v1964
    %2113 = vmatpush.msra.mxu0 %v1960
    %2114 = vmatpush.msra.mxu0 %v1956
    %2115 = vmatpush.msra.mxu0 %v1952
    %2116 = vmatpush.msra.mxu0 %v1948
    %2117 = vmatpush.msra.mxu0 %v1944
    %2118 = vmatpush.msra.mxu0 %v1940
    %2119 = vmatpush.msra.mxu0 %v1936
    %2120 = vmatpush.msra.mxu0 %v1932
    %2121 = vmatpush.msra.mxu0 %v1928
    %2122 = vmatmul.f32.gmra.mxu0 %v2003
    %v2123 = vpop.f32.mrf.mxu0
    %v2124 = vadd.f32 %v2104, %v2123
    %2125 = vdwg.mxu0
    %2126 = vmatpush.msra.mxu0 %v1925
    %2127 = vmatpush.msra.mxu0 %v1921
    %2128 = vmatpush.msra.mxu0 %v1917
    %2129 = vmatpush.msra.mxu0 %v1913
    %2130 = vmatpush.msra.mxu0 %v1909
    %2131 = vmatpush.msra.mxu0 %v1905
    %2132 = vmatpush.msra.mxu0 %v1901
    %2133 = vmatpush.msra.mxu0 %v1897
    %2134 = vmatpush.msra.mxu0 %v1893
    %2135 = vmatpush.msra.mxu0 %v1889
    %2136 = vmatpush.msra.mxu0 %v1885
    %2137 = vmatpush.msra.mxu0 %v1881
    %2138 = vmatpush.msra.mxu0 %v1877
    %2139 = vmatpush.msra.mxu0 %v1873
    %2140 = vmatpush.msra.mxu0 %v1869
    %2141 = vmatpush.msra.mxu0 %v1865
    %2142 = vmatmul.f32.gmra.mxu0 %v2002
    %v2143 = vpop.f32.mrf.mxu0
    %v2144 = vadd.f32 %v1995, %v2143
    %2145 = vdwg.mxu0
    %2146 = vmatpush.msra.mxu0 %v1989
    %2147 = vmatpush.msra.mxu0 %v1985
    %2148 = vmatpush.msra.mxu0 %v1981
    %2149 = vmatpush.msra.mxu0 %v1977
    %2150 = vmatpush.msra.mxu0 %v1973
    %2151 = vmatpush.msra.mxu0 %v1969
    %2152 = vmatpush.msra.mxu0 %v1965
    %2153 = vmatpush.msra.mxu0 %v1961
    %2154 = vmatpush.msra.mxu0 %v1957
    %2155 = vmatpush.msra.mxu0 %v1953
    %2156 = vmatpush.msra.mxu0 %v1949
    %2157 = vmatpush.msra.mxu0 %v1945
    %2158 = vmatpush.msra.mxu0 %v1941
    %2159 = vmatpush.msra.mxu0 %v1937
    %2160 = vmatpush.msra.mxu0 %v1933
    %2161 = vmatpush.msra.mxu0 %v1929
    %2162 = vmatmul.f32.gmra.mxu0 %v2003
    %v2163 = vpop.f32.mrf.mxu0
    %v2164 = vadd.f32 %v2144, %v2163
    %2165 = vdwg.mxu0
    %v2166 = vxor.u32 %v2044, 2147483648
    %v2167 = vmul.f32 %v2166, 1.442695
    %v2168 = vpow.pop %v2167
    %v2169 = vadd.f32 %v2168, 1.0
    %v2170 = vrcp.pop %v2169
    %v2171 = vmul.f32 %v2169, %v2170
    %v2172 = vsub.f32 1.0, %v2171
    %v2173 = vmul.f32 %v2170, %v2172
    %v2174 = vadd.f32 %v2170, %v2173
    %vm2175 = vweird.f32 %v2169
    %vm2176 = vweird.f32 %v2170
    %vm2177 = vmor %vm2175, %vm2176
    %v2178 = vsel %vm2177, %v2170, %v2174
    %v2179 = vand.u32 2147483647, %v2169
    %vm2180 = vcmp.eq.f32.partialorder %v2179, 8.507059e+37
    %v2181 = vand.u32 %v2169, 2147483648
    %v2182 = vor.u32 1.1754944e-38, %v2181
    %v2183 = vsel %vm2180, %v2182, %v2178
    %v2184 = vmul.f32 1.0, %v2183
    %v2185 = vtanh.pop %v2044
    %v2186 = vmul.f32 %v2184, %v1700
    %2188 = vrot.lane.b32.xlu0 %v2185, 64
    %v2189 = vpop.permute.xlu0 %2188
    %v2191 = vmul.f32 %v2184, %v2189
    %2193 = vrot.lane.b32.xlu0 %v2191, 32
    %v2194 = vpop.permute.xlu0 %2193
    %v2196 = vadd.f32 %v2186, %v2194
    %v2197 = vtanh.pop %v2196
    %2199 = vrot.lane.b32.xlu0 %v2197, 64
    %v2200 = vpop.permute.xlu0 %2199
    %v2202 = vmul.f32 %v2184, %v2200
    %2204 = vrot.lane.b32.xlu0 %v2202, 64
    %v2205 = vpop.permute.xlu0 %2204
    %2207 = vst.msk [vmem:[#allocation2] sm:$0x3] %vm210, %v2205
    %2208 = vrot.lane.b32.xlu0 %v2202, 96
    %v2209 = vpop.permute.xlu0 %2208
    %2211 = vst.msk [vmem:[#allocation2] sm:$0x3] %vm215, %v2209
    %v2212 = vxor.u32 %v2084, 2147483648
    %v2213 = vmul.f32 %v2212, 1.442695
    %v2214 = vpow.pop %v2213
    %v2215 = vadd.f32 %v2214, 1.0
    %v2216 = vrcp.pop %v2215
    %v2217 = vmul.f32 %v2215, %v2216
    %v2218 = vsub.f32 1.0, %v2217
    %v2219 = vmul.f32 %v2216, %v2218
    %v2220 = vadd.f32 %v2216, %v2219
    %vm2221 = vweird.f32 %v2215
    %vm2222 = vweird.f32 %v2216
    %vm2223 = vmor %vm2221, %vm2222
    %v2224 = vsel %vm2223, %v2216, %v2220
    %v2225 = vand.u32 2147483647, %v2215
    %vm2226 = vcmp.eq.f32.partialorder %v2225, 8.507059e+37
    %v2227 = vand.u32 %v2215, 2147483648
    %v2228 = vor.u32 1.1754944e-38, %v2227
    %v2229 = vsel %vm2226, %v2228, %v2224
    %v2230 = vmul.f32 1.0, %v2229
    %v2231 = vtanh.pop %v2084
    %v2232 = vmul.f32 %v2230, %v1746
    %2234 = vrot.lane.b32.xlu0 %v2231, 64
    %v2235 = vpop.permute.xlu0 %2234
    %v2237 = vmul.f32 %v2230, %v2235
    %2239 = vrot.lane.b32.xlu0 %v2237, 32
    %v2240 = vpop.permute.xlu0 %2239
    %v2242 = vadd.f32 %v2232, %v2240
    %v2243 = vtanh.pop %v2242
    %2245 = vrot.lane.b32.xlu0 %v2243, 64
    %v2246 = vpop.permute.xlu0 %2245
    %v2248 = vmul.f32 %v2230, %v2246
    %2249 = vst.msk [vmem:[#allocation2] sm:$0x3] %vm470, %v2248
    %2251 = vrot.lane.b32.xlu0 %v2248, 32
    %v2252 = vpop.permute.xlu0 %2251
    %2254 = vst.msk [vmem:[#allocation2 + $0x2] sm:$0x3] %vm84, %v2252
    %v2255 = vxor.u32 %v2124, 2147483648
    %v2256 = vmul.f32 %v2255, 1.442695
    %v2257 = vpow.pop %v2256
    %v2258 = vadd.f32 %v2257, 1.0
    %v2259 = vrcp.pop %v2258
    %v2260 = vmul.f32 %v2258, %v2259
    %v2261 = vsub.f32 1.0, %v2260
    %v2262 = vmul.f32 %v2259, %v2261
    %v2263 = vadd.f32 %v2259, %v2262
    %vm2264 = vweird.f32 %v2258
    %vm2265 = vweird.f32 %v2259
    %vm2266 = vmor %vm2264, %vm2265
    %v2267 = vsel %vm2266, %v2259, %v2263
    %v2268 = vand.u32 2147483647, %v2258
    %vm2269 = vcmp.eq.f32.partialorder %v2268, 8.507059e+37
    %v2270 = vand.u32 %v2258, 2147483648
    %v2271 = vor.u32 1.1754944e-38, %v2270
    %v2272 = vsel %vm2269, %v2271, %v2267
    %v2273 = vmul.f32 1.0, %v2272
    %v2274 = vtanh.pop %v2124
    %v2275 = vmul.f32 %v2273, %v1789
    %2277 = vrot.lane.b32.xlu0 %v2274, 64
    %v2278 = vpop.permute.xlu0 %2277
    %v2280 = vmul.f32 %v2273, %v2278
    %2282 = vrot.lane.b32.xlu0 %v2280, 32
    %v2283 = vpop.permute.xlu0 %2282
    %v2285 = vadd.f32 %v2275, %v2283
    %v2286 = vtanh.pop %v2285
    %2288 = vrot.lane.b32.xlu0 %v2286, 64
    %v2289 = vpop.permute.xlu0 %2288
    %v2291 = vmul.f32 %v2273, %v2289
    %2293 = vrot.lane.b32.xlu0 %v2291, 64
    %v2294 = vpop.permute.xlu0 %2293
    %2296 = vst.msk [vmem:[#allocation2 + $0x2] sm:$0x3] %vm210, %v2294
    %2297 = vrot.lane.b32.xlu0 %v2291, 96
    %v2298 = vpop.permute.xlu0 %2297
    %2300 = vst.msk [vmem:[#allocation2 + $0x2] sm:$0x3] %vm215, %v2298
    %v2301 = vxor.u32 %v2164, 2147483648
    %v2302 = vmul.f32 %v2301, 1.442695
    %v2303 = vpow.pop %v2302
    %v2304 = vadd.f32 %v2303, 1.0
    %v2305 = vrcp.pop %v2304
    %v2306 = vmul.f32 %v2304, %v2305
    %v2307 = vsub.f32 1.0, %v2306
    %v2308 = vmul.f32 %v2305, %v2307
    %v2309 = vadd.f32 %v2305, %v2308
    %vm2310 = vweird.f32 %v2304
    %vm2311 = vweird.f32 %v2305
    %vm2312 = vmor %vm2310, %vm2311
    %v2313 = vsel %vm2312, %v2305, %v2309
    %v2314 = vand.u32 2147483647, %v2304
    %vm2315 = vcmp.eq.f32.partialorder %v2314, 8.507059e+37
    %v2316 = vand.u32 %v2304, 2147483648
    %v2317 = vor.u32 1.1754944e-38, %v2316
    %v2318 = vsel %vm2315, %v2317, %v2313
    %v2319 = vmul.f32 1.0, %v2318
    %v2320 = vtanh.pop %v2164
    %v2321 = vmul.f32 %v2319, %v1835
    %2323 = vrot.lane.b32.xlu0 %v2320, 64
    %v2324 = vpop.permute.xlu0 %2323
    %v2326 = vmul.f32 %v2319, %v2324
    %2328 = vrot.lane.b32.xlu0 %v2326, 32
    %v2329 = vpop.permute.xlu0 %2328
    %v2331 = vadd.f32 %v2321, %v2329
    %v2332 = vtanh.pop %v2331
    %2334 = vrot.lane.b32.xlu0 %v2332, 64
    %v2335 = vpop.permute.xlu0 %2334
    %v2337 = vmul.f32 %v2319, %v2335
    %2338 = vst.msk [vmem:[#allocation2 + $0x2] sm:$0x3] %vm470, %v2337
    %2340 = vrot.lane.b32.xlu0 %v2337, 96
    %v2341 = vpop.permute.xlu0 %2340
    %2343 = vst.msk [vmem:[#allocation3] sm:$0x3] %vm215, %v2341
    %v2344 = vld [vmem:[%s0 + $0x6] sm:$0x1]
    %v2345 = vld [vmem:[%s0 + $0xe] sm:$0x1]
    %v2348 = vsel %vm70, %v2344, %v2344
    %v2349 = vsel %vm72, %v2344, %v2348
    %v2350 = vrot.slane %v2345, 7
    %v2351 = vsel %vm75, %v2350, %v2349
    %v2352 = vsel %vm77, %v2350, %v2351
    %v2353 = vsel %vm79, %v2350, %v2352
    %v2354 = vsel %vm81, %v2350, %v2353
    %2356 = vst.msk [vmem:[#allocation2] sm:$0x3] %vm84, %v2354
    %v2357 = vld [vmem:[#allocation2] sm:$0xf]
    %v2358 = vld [vmem:[#allocation4] sm:$0xff]
    %v2359 = vld [vmem:[#allocation4 + $0x8] sm:$0xff]
    %v2360 = vld [vmem:[#allocation4 + $0x10] sm:$0xff]
    %v2361 = vld [vmem:[#allocation4 + $0x18] sm:$0xff]
    %v2362 = vld [vmem:[#allocation4 + $0x20] sm:$0xff]
    %v2363 = vld [vmem:[#allocation4 + $0x28] sm:$0xff]
    %v2364 = vld [vmem:[#allocation4 + $0x30] sm:$0xff]
    %v2365 = vld [vmem:[#allocation4 + $0x38] sm:$0xff]
    %v2366 = vld [vmem:[#allocation4 + $0x40] sm:$0xff]
    %v2367 = vld [vmem:[#allocation4 + $0x48] sm:$0xff]
    %v2368 = vld [vmem:[#allocation4 + $0x50] sm:$0xff]
    %v2369 = vld [vmem:[#allocation4 + $0x58] sm:$0xff]
    %v2370 = vld [vmem:[#allocation4 + $0x60] sm:$0xff]
    %v2371 = vld [vmem:[#allocation4 + $0x68] sm:$0xff]
    %v2372 = vld [vmem:[#allocation4 + $0x70] sm:$0xff]
    %v2373 = vld [vmem:[#allocation4 + $0x78] sm:$0xff]
    %v2374 = vld [vmem:[#allocation4 + $0x80] sm:$0xff]
    %v2375 = vld [vmem:[#allocation4 + $0x88] sm:$0xff]
    %v2376 = vld [vmem:[#allocation4 + $0x90] sm:$0xff]
    %v2377 = vld [vmem:[#allocation4 + $0x98] sm:$0xff]
    %v2378 = vld [vmem:[#allocation4 + $0xa0] sm:$0xff]
    %v2379 = vld [vmem:[#allocation4 + $0xa8] sm:$0xff]
    %v2380 = vld [vmem:[#allocation4 + $0xb0] sm:$0xff]
    %v2381 = vld [vmem:[#allocation4 + $0xb8] sm:$0xff]
    %v2382 = vld [vmem:[#allocation4 + $0xc0] sm:$0xff]
    %v2383 = vld [vmem:[#allocation4 + $0xc8] sm:$0xff]
    %v2384 = vld [vmem:[#allocation4 + $0xd0] sm:$0xff]
    %v2385 = vld [vmem:[#allocation4 + $0xd8] sm:$0xff]
    %v2386 = vld [vmem:[#allocation4 + $0xe0] sm:$0xff]
    %v2387 = vld [vmem:[#allocation4 + $0xe8] sm:$0xff]
    %v2388 = vld [vmem:[#allocation4 + $0xf0] sm:$0xff]
    %v2389 = vld [vmem:[#allocation4 + $0xf8] sm:$0xff]
    %v2390 = vld [vmem:[#allocation4 + $0x100] sm:$0xff]
    %v2391 = vld [vmem:[#allocation4 + $0x108] sm:$0xff]
    %v2392 = vld [vmem:[#allocation4 + $0x110] sm:$0xff]
    %v2393 = vld [vmem:[#allocation4 + $0x118] sm:$0xff]
    %v2394 = vld [vmem:[#allocation4 + $0x120] sm:$0xff]
    %v2395 = vld [vmem:[#allocation4 + $0x128] sm:$0xff]
    %v2396 = vld [vmem:[#allocation4 + $0x130] sm:$0xff]
    %v2397 = vld [vmem:[#allocation4 + $0x138] sm:$0xff]
    %v2398 = vld [vmem:[#allocation4 + $0x140] sm:$0xff]
    %v2399 = vld [vmem:[#allocation4 + $0x148] sm:$0xff]
    %v2400 = vld [vmem:[#allocation4 + $0x150] sm:$0xff]
    %v2401 = vld [vmem:[#allocation4 + $0x158] sm:$0xff]
    %v2402 = vld [vmem:[#allocation4 + $0x160] sm:$0xff]
    %v2403 = vld [vmem:[#allocation4 + $0x168] sm:$0xff]
    %v2404 = vld [vmem:[#allocation4 + $0x170] sm:$0xff]
    %v2405 = vld [vmem:[#allocation4 + $0x178] sm:$0xff]
    %v2406 = vld [vmem:[#allocation4 + $0x180] sm:$0xff]
    %v2407 = vld [vmem:[#allocation4 + $0x188] sm:$0xff]
    %v2408 = vld [vmem:[#allocation4 + $0x190] sm:$0xff]
    %v2409 = vld [vmem:[#allocation4 + $0x198] sm:$0xff]
    %v2410 = vld [vmem:[#allocation4 + $0x1a0] sm:$0xff]
    %v2411 = vld [vmem:[#allocation4 + $0x1a8] sm:$0xff]
    %v2412 = vld [vmem:[#allocation4 + $0x1b0] sm:$0xff]
    %v2413 = vld [vmem:[#allocation4 + $0x1b8] sm:$0xff]
    %v2414 = vld [vmem:[#allocation4 + $0x1c0] sm:$0xff]
    %v2415 = vld [vmem:[#allocation4 + $0x1c8] sm:$0xff]
    %v2416 = vld [vmem:[#allocation4 + $0x1d0] sm:$0xff]
    %v2417 = vld [vmem:[#allocation4 + $0x1d8] sm:$0xff]
    %v2418 = vld [vmem:[#allocation4 + $0x1e0] sm:$0xff]
    %v2419 = vld [vmem:[#allocation4 + $0x1e8] sm:$0xff]
    %v2420 = vld [vmem:[#allocation4 + $0x1f0] sm:$0xff]
    %v2421 = vld [vmem:[#allocation4 + $0x1f8] sm:$0xff]
    %v2422 = vld [vmem:[#allocation4 + $0x200] sm:$0xff]
    %v2423 = vld [vmem:[#allocation4 + $0x208] sm:$0xff]
    %v2424 = vld [vmem:[#allocation4 + $0x210] sm:$0xff]
    %v2425 = vld [vmem:[#allocation4 + $0x218] sm:$0xff]
    %v2426 = vld [vmem:[#allocation4 + $0x220] sm:$0xff]
    %v2427 = vld [vmem:[#allocation4 + $0x228] sm:$0xff]
    %v2428 = vld [vmem:[#allocation4 + $0x230] sm:$0xff]
    %v2429 = vld [vmem:[#allocation4 + $0x238] sm:$0xff]
    %v2430 = vld [vmem:[#allocation4 + $0x240] sm:$0xff]
    %v2431 = vld [vmem:[#allocation4 + $0x248] sm:$0xff]
    %v2432 = vld [vmem:[#allocation4 + $0x250] sm:$0xff]
    %v2433 = vld [vmem:[#allocation4 + $0x258] sm:$0xff]
    %v2434 = vld [vmem:[#allocation4 + $0x260] sm:$0xff]
    %v2435 = vld [vmem:[#allocation4 + $0x268] sm:$0xff]
    %v2436 = vld [vmem:[#allocation4 + $0x270] sm:$0xff]
    %v2437 = vld [vmem:[#allocation4 + $0x278] sm:$0xff]
    %v2438 = vld [vmem:[#allocation4 + $0x280] sm:$0xff]
    %v2439 = vld [vmem:[#allocation4 + $0x288] sm:$0xff]
    %v2440 = vld [vmem:[#allocation4 + $0x290] sm:$0xff]
    %v2441 = vld [vmem:[#allocation4 + $0x298] sm:$0xff]
    %v2442 = vld [vmem:[#allocation4 + $0x2a0] sm:$0xff]
    %v2443 = vld [vmem:[#allocation4 + $0x2a8] sm:$0xff]
    %v2444 = vld [vmem:[#allocation4 + $0x2b0] sm:$0xff]
    %v2445 = vld [vmem:[#allocation4 + $0x2b8] sm:$0xff]
    %v2446 = vld [vmem:[#allocation4 + $0x2c0] sm:$0xff]
    %v2447 = vld [vmem:[#allocation4 + $0x2c8] sm:$0xff]
    %v2448 = vld [vmem:[#allocation4 + $0x2d0] sm:$0xff]
    %v2449 = vld [vmem:[#allocation4 + $0x2d8] sm:$0xff]
    %v2450 = vld [vmem:[#allocation4 + $0x2e0] sm:$0xff]
    %v2451 = vld [vmem:[#allocation4 + $0x2e8] sm:$0xff]
    %v2452 = vld [vmem:[#allocation4 + $0x2f0] sm:$0xff]
    %v2453 = vld [vmem:[#allocation4 + $0x2f8] sm:$0xff]
    %v2454 = vld [vmem:[#allocation4 + $0x300] sm:$0xff]
    %v2455 = vld [vmem:[#allocation4 + $0x308] sm:$0xff]
    %v2456 = vld [vmem:[#allocation4 + $0x310] sm:$0xff]
    %v2457 = vld [vmem:[#allocation4 + $0x318] sm:$0xff]
    %v2458 = vld [vmem:[#allocation4 + $0x320] sm:$0xff]
    %v2459 = vld [vmem:[#allocation4 + $0x328] sm:$0xff]
    %v2460 = vld [vmem:[#allocation4 + $0x330] sm:$0xff]
    %v2461 = vld [vmem:[#allocation4 + $0x338] sm:$0xff]
    %v2462 = vld [vmem:[#allocation4 + $0x340] sm:$0xff]
    %v2463 = vld [vmem:[#allocation4 + $0x348] sm:$0xff]
    %v2464 = vld [vmem:[#allocation4 + $0x350] sm:$0xff]
    %v2465 = vld [vmem:[#allocation4 + $0x358] sm:$0xff]
    %v2466 = vld [vmem:[#allocation4 + $0x360] sm:$0xff]
    %v2467 = vld [vmem:[#allocation4 + $0x368] sm:$0xff]
    %v2468 = vld [vmem:[#allocation4 + $0x370] sm:$0xff]
    %v2469 = vld [vmem:[#allocation4 + $0x378] sm:$0xff]
    %v2470 = vld [vmem:[#allocation4 + $0x380] sm:$0xff]
    %v2471 = vld [vmem:[#allocation4 + $0x388] sm:$0xff]
    %v2472 = vld [vmem:[#allocation4 + $0x390] sm:$0xff]
    %v2473 = vld [vmem:[#allocation4 + $0x398] sm:$0xff]
    %v2474 = vld [vmem:[#allocation4 + $0x3a0] sm:$0xff]
    %v2475 = vld [vmem:[#allocation4 + $0x3a8] sm:$0xff]
    %v2476 = vld [vmem:[#allocation4 + $0x3b0] sm:$0xff]
    %v2477 = vld [vmem:[#allocation4 + $0x3b8] sm:$0xff]
    %v2478 = vld [vmem:[#allocation4 + $0x3c0] sm:$0xff]
    %v2479 = vld [vmem:[#allocation4 + $0x3c8] sm:$0xff]
    %v2480 = vld [vmem:[#allocation4 + $0x3d0] sm:$0xff]
    %v2481 = vld [vmem:[#allocation4 + $0x3d8] sm:$0xff]
    %v2482 = vld [vmem:[#allocation4 + $0x3e0] sm:$0xff]
    %v2483 = vld [vmem:[#allocation4 + $0x3e8] sm:$0xff]
    %v2484 = vld [vmem:[#allocation4 + $0x3f0] sm:$0xff]
    %v2485 = vld [vmem:[#allocation4 + $0x3f8] sm:$0xff]
    %v2486 = vld [vmem:[%s2] sm:$0xf]
    %v2488 = vperm.slane %v2486, 0
    %v2489 = vperm.slane %v2486, 1
    %v2490 = vperm.slane %v2486, 2
    %v2491 = vperm.slane %v2486, 3
    %2497 = vst [vmem:[#allocation1] ss:$4 sm:$0xff] %v2357
    %v2498 = vld.sshfl [vmem:[#allocation1] sm:$0xff pattern:$0x73625140]
    %v2499 = vld.sshfl [vmem:[#allocation1 + $0x8] sm:$0xff pattern:$0x73625140]
    %2502 = vmatpush.msra.mxu0 %v2418
    %2503 = vmatpush.msra.mxu0 %v2414
    %2504 = vmatpush.msra.mxu0 %v2410
    %2505 = vmatpush.msra.mxu0 %v2406
    %2506 = vmatpush.msra.mxu0 %v2402
    %2507 = vmatpush.msra.mxu0 %v2398
    %2508 = vmatpush.msra.mxu0 %v2394
    %2509 = vmatpush.msra.mxu0 %v2390
    %2510 = vmatpush.msra.mxu0 %v2386
    %2511 = vmatpush.msra.mxu0 %v2382
    %2512 = vmatpush.msra.mxu0 %v2378
    %2513 = vmatpush.msra.mxu0 %v2374
    %2514 = vmatpush.msra.mxu0 %v2370
    %2515 = vmatpush.msra.mxu0 %v2366
    %2516 = vmatpush.msra.mxu0 %v2362
    %2517 = vmatpush.msra.mxu0 %v2358
    %2518 = vmatmul.f32.gmra.mxu0 %v2498
    %v2519 = vpop.f32.mrf.mxu0
    %v2520 = vadd.f32 %v2488, %v2519
    %2521 = vdwg.mxu0
    %2522 = vmatpush.msra.mxu0 %v2482
    %2523 = vmatpush.msra.mxu0 %v2478
    %2524 = vmatpush.msra.mxu0 %v2474
    %2525 = vmatpush.msra.mxu0 %v2470
    %2526 = vmatpush.msra.mxu0 %v2466
    %2527 = vmatpush.msra.mxu0 %v2462
    %2528 = vmatpush.msra.mxu0 %v2458
    %2529 = vmatpush.msra.mxu0 %v2454
    %2530 = vmatpush.msra.mxu0 %v2450
    %2531 = vmatpush.msra.mxu0 %v2446
    %2532 = vmatpush.msra.mxu0 %v2442
    %2533 = vmatpush.msra.mxu0 %v2438
    %2534 = vmatpush.msra.mxu0 %v2434
    %2535 = vmatpush.msra.mxu0 %v2430
    %2536 = vmatpush.msra.mxu0 %v2426
    %2537 = vmatpush.msra.mxu0 %v2422
    %2538 = vmatmul.f32.gmra.mxu0 %v2499
    %v2539 = vpop.f32.mrf.mxu0
    %v2540 = vadd.f32 %v2520, %v2539
    %2541 = vdwg.mxu0
    %2542 = vmatpush.msra.mxu0 %v2419
    %2543 = vmatpush.msra.mxu0 %v2415
    %2544 = vmatpush.msra.mxu0 %v2411
    %2545 = vmatpush.msra.mxu0 %v2407
    %2546 = vmatpush.msra.mxu0 %v2403
    %2547 = vmatpush.msra.mxu0 %v2399
    %2548 = vmatpush.msra.mxu0 %v2395
    %2549 = vmatpush.msra.mxu0 %v2391
    %2550 = vmatpush.msra.mxu0 %v2387
    %2551 = vmatpush.msra.mxu0 %v2383
    %2552 = vmatpush.msra.mxu0 %v2379
    %2553 = vmatpush.msra.mxu0 %v2375
    %2554 = vmatpush.msra.mxu0 %v2371
    %2555 = vmatpush.msra.mxu0 %v2367
    %2556 = vmatpush.msra.mxu0 %v2363
    %2557 = vmatpush.msra.mxu0 %v2359
    %2558 = vmatmul.f32.gmra.mxu0 %v2498
    %v2559 = vpop.f32.mrf.mxu0
    %v2560 = vadd.f32 %v2489, %v2559
    %2561 = vdwg.mxu0
    %2562 = vmatpush.msra.mxu0 %v2483
    %2563 = vmatpush.msra.mxu0 %v2479
    %2564 = vmatpush.msra.mxu0 %v2475
    %2565 = vmatpush.msra.mxu0 %v2471
    %2566 = vmatpush.msra.mxu0 %v2467
    %2567 = vmatpush.msra.mxu0 %v2463
    %2568 = vmatpush.msra.mxu0 %v2459
    %2569 = vmatpush.msra.mxu0 %v2455
    %2570 = vmatpush.msra.mxu0 %v2451
    %2571 = vmatpush.msra.mxu0 %v2447
    %2572 = vmatpush.msra.mxu0 %v2443
    %2573 = vmatpush.msra.mxu0 %v2439
    %2574 = vmatpush.msra.mxu0 %v2435
    %2575 = vmatpush.msra.mxu0 %v2431
    %2576 = vmatpush.msra.mxu0 %v2427
    %2577 = vmatpush.msra.mxu0 %v2423
    %2578 = vmatmul.f32.gmra.mxu0 %v2499
    %v2579 = vpop.f32.mrf.mxu0
    %v2580 = vadd.f32 %v2560, %v2579
    %2581 = vdwg.mxu0
    %2582 = vmatpush.msra.mxu0 %v2420
    %2583 = vmatpush.msra.mxu0 %v2416
    %2584 = vmatpush.msra.mxu0 %v2412
    %2585 = vmatpush.msra.mxu0 %v2408
    %2586 = vmatpush.msra.mxu0 %v2404
    %2587 = vmatpush.msra.mxu0 %v2400
    %2588 = vmatpush.msra.mxu0 %v2396
    %2589 = vmatpush.msra.mxu0 %v2392
    %2590 = vmatpush.msra.mxu0 %v2388
    %2591 = vmatpush.msra.mxu0 %v2384
    %2592 = vmatpush.msra.mxu0 %v2380
    %2593 = vmatpush.msra.mxu0 %v2376
    %2594 = vmatpush.msra.mxu0 %v2372
    %2595 = vmatpush.msra.mxu0 %v2368
    %2596 = vmatpush.msra.mxu0 %v2364
    %2597 = vmatpush.msra.mxu0 %v2360
    %2598 = vmatmul.f32.gmra.mxu0 %v2498
    %v2599 = vpop.f32.mrf.mxu0
    %v2600 = vadd.f32 %v2490, %v2599
    %2601 = vdwg.mxu0
    %2602 = vmatpush.msra.mxu0 %v2484
    %2603 = vmatpush.msra.mxu0 %v2480
    %2604 = vmatpush.msra.mxu0 %v2476
    %2605 = vmatpush.msra.mxu0 %v2472
    %2606 = vmatpush.msra.mxu0 %v2468
    %2607 = vmatpush.msra.mxu0 %v2464
    %2608 = vmatpush.msra.mxu0 %v2460
    %2609 = vmatpush.msra.mxu0 %v2456
    %2610 = vmatpush.msra.mxu0 %v2452
    %2611 = vmatpush.msra.mxu0 %v2448
    %2612 = vmatpush.msra.mxu0 %v2444
    %2613 = vmatpush.msra.mxu0 %v2440
    %2614 = vmatpush.msra.mxu0 %v2436
    %2615 = vmatpush.msra.mxu0 %v2432
    %2616 = vmatpush.msra.mxu0 %v2428
    %2617 = vmatpush.msra.mxu0 %v2424
    %2618 = vmatmul.f32.gmra.mxu0 %v2499
    %v2619 = vpop.f32.mrf.mxu0
    %v2620 = vadd.f32 %v2600, %v2619
    %2621 = vdwg.mxu0
    %2622 = vmatpush.msra.mxu0 %v2421
    %2623 = vmatpush.msra.mxu0 %v2417
    %2624 = vmatpush.msra.mxu0 %v2413
    %2625 = vmatpush.msra.mxu0 %v2409
    %2626 = vmatpush.msra.mxu0 %v2405
    %2627 = vmatpush.msra.mxu0 %v2401
    %2628 = vmatpush.msra.mxu0 %v2397
    %2629 = vmatpush.msra.mxu0 %v2393
    %2630 = vmatpush.msra.mxu0 %v2389
    %2631 = vmatpush.msra.mxu0 %v2385
    %2632 = vmatpush.msra.mxu0 %v2381
    %2633 = vmatpush.msra.mxu0 %v2377
    %2634 = vmatpush.msra.mxu0 %v2373
    %2635 = vmatpush.msra.mxu0 %v2369
    %2636 = vmatpush.msra.mxu0 %v2365
    %2637 = vmatpush.msra.mxu0 %v2361
    %2638 = vmatmul.f32.gmra.mxu0 %v2498
    %v2639 = vpop.f32.mrf.mxu0
    %v2640 = vadd.f32 %v2491, %v2639
    %2641 = vdwg.mxu0
    %2642 = vmatpush.msra.mxu0 %v2485
    %2643 = vmatpush.msra.mxu0 %v2481
    %2644 = vmatpush.msra.mxu0 %v2477
    %2645 = vmatpush.msra.mxu0 %v2473
    %2646 = vmatpush.msra.mxu0 %v2469
    %2647 = vmatpush.msra.mxu0 %v2465
    %2648 = vmatpush.msra.mxu0 %v2461
    %2649 = vmatpush.msra.mxu0 %v2457
    %2650 = vmatpush.msra.mxu0 %v2453
    %2651 = vmatpush.msra.mxu0 %v2449
    %2652 = vmatpush.msra.mxu0 %v2445
    %2653 = vmatpush.msra.mxu0 %v2441
    %2654 = vmatpush.msra.mxu0 %v2437
    %2655 = vmatpush.msra.mxu0 %v2433
    %2656 = vmatpush.msra.mxu0 %v2429
    %2657 = vmatpush.msra.mxu0 %v2425
    %2658 = vmatmul.f32.gmra.mxu0 %v2499
    %v2659 = vpop.f32.mrf.mxu0
    %v2660 = vadd.f32 %v2640, %v2659
    %2661 = vdwg.mxu0
    %v2662 = vxor.u32 %v2540, 2147483648
    %v2663 = vmul.f32 %v2662, 1.442695
    %v2664 = vpow.pop %v2663
    %v2665 = vadd.f32 %v2664, 1.0
    %v2666 = vrcp.pop %v2665
    %v2667 = vmul.f32 %v2665, %v2666
    %v2668 = vsub.f32 1.0, %v2667
    %v2669 = vmul.f32 %v2666, %v2668
    %v2670 = vadd.f32 %v2666, %v2669
    %vm2671 = vweird.f32 %v2665
    %vm2672 = vweird.f32 %v2666
    %vm2673 = vmor %vm2671, %vm2672
    %v2674 = vsel %vm2673, %v2666, %v2670
    %v2675 = vand.u32 2147483647, %v2665
    %vm2676 = vcmp.eq.f32.partialorder %v2675, 8.507059e+37
    %v2677 = vand.u32 %v2665, 2147483648
    %v2678 = vor.u32 1.1754944e-38, %v2677
    %v2679 = vsel %vm2676, %v2678, %v2674
    %v2680 = vmul.f32 1.0, %v2679
    %v2681 = vtanh.pop %v2540
    %v2682 = vmul.f32 %v2680, %v2196
    %2684 = vrot.lane.b32.xlu0 %v2681, 64
    %v2685 = vpop.permute.xlu0 %2684
    %v2687 = vmul.f32 %v2680, %v2685
    %2689 = vrot.lane.b32.xlu0 %v2687, 32
    %v2690 = vpop.permute.xlu0 %2689
    %v2692 = vadd.f32 %v2682, %v2690
    %v2693 = vtanh.pop %v2692
    %2695 = vrot.lane.b32.xlu0 %v2693, 64
    %v2696 = vpop.permute.xlu0 %2695
    %v2698 = vmul.f32 %v2680, %v2696
    %2700 = vrot.lane.b32.xlu0 %v2698, 64
    %v2701 = vpop.permute.xlu0 %2700
    %2703 = vst.msk [vmem:[#allocation2] sm:$0x3] %vm210, %v2701
    %2704 = vrot.lane.b32.xlu0 %v2698, 96
    %v2705 = vpop.permute.xlu0 %2704
    %2707 = vst.msk [vmem:[#allocation2] sm:$0x3] %vm215, %v2705
    %v2708 = vxor.u32 %v2580, 2147483648
    %v2709 = vmul.f32 %v2708, 1.442695
    %v2710 = vpow.pop %v2709
    %v2711 = vadd.f32 %v2710, 1.0
    %v2712 = vrcp.pop %v2711
    %v2713 = vmul.f32 %v2711, %v2712
    %v2714 = vsub.f32 1.0, %v2713
    %v2715 = vmul.f32 %v2712, %v2714
    %v2716 = vadd.f32 %v2712, %v2715
    %vm2717 = vweird.f32 %v2711
    %vm2718 = vweird.f32 %v2712
    %vm2719 = vmor %vm2717, %vm2718
    %v2720 = vsel %vm2719, %v2712, %v2716
    %v2721 = vand.u32 2147483647, %v2711
    %vm2722 = vcmp.eq.f32.partialorder %v2721, 8.507059e+37
    %v2723 = vand.u32 %v2711, 2147483648
    %v2724 = vor.u32 1.1754944e-38, %v2723
    %v2725 = vsel %vm2722, %v2724, %v2720
    %v2726 = vmul.f32 1.0, %v2725
    %v2727 = vtanh.pop %v2580
    %v2728 = vmul.f32 %v2726, %v2242
    %2730 = vrot.lane.b32.xlu0 %v2727, 64
    %v2731 = vpop.permute.xlu0 %2730
    %v2733 = vmul.f32 %v2726, %v2731
    %2735 = vrot.lane.b32.xlu0 %v2733, 32
    %v2736 = vpop.permute.xlu0 %2735
    %v2738 = vadd.f32 %v2728, %v2736
    %v2739 = vtanh.pop %v2738
    %2741 = vrot.lane.b32.xlu0 %v2739, 64
    %v2742 = vpop.permute.xlu0 %2741
    %v2744 = vmul.f32 %v2726, %v2742
    %2745 = vst.msk [vmem:[#allocation2] sm:$0x3] %vm470, %v2744
    %2747 = vrot.lane.b32.xlu0 %v2744, 32
    %v2748 = vpop.permute.xlu0 %2747
    %2750 = vst.msk [vmem:[#allocation2 + $0x2] sm:$0x3] %vm84, %v2748
    %v2751 = vxor.u32 %v2620, 2147483648
    %v2752 = vmul.f32 %v2751, 1.442695
    %v2753 = vpow.pop %v2752
    %v2754 = vadd.f32 %v2753, 1.0
    %v2755 = vrcp.pop %v2754
    %v2756 = vmul.f32 %v2754, %v2755
    %v2757 = vsub.f32 1.0, %v2756
    %v2758 = vmul.f32 %v2755, %v2757
    %v2759 = vadd.f32 %v2755, %v2758
    %vm2760 = vweird.f32 %v2754
    %vm2761 = vweird.f32 %v2755
    %vm2762 = vmor %vm2760, %vm2761
    %v2763 = vsel %vm2762, %v2755, %v2759
    %v2764 = vand.u32 2147483647, %v2754
    %vm2765 = vcmp.eq.f32.partialorder %v2764, 8.507059e+37
    %v2766 = vand.u32 %v2754, 2147483648
    %v2767 = vor.u32 1.1754944e-38, %v2766
    %v2768 = vsel %vm2765, %v2767, %v2763
    %v2769 = vmul.f32 1.0, %v2768
    %v2770 = vtanh.pop %v2620
    %v2771 = vmul.f32 %v2769, %v2285
    %2773 = vrot.lane.b32.xlu0 %v2770, 64
    %v2774 = vpop.permute.xlu0 %2773
    %v2776 = vmul.f32 %v2769, %v2774
    %2778 = vrot.lane.b32.xlu0 %v2776, 32
    %v2779 = vpop.permute.xlu0 %2778
    %v2781 = vadd.f32 %v2771, %v2779
    %v2782 = vtanh.pop %v2781
    %2784 = vrot.lane.b32.xlu0 %v2782, 64
    %v2785 = vpop.permute.xlu0 %2784
    %v2787 = vmul.f32 %v2769, %v2785
    %2789 = vrot.lane.b32.xlu0 %v2787, 64
    %v2790 = vpop.permute.xlu0 %2789
    %2792 = vst.msk [vmem:[#allocation2 + $0x2] sm:$0x3] %vm210, %v2790
    %2793 = vrot.lane.b32.xlu0 %v2787, 96
    %v2794 = vpop.permute.xlu0 %2793
    %2796 = vst.msk [vmem:[#allocation2 + $0x2] sm:$0x3] %vm215, %v2794
    %v2797 = vxor.u32 %v2660, 2147483648
    %v2798 = vmul.f32 %v2797, 1.442695
    %v2799 = vpow.pop %v2798
    %v2800 = vadd.f32 %v2799, 1.0
    %v2801 = vrcp.pop %v2800
    %v2802 = vmul.f32 %v2800, %v2801
    %v2803 = vsub.f32 1.0, %v2802
    %v2804 = vmul.f32 %v2801, %v2803
    %v2805 = vadd.f32 %v2801, %v2804
    %vm2806 = vweird.f32 %v2800
    %vm2807 = vweird.f32 %v2801
    %vm2808 = vmor %vm2806, %vm2807
    %v2809 = vsel %vm2808, %v2801, %v2805
    %v2810 = vand.u32 2147483647, %v2800
    %vm2811 = vcmp.eq.f32.partialorder %v2810, 8.507059e+37
    %v2812 = vand.u32 %v2800, 2147483648
    %v2813 = vor.u32 1.1754944e-38, %v2812
    %v2814 = vsel %vm2811, %v2813, %v2809
    %v2815 = vmul.f32 1.0, %v2814
    %v2816 = vtanh.pop %v2660
    %v2817 = vmul.f32 %v2815, %v2331
    %2819 = vrot.lane.b32.xlu0 %v2816, 64
    %v2820 = vpop.permute.xlu0 %2819
    %v2822 = vmul.f32 %v2815, %v2820
    %2824 = vrot.lane.b32.xlu0 %v2822, 32
    %v2825 = vpop.permute.xlu0 %2824
    %v2827 = vadd.f32 %v2817, %v2825
    %v2828 = vtanh.pop %v2827
    %2830 = vrot.lane.b32.xlu0 %v2828, 64
    %v2831 = vpop.permute.xlu0 %2830
    %v2833 = vmul.f32 %v2815, %v2831
    %2834 = vst.msk [vmem:[#allocation2 + $0x2] sm:$0x3] %vm470, %v2833
    %2835 = vst.msk [vmem:[#allocation3] sm:$0x3] %vm470, %v2833
    %v2836 = vld [vmem:[%s0 + $0x7] sm:$0x1]
    %v2837 = vld [vmem:[%s0 + $0xf] sm:$0x1]
    %v2840 = vsel %vm70, %v2836, %v2836
    %v2841 = vsel %vm72, %v2836, %v2840
    %v2842 = vrot.slane %v2837, 7
    %v2843 = vsel %vm75, %v2842, %v2841
    %v2844 = vsel %vm77, %v2842, %v2843
    %v2845 = vsel %vm79, %v2842, %v2844
    %v2846 = vsel %vm81, %v2842, %v2845
    %2848 = vst.msk [vmem:[#allocation2] sm:$0x3] %vm84, %v2846
    %v2849 = vld [vmem:[#allocation2] sm:$0xf]
    %v2850 = vld [vmem:[#allocation4] sm:$0xff]
    %v2851 = vld [vmem:[#allocation4 + $0x8] sm:$0xff]
    %v2852 = vld [vmem:[#allocation4 + $0x10] sm:$0xff]
    %v2853 = vld [vmem:[#allocation4 + $0x18] sm:$0xff]
    %v2854 = vld [vmem:[#allocation4 + $0x20] sm:$0xff]
    %v2855 = vld [vmem:[#allocation4 + $0x28] sm:$0xff]
    %v2856 = vld [vmem:[#allocation4 + $0x30] sm:$0xff]
    %v2857 = vld [vmem:[#allocation4 + $0x38] sm:$0xff]
    %v2858 = vld [vmem:[#allocation4 + $0x40] sm:$0xff]
    %v2859 = vld [vmem:[#allocation4 + $0x48] sm:$0xff]
    %v2860 = vld [vmem:[#allocation4 + $0x50] sm:$0xff]
    %v2861 = vld [vmem:[#allocation4 + $0x58] sm:$0xff]
    %v2862 = vld [vmem:[#allocation4 + $0x60] sm:$0xff]
    %v2863 = vld [vmem:[#allocation4 + $0x68] sm:$0xff]
    %v2864 = vld [vmem:[#allocation4 + $0x70] sm:$0xff]
    %v2865 = vld [vmem:[#allocation4 + $0x78] sm:$0xff]
    %v2866 = vld [vmem:[#allocation4 + $0x80] sm:$0xff]
    %v2867 = vld [vmem:[#allocation4 + $0x88] sm:$0xff]
    %v2868 = vld [vmem:[#allocation4 + $0x90] sm:$0xff]
    %v2869 = vld [vmem:[#allocation4 + $0x98] sm:$0xff]
    %v2870 = vld [vmem:[#allocation4 + $0xa0] sm:$0xff]
    %v2871 = vld [vmem:[#allocation4 + $0xa8] sm:$0xff]
    %v2872 = vld [vmem:[#allocation4 + $0xb0] sm:$0xff]
    %v2873 = vld [vmem:[#allocation4 + $0xb8] sm:$0xff]
    %v2874 = vld [vmem:[#allocation4 + $0xc0] sm:$0xff]
    %v2875 = vld [vmem:[#allocation4 + $0xc8] sm:$0xff]
    %v2876 = vld [vmem:[#allocation4 + $0xd0] sm:$0xff]
    %v2877 = vld [vmem:[#allocation4 + $0xd8] sm:$0xff]
    %v2878 = vld [vmem:[#allocation4 + $0xe0] sm:$0xff]
    %v2879 = vld [vmem:[#allocation4 + $0xe8] sm:$0xff]
    %v2880 = vld [vmem:[#allocation4 + $0xf0] sm:$0xff]
    %v2881 = vld [vmem:[#allocation4 + $0xf8] sm:$0xff]
    %v2882 = vld [vmem:[#allocation4 + $0x100] sm:$0xff]
    %v2883 = vld [vmem:[#allocation4 + $0x108] sm:$0xff]
    %v2884 = vld [vmem:[#allocation4 + $0x110] sm:$0xff]
    %v2885 = vld [vmem:[#allocation4 + $0x118] sm:$0xff]
    %v2886 = vld [vmem:[#allocation4 + $0x120] sm:$0xff]
    %v2887 = vld [vmem:[#allocation4 + $0x128] sm:$0xff]
    %v2888 = vld [vmem:[#allocation4 + $0x130] sm:$0xff]
    %v2889 = vld [vmem:[#allocation4 + $0x138] sm:$0xff]
    %v2890 = vld [vmem:[#allocation4 + $0x140] sm:$0xff]
    %v2891 = vld [vmem:[#allocation4 + $0x148] sm:$0xff]
    %v2892 = vld [vmem:[#allocation4 + $0x150] sm:$0xff]
    %v2893 = vld [vmem:[#allocation4 + $0x158] sm:$0xff]
    %v2894 = vld [vmem:[#allocation4 + $0x160] sm:$0xff]
    %v2895 = vld [vmem:[#allocation4 + $0x168] sm:$0xff]
    %v2896 = vld [vmem:[#allocation4 + $0x170] sm:$0xff]
    %v2897 = vld [vmem:[#allocation4 + $0x178] sm:$0xff]
    %v2898 = vld [vmem:[#allocation4 + $0x180] sm:$0xff]
    %v2899 = vld [vmem:[#allocation4 + $0x188] sm:$0xff]
    %v2900 = vld [vmem:[#allocation4 + $0x190] sm:$0xff]
    %v2901 = vld [vmem:[#allocation4 + $0x198] sm:$0xff]
    %v2902 = vld [vmem:[#allocation4 + $0x1a0] sm:$0xff]
    %v2903 = vld [vmem:[#allocation4 + $0x1a8] sm:$0xff]
    %v2904 = vld [vmem:[#allocation4 + $0x1b0] sm:$0xff]
    %v2905 = vld [vmem:[#allocation4 + $0x1b8] sm:$0xff]
    %v2906 = vld [vmem:[#allocation4 + $0x1c0] sm:$0xff]
    %v2907 = vld [vmem:[#allocation4 + $0x1c8] sm:$0xff]
    %v2908 = vld [vmem:[#allocation4 + $0x1d0] sm:$0xff]
    %v2909 = vld [vmem:[#allocation4 + $0x1d8] sm:$0xff]
    %v2910 = vld [vmem:[#allocation4 + $0x1e0] sm:$0xff]
    %v2911 = vld [vmem:[#allocation4 + $0x1e8] sm:$0xff]
    %v2912 = vld [vmem:[#allocation4 + $0x1f0] sm:$0xff]
    %v2913 = vld [vmem:[#allocation4 + $0x1f8] sm:$0xff]
    %v2914 = vld [vmem:[#allocation4 + $0x200] sm:$0xff]
    %v2915 = vld [vmem:[#allocation4 + $0x208] sm:$0xff]
    %v2916 = vld [vmem:[#allocation4 + $0x210] sm:$0xff]
    %v2917 = vld [vmem:[#allocation4 + $0x218] sm:$0xff]
    %v2918 = vld [vmem:[#allocation4 + $0x220] sm:$0xff]
    %v2919 = vld [vmem:[#allocation4 + $0x228] sm:$0xff]
    %v2920 = vld [vmem:[#allocation4 + $0x230] sm:$0xff]
    %v2921 = vld [vmem:[#allocation4 + $0x238] sm:$0xff]
    %v2922 = vld [vmem:[#allocation4 + $0x240] sm:$0xff]
    %v2923 = vld [vmem:[#allocation4 + $0x248] sm:$0xff]
    %v2924 = vld [vmem:[#allocation4 + $0x250] sm:$0xff]
    %v2925 = vld [vmem:[#allocation4 + $0x258] sm:$0xff]
    %v2926 = vld [vmem:[#allocation4 + $0x260] sm:$0xff]
    %v2927 = vld [vmem:[#allocation4 + $0x268] sm:$0xff]
    %v2928 = vld [vmem:[#allocation4 + $0x270] sm:$0xff]
    %v2929 = vld [vmem:[#allocation4 + $0x278] sm:$0xff]
    %v2930 = vld [vmem:[#allocation4 + $0x280] sm:$0xff]
    %v2931 = vld [vmem:[#allocation4 + $0x288] sm:$0xff]
    %v2932 = vld [vmem:[#allocation4 + $0x290] sm:$0xff]
    %v2933 = vld [vmem:[#allocation4 + $0x298] sm:$0xff]
    %v2934 = vld [vmem:[#allocation4 + $0x2a0] sm:$0xff]
    %v2935 = vld [vmem:[#allocation4 + $0x2a8] sm:$0xff]
    %v2936 = vld [vmem:[#allocation4 + $0x2b0] sm:$0xff]
    %v2937 = vld [vmem:[#allocation4 + $0x2b8] sm:$0xff]
    %v2938 = vld [vmem:[#allocation4 + $0x2c0] sm:$0xff]
    %v2939 = vld [vmem:[#allocation4 + $0x2c8] sm:$0xff]
    %v2940 = vld [vmem:[#allocation4 + $0x2d0] sm:$0xff]
    %v2941 = vld [vmem:[#allocation4 + $0x2d8] sm:$0xff]
    %v2942 = vld [vmem:[#allocation4 + $0x2e0] sm:$0xff]
    %v2943 = vld [vmem:[#allocation4 + $0x2e8] sm:$0xff]
    %v2944 = vld [vmem:[#allocation4 + $0x2f0] sm:$0xff]
    %v2945 = vld [vmem:[#allocation4 + $0x2f8] sm:$0xff]
    %v2946 = vld [vmem:[#allocation4 + $0x300] sm:$0xff]
    %v2947 = vld [vmem:[#allocation4 + $0x308] sm:$0xff]
    %v2948 = vld [vmem:[#allocation4 + $0x310] sm:$0xff]
    %v2949 = vld [vmem:[#allocation4 + $0x318] sm:$0xff]
    %v2950 = vld [vmem:[#allocation4 + $0x320] sm:$0xff]
    %v2951 = vld [vmem:[#allocation4 + $0x328] sm:$0xff]
    %v2952 = vld [vmem:[#allocation4 + $0x330] sm:$0xff]
    %v2953 = vld [vmem:[#allocation4 + $0x338] sm:$0xff]
    %v2954 = vld [vmem:[#allocation4 + $0x340] sm:$0xff]
    %v2955 = vld [vmem:[#allocation4 + $0x348] sm:$0xff]
    %v2956 = vld [vmem:[#allocation4 + $0x350] sm:$0xff]
    %v2957 = vld [vmem:[#allocation4 + $0x358] sm:$0xff]
    %v2958 = vld [vmem:[#allocation4 + $0x360] sm:$0xff]
    %v2959 = vld [vmem:[#allocation4 + $0x368] sm:$0xff]
    %v2960 = vld [vmem:[#allocation4 + $0x370] sm:$0xff]
    %v2961 = vld [vmem:[#allocation4 + $0x378] sm:$0xff]
    %v2962 = vld [vmem:[#allocation4 + $0x380] sm:$0xff]
    %v2963 = vld [vmem:[#allocation4 + $0x388] sm:$0xff]
    %v2964 = vld [vmem:[#allocation4 + $0x390] sm:$0xff]
    %v2965 = vld [vmem:[#allocation4 + $0x398] sm:$0xff]
    %v2966 = vld [vmem:[#allocation4 + $0x3a0] sm:$0xff]
    %v2967 = vld [vmem:[#allocation4 + $0x3a8] sm:$0xff]
    %v2968 = vld [vmem:[#allocation4 + $0x3b0] sm:$0xff]
    %v2969 = vld [vmem:[#allocation4 + $0x3b8] sm:$0xff]
    %v2970 = vld [vmem:[#allocation4 + $0x3c0] sm:$0xff]
    %v2971 = vld [vmem:[#allocation4 + $0x3c8] sm:$0xff]
    %v2972 = vld [vmem:[#allocation4 + $0x3d0] sm:$0xff]
    %v2973 = vld [vmem:[#allocation4 + $0x3d8] sm:$0xff]
    %v2974 = vld [vmem:[#allocation4 + $0x3e0] sm:$0xff]
    %v2975 = vld [vmem:[#allocation4 + $0x3e8] sm:$0xff]
    %v2976 = vld [vmem:[#allocation4 + $0x3f0] sm:$0xff]
    %v2977 = vld [vmem:[#allocation4 + $0x3f8] sm:$0xff]
    %v2978 = vld [vmem:[%s2] sm:$0xf]
    %v2980 = vperm.slane %v2978, 0
    %v2981 = vperm.slane %v2978, 1
    %v2982 = vperm.slane %v2978, 2
    %v2983 = vperm.slane %v2978, 3
    %2989 = vst [vmem:[#allocation1] ss:$4 sm:$0xff] %v2849
    %v2990 = vld.sshfl [vmem:[#allocation1] sm:$0xff pattern:$0x73625140]
    %v2991 = vld.sshfl [vmem:[#allocation1 + $0x8] sm:$0xff pattern:$0x73625140]
    %2994 = vmatpush.msra.mxu0 %v2910
    %2995 = vmatpush.msra.mxu0 %v2906
    %2996 = vmatpush.msra.mxu0 %v2902
    %2997 = vmatpush.msra.mxu0 %v2898
    %2998 = vmatpush.msra.mxu0 %v2894
    %2999 = vmatpush.msra.mxu0 %v2890
    %3000 = vmatpush.msra.mxu0 %v2886
    %3001 = vmatpush.msra.mxu0 %v2882
    %3002 = vmatpush.msra.mxu0 %v2878
    %3003 = vmatpush.msra.mxu0 %v2874
    %3004 = vmatpush.msra.mxu0 %v2870
    %3005 = vmatpush.msra.mxu0 %v2866
    %3006 = vmatpush.msra.mxu0 %v2862
    %3007 = vmatpush.msra.mxu0 %v2858
    %3008 = vmatpush.msra.mxu0 %v2854
    %3009 = vmatpush.msra.mxu0 %v2850
    %3010 = vmatmul.f32.gmra.mxu0 %v2990
    %v3011 = vpop.f32.mrf.mxu0
    %v3012 = vadd.f32 %v2980, %v3011
    %3013 = vdwg.mxu0
    %3014 = vmatpush.msra.mxu0 %v2974
    %3015 = vmatpush.msra.mxu0 %v2970
    %3016 = vmatpush.msra.mxu0 %v2966
    %3017 = vmatpush.msra.mxu0 %v2962
    %3018 = vmatpush.msra.mxu0 %v2958
    %3019 = vmatpush.msra.mxu0 %v2954
    %3020 = vmatpush.msra.mxu0 %v2950
    %3021 = vmatpush.msra.mxu0 %v2946
    %3022 = vmatpush.msra.mxu0 %v2942
    %3023 = vmatpush.msra.mxu0 %v2938
    %3024 = vmatpush.msra.mxu0 %v2934
    %3025 = vmatpush.msra.mxu0 %v2930
    %3026 = vmatpush.msra.mxu0 %v2926
    %3027 = vmatpush.msra.mxu0 %v2922
    %3028 = vmatpush.msra.mxu0 %v2918
    %3029 = vmatpush.msra.mxu0 %v2914
    %3030 = vmatmul.f32.gmra.mxu0 %v2991
    %v3031 = vpop.f32.mrf.mxu0
    %v3032 = vadd.f32 %v3012, %v3031
    %3033 = vdwg.mxu0
    %3034 = vmatpush.msra.mxu0 %v2911
    %3035 = vmatpush.msra.mxu0 %v2907
    %3036 = vmatpush.msra.mxu0 %v2903
    %3037 = vmatpush.msra.mxu0 %v2899
    %3038 = vmatpush.msra.mxu0 %v2895
    %3039 = vmatpush.msra.mxu0 %v2891
    %3040 = vmatpush.msra.mxu0 %v2887
    %3041 = vmatpush.msra.mxu0 %v2883
    %3042 = vmatpush.msra.mxu0 %v2879
    %3043 = vmatpush.msra.mxu0 %v2875
    %3044 = vmatpush.msra.mxu0 %v2871
    %3045 = vmatpush.msra.mxu0 %v2867
    %3046 = vmatpush.msra.mxu0 %v2863
    %3047 = vmatpush.msra.mxu0 %v2859
    %3048 = vmatpush.msra.mxu0 %v2855
    %3049 = vmatpush.msra.mxu0 %v2851
    %3050 = vmatmul.f32.gmra.mxu0 %v2990
    %v3051 = vpop.f32.mrf.mxu0
    %v3052 = vadd.f32 %v2981, %v3051
    %3053 = vdwg.mxu0
    %3054 = vmatpush.msra.mxu0 %v2975
    %3055 = vmatpush.msra.mxu0 %v2971
    %3056 = vmatpush.msra.mxu0 %v2967
    %3057 = vmatpush.msra.mxu0 %v2963
    %3058 = vmatpush.msra.mxu0 %v2959
    %3059 = vmatpush.msra.mxu0 %v2955
    %3060 = vmatpush.msra.mxu0 %v2951
    %3061 = vmatpush.msra.mxu0 %v2947
    %3062 = vmatpush.msra.mxu0 %v2943
    %3063 = vmatpush.msra.mxu0 %v2939
    %3064 = vmatpush.msra.mxu0 %v2935
    %3065 = vmatpush.msra.mxu0 %v2931
    %3066 = vmatpush.msra.mxu0 %v2927
    %3067 = vmatpush.msra.mxu0 %v2923
    %3068 = vmatpush.msra.mxu0 %v2919
    %3069 = vmatpush.msra.mxu0 %v2915
    %3070 = vmatmul.f32.gmra.mxu0 %v2991
    %v3071 = vpop.f32.mrf.mxu0
    %v3072 = vadd.f32 %v3052, %v3071
    %3073 = vdwg.mxu0
    %3074 = vmatpush.msra.mxu0 %v2912
    %3075 = vmatpush.msra.mxu0 %v2908
    %3076 = vmatpush.msra.mxu0 %v2904
    %3077 = vmatpush.msra.mxu0 %v2900
    %3078 = vmatpush.msra.mxu0 %v2896
    %3079 = vmatpush.msra.mxu0 %v2892
    %3080 = vmatpush.msra.mxu0 %v2888
    %3081 = vmatpush.msra.mxu0 %v2884
    %3082 = vmatpush.msra.mxu0 %v2880
    %3083 = vmatpush.msra.mxu0 %v2876
    %3084 = vmatpush.msra.mxu0 %v2872
    %3085 = vmatpush.msra.mxu0 %v2868
    %3086 = vmatpush.msra.mxu0 %v2864
    %3087 = vmatpush.msra.mxu0 %v2860
    %3088 = vmatpush.msra.mxu0 %v2856
    %3089 = vmatpush.msra.mxu0 %v2852
    %3090 = vmatmul.f32.gmra.mxu0 %v2990
    %v3091 = vpop.f32.mrf.mxu0
    %v3092 = vadd.f32 %v2982, %v3091
    %3093 = vdwg.mxu0
    %3094 = vmatpush.msra.mxu0 %v2976
    %3095 = vmatpush.msra.mxu0 %v2972
    %3096 = vmatpush.msra.mxu0 %v2968
    %3097 = vmatpush.msra.mxu0 %v2964
    %3098 = vmatpush.msra.mxu0 %v2960
    %3099 = vmatpush.msra.mxu0 %v2956
    %3100 = vmatpush.msra.mxu0 %v2952
    %3101 = vmatpush.msra.mxu0 %v2948
    %3102 = vmatpush.msra.mxu0 %v2944
    %3103 = vmatpush.msra.mxu0 %v2940
    %3104 = vmatpush.msra.mxu0 %v2936
    %3105 = vmatpush.msra.mxu0 %v2932
    %3106 = vmatpush.msra.mxu0 %v2928
    %3107 = vmatpush.msra.mxu0 %v2924
    %3108 = vmatpush.msra.mxu0 %v2920
    %3109 = vmatpush.msra.mxu0 %v2916
    %3110 = vmatmul.f32.gmra.mxu0 %v2991
    %v3111 = vpop.f32.mrf.mxu0
    %v3112 = vadd.f32 %v3092, %v3111
    %3113 = vdwg.mxu0
    %3114 = vmatpush.msra.mxu0 %v2913
    %3115 = vmatpush.msra.mxu0 %v2909
    %3116 = vmatpush.msra.mxu0 %v2905
    %3117 = vmatpush.msra.mxu0 %v2901
    %3118 = vmatpush.msra.mxu0 %v2897
    %3119 = vmatpush.msra.mxu0 %v2893
    %3120 = vmatpush.msra.mxu0 %v2889
    %3121 = vmatpush.msra.mxu0 %v2885
    %3122 = vmatpush.msra.mxu0 %v2881
    %3123 = vmatpush.msra.mxu0 %v2877
    %3124 = vmatpush.msra.mxu0 %v2873
    %3125 = vmatpush.msra.mxu0 %v2869
    %3126 = vmatpush.msra.mxu0 %v2865
    %3127 = vmatpush.msra.mxu0 %v2861
    %3128 = vmatpush.msra.mxu0 %v2857
    %3129 = vmatpush.msra.mxu0 %v2853
    %3130 = vmatmul.f32.gmra.mxu0 %v2990
    %v3131 = vpop.f32.mrf.mxu0
    %v3132 = vadd.f32 %v2983, %v3131
    %3133 = vdwg.mxu0
    %3134 = vmatpush.msra.mxu0 %v2977
    %3135 = vmatpush.msra.mxu0 %v2973
    %3136 = vmatpush.msra.mxu0 %v2969
    %3137 = vmatpush.msra.mxu0 %v2965
    %3138 = vmatpush.msra.mxu0 %v2961
    %3139 = vmatpush.msra.mxu0 %v2957
    %3140 = vmatpush.msra.mxu0 %v2953
    %3141 = vmatpush.msra.mxu0 %v2949
    %3142 = vmatpush.msra.mxu0 %v2945
    %3143 = vmatpush.msra.mxu0 %v2941
    %3144 = vmatpush.msra.mxu0 %v2937
    %3145 = vmatpush.msra.mxu0 %v2933
    %3146 = vmatpush.msra.mxu0 %v2929
    %3147 = vmatpush.msra.mxu0 %v2925
    %3148 = vmatpush.msra.mxu0 %v2921
    %3149 = vmatpush.msra.mxu0 %v2917
    %3150 = vmatmul.f32.gmra.mxu0 %v2991
    %v3151 = vpop.f32.mrf.mxu0
    %v3152 = vadd.f32 %v3132, %v3151
    %3153 = vdwg.mxu0
    %v3154 = vxor.u32 %v3032, 2147483648
    %v3155 = vmul.f32 %v3154, 1.442695
    %v3156 = vpow.pop %v3155
    %v3157 = vadd.f32 %v3156, 1.0
    %v3158 = vrcp.pop %v3157
    %v3159 = vmul.f32 %v3157, %v3158
    %v3160 = vsub.f32 1.0, %v3159
    %v3161 = vmul.f32 %v3158, %v3160
    %v3162 = vadd.f32 %v3158, %v3161
    %vm3163 = vweird.f32 %v3157
    %vm3164 = vweird.f32 %v3158
    %vm3165 = vmor %vm3163, %vm3164
    %v3166 = vsel %vm3165, %v3158, %v3162
    %v3167 = vand.u32 2147483647, %v3157
    %vm3168 = vcmp.eq.f32.partialorder %v3167, 8.507059e+37
    %v3169 = vand.u32 %v3157, 2147483648
    %v3170 = vor.u32 1.1754944e-38, %v3169
    %v3171 = vsel %vm3168, %v3170, %v3166
    %v3172 = vmul.f32 1.0, %v3171
    %v3173 = vtanh.pop %v3032
    %v3174 = vmul.f32 %v3172, %v2692
    %3176 = vrot.lane.b32.xlu0 %v3173, 64
    %v3177 = vpop.permute.xlu0 %3176
    %v3179 = vmul.f32 %v3172, %v3177
    %3181 = vrot.lane.b32.xlu0 %v3179, 32
    %v3182 = vpop.permute.xlu0 %3181
    %v3184 = vadd.f32 %v3174, %v3182
    %v3185 = vtanh.pop %v3184
    %3187 = vrot.lane.b32.xlu0 %v3185, 64
    %v3188 = vpop.permute.xlu0 %3187
    %v3190 = vmul.f32 %v3172, %v3188
    %3192 = vrot.lane.b32.xlu0 %v3190, 64
    %v3193 = vpop.permute.xlu0 %3192
    %3195 = vst.msk [vmem:[#allocation2] sm:$0x3] %vm210, %v3193
    %3196 = vrot.lane.b32.xlu0 %v3190, 96
    %v3197 = vpop.permute.xlu0 %3196
    %3199 = vst.msk [vmem:[#allocation2] sm:$0x3] %vm215, %v3197
    %v3200 = vxor.u32 %v3072, 2147483648
    %v3201 = vmul.f32 %v3200, 1.442695
    %v3202 = vpow.pop %v3201
    %v3203 = vadd.f32 %v3202, 1.0
    %v3204 = vrcp.pop %v3203
    %v3205 = vmul.f32 %v3203, %v3204
    %v3206 = vsub.f32 1.0, %v3205
    %v3207 = vmul.f32 %v3204, %v3206
    %v3208 = vadd.f32 %v3204, %v3207
    %vm3209 = vweird.f32 %v3203
    %vm3210 = vweird.f32 %v3204
    %vm3211 = vmor %vm3209, %vm3210
    %v3212 = vsel %vm3211, %v3204, %v3208
    %v3213 = vand.u32 2147483647, %v3203
    %vm3214 = vcmp.eq.f32.partialorder %v3213, 8.507059e+37
    %v3215 = vand.u32 %v3203, 2147483648
    %v3216 = vor.u32 1.1754944e-38, %v3215
    %v3217 = vsel %vm3214, %v3216, %v3212
    %v3218 = vmul.f32 1.0, %v3217
    %v3219 = vtanh.pop %v3072
    %v3220 = vmul.f32 %v3218, %v2738
    %3222 = vrot.lane.b32.xlu0 %v3219, 64
    %v3223 = vpop.permute.xlu0 %3222
    %v3225 = vmul.f32 %v3218, %v3223
    %3227 = vrot.lane.b32.xlu0 %v3225, 32
    %v3228 = vpop.permute.xlu0 %3227
    %v3230 = vadd.f32 %v3220, %v3228
    %v3231 = vtanh.pop %v3230
    %3233 = vrot.lane.b32.xlu0 %v3231, 64
    %v3234 = vpop.permute.xlu0 %3233
    %v3236 = vmul.f32 %v3218, %v3234
    %3237 = vst.msk [vmem:[#allocation2] sm:$0x3] %vm470, %v3236
    %3239 = vrot.lane.b32.xlu0 %v3236, 32
    %v3240 = vpop.permute.xlu0 %3239
    %3242 = vst.msk [vmem:[#allocation2 + $0x2] sm:$0x3] %vm84, %v3240
    %v3243 = vxor.u32 %v3112, 2147483648
    %v3244 = vmul.f32 %v3243, 1.442695
    %v3245 = vpow.pop %v3244
    %v3246 = vadd.f32 %v3245, 1.0
    %v3247 = vrcp.pop %v3246
    %v3248 = vmul.f32 %v3246, %v3247
    %v3249 = vsub.f32 1.0, %v3248
    %v3250 = vmul.f32 %v3247, %v3249
    %v3251 = vadd.f32 %v3247, %v3250
    %vm3252 = vweird.f32 %v3246
    %vm3253 = vweird.f32 %v3247
    %vm3254 = vmor %vm3252, %vm3253
    %v3255 = vsel %vm3254, %v3247, %v3251
    %v3256 = vand.u32 2147483647, %v3246
    %vm3257 = vcmp.eq.f32.partialorder %v3256, 8.507059e+37
    %v3258 = vand.u32 %v3246, 2147483648
    %v3259 = vor.u32 1.1754944e-38, %v3258
    %v3260 = vsel %vm3257, %v3259, %v3255
    %v3261 = vmul.f32 1.0, %v3260
    %v3262 = vtanh.pop %v3112
    %v3263 = vmul.f32 %v3261, %v2781
    %3265 = vrot.lane.b32.xlu0 %v3262, 64
    %v3266 = vpop.permute.xlu0 %3265
    %v3268 = vmul.f32 %v3261, %v3266
    %3270 = vrot.lane.b32.xlu0 %v3268, 32
    %v3271 = vpop.permute.xlu0 %3270
    %v3273 = vadd.f32 %v3263, %v3271
    %v3274 = vtanh.pop %v3273
    %3276 = vrot.lane.b32.xlu0 %v3274, 64
    %v3277 = vpop.permute.xlu0 %3276
    %v3279 = vmul.f32 %v3261, %v3277
    %3281 = vrot.lane.b32.xlu0 %v3279, 64
    %v3282 = vpop.permute.xlu0 %3281
    %3284 = vst.msk [vmem:[#allocation2 + $0x2] sm:$0x3] %vm210, %v3282
    %3285 = vrot.lane.b32.xlu0 %v3279, 96
    %v3286 = vpop.permute.xlu0 %3285
    %3288 = vst.msk [vmem:[#allocation2 + $0x2] sm:$0x3] %vm215, %v3286
    %v3289 = vxor.u32 %v3152, 2147483648
    %v3290 = vmul.f32 %v3289, 1.442695
    %v3291 = vpow.pop %v3290
    %v3292 = vadd.f32 %v3291, 1.0
    %v3293 = vrcp.pop %v3292
    %v3294 = vmul.f32 %v3292, %v3293
    %v3295 = vsub.f32 1.0, %v3294
    %v3296 = vmul.f32 %v3293, %v3295
    %v3297 = vadd.f32 %v3293, %v3296
    %vm3298 = vweird.f32 %v3292
    %vm3299 = vweird.f32 %v3293
    %vm3300 = vmor %vm3298, %vm3299
    %v3301 = vsel %vm3300, %v3293, %v3297
    %v3302 = vand.u32 2147483647, %v3292
    %vm3303 = vcmp.eq.f32.partialorder %v3302, 8.507059e+37
    %v3304 = vand.u32 %v3292, 2147483648
    %v3305 = vor.u32 1.1754944e-38, %v3304
    %v3306 = vsel %vm3303, %v3305, %v3301
    %v3307 = vmul.f32 1.0, %v3306
    %v3308 = vtanh.pop %v3152
    %v3309 = vmul.f32 %v3307, %v2827
    %3311 = vrot.lane.b32.xlu0 %v3308, 64
    %v3312 = vpop.permute.xlu0 %3311
    %v3314 = vmul.f32 %v3307, %v3312
    %3316 = vrot.lane.b32.xlu0 %v3314, 32
    %v3317 = vpop.permute.xlu0 %3316
    %v3319 = vadd.f32 %v3309, %v3317
    %v3320 = vtanh.pop %v3319
    %3322 = vrot.lane.b32.xlu0 %v3320, 64
    %v3323 = vpop.permute.xlu0 %3322
    %v3325 = vmul.f32 %v3307, %v3323
    %3326 = vst.msk [vmem:[#allocation2 + $0x2] sm:$0x3] %vm470, %v3325
    %3328 = vrot.lane.b32.xlu0 %v3325, 32
    %v3329 = vpop.permute.xlu0 %3328
    %3331 = vst.msk [vmem:[#allocation3 + $0x2] sm:$0x3] %vm84, %v3329
    %v3332 = vld [vmem:[#allocation2] sm:$0xf]
    %v3333 = vld [vmem:[#allocation4 + $0x8] sm:$0xff]
    %v3334 = vld [vmem:[#allocation4 + $0x10] sm:$0xff]
    %v3335 = vld [vmem:[#allocation4 + $0x18] sm:$0xff]
    %v3336 = vld [vmem:[#allocation4 + $0x28] sm:$0xff]
    %v3337 = vld [vmem:[#allocation4 + $0x30] sm:$0xff]
    %v3338 = vld [vmem:[#allocation4 + $0x38] sm:$0xff]
    %v3339 = vld [vmem:[#allocation4 + $0x48] sm:$0xff]
    %v3340 = vld [vmem:[#allocation4 + $0x50] sm:$0xff]
    %v3341 = vld [vmem:[#allocation4 + $0x58] sm:$0xff]
    %v3342 = vld [vmem:[#allocation4 + $0x68] sm:$0xff]
    %v3343 = vld [vmem:[#allocation4 + $0x70] sm:$0xff]
    %v3344 = vld [vmem:[#allocation4 + $0x78] sm:$0xff]
    %v3345 = vld [vmem:[#allocation4 + $0x88] sm:$0xff]
    %v3346 = vld [vmem:[#allocation4 + $0x90] sm:$0xff]
    %v3347 = vld [vmem:[#allocation4 + $0x98] sm:$0xff]
    %v3348 = vld [vmem:[#allocation4 + $0xa8] sm:$0xff]
    %v3349 = vld [vmem:[#allocation4 + $0xb0] sm:$0xff]
    %v3350 = vld [vmem:[#allocation4 + $0xb8] sm:$0xff]
    %v3351 = vld [vmem:[#allocation4 + $0xc8] sm:$0xff]
    %v3352 = vld [vmem:[#allocation4 + $0xd0] sm:$0xff]
    %v3353 = vld [vmem:[#allocation4 + $0xd8] sm:$0xff]
    %v3354 = vld [vmem:[#allocation4 + $0xe8] sm:$0xff]
    %v3355 = vld [vmem:[#allocation4 + $0xf0] sm:$0xff]
    %v3356 = vld [vmem:[#allocation4 + $0xf8] sm:$0xff]
    %v3357 = vld [vmem:[#allocation4 + $0x108] sm:$0xff]
    %v3358 = vld [vmem:[#allocation4 + $0x110] sm:$0xff]
    %v3359 = vld [vmem:[#allocation4 + $0x118] sm:$0xff]
    %v3360 = vld [vmem:[#allocation4 + $0x128] sm:$0xff]
    %v3361 = vld [vmem:[#allocation4 + $0x130] sm:$0xff]
    %v3362 = vld [vmem:[#allocation4 + $0x138] sm:$0xff]
    %v3363 = vld [vmem:[#allocation4 + $0x148] sm:$0xff]
    %v3364 = vld [vmem:[#allocation4 + $0x150] sm:$0xff]
    %v3365 = vld [vmem:[#allocation4 + $0x158] sm:$0xff]
    %v3366 = vld [vmem:[#allocation4 + $0x168] sm:$0xff]
    %v3367 = vld [vmem:[#allocation4 + $0x170] sm:$0xff]
    %v3368 = vld [vmem:[#allocation4 + $0x178] sm:$0xff]
    %v3369 = vld [vmem:[#allocation4 + $0x188] sm:$0xff]
    %v3370 = vld [vmem:[#allocation4 + $0x190] sm:$0xff]
    %v3371 = vld [vmem:[#allocation4 + $0x198] sm:$0xff]
    %v3372 = vld [vmem:[#allocation4 + $0x1a8] sm:$0xff]
    %v3373 = vld [vmem:[#allocation4 + $0x1b0] sm:$0xff]
    %v3374 = vld [vmem:[#allocation4 + $0x1b8] sm:$0xff]
    %v3375 = vld [vmem:[#allocation4 + $0x1c8] sm:$0xff]
    %v3376 = vld [vmem:[#allocation4 + $0x1d0] sm:$0xff]
    %v3377 = vld [vmem:[#allocation4 + $0x1d8] sm:$0xff]
    %v3378 = vld [vmem:[#allocation4 + $0x1e8] sm:$0xff]
    %v3379 = vld [vmem:[#allocation4 + $0x1f0] sm:$0xff]
    %v3380 = vld [vmem:[#allocation4 + $0x1f8] sm:$0xff]
    %v3381 = vld [vmem:[#allocation4 + $0x208] sm:$0xff]
    %v3382 = vld [vmem:[#allocation4 + $0x210] sm:$0xff]
    %v3383 = vld [vmem:[#allocation4 + $0x218] sm:$0xff]
    %v3384 = vld [vmem:[#allocation4 + $0x228] sm:$0xff]
    %v3385 = vld [vmem:[#allocation4 + $0x230] sm:$0xff]
    %v3386 = vld [vmem:[#allocation4 + $0x238] sm:$0xff]
    %v3387 = vld [vmem:[#allocation4 + $0x248] sm:$0xff]
    %v3388 = vld [vmem:[#allocation4 + $0x250] sm:$0xff]
    %v3389 = vld [vmem:[#allocation4 + $0x258] sm:$0xff]
    %v3390 = vld [vmem:[#allocation4 + $0x268] sm:$0xff]
    %v3391 = vld [vmem:[#allocation4 + $0x270] sm:$0xff]
    %v3392 = vld [vmem:[#allocation4 + $0x278] sm:$0xff]
    %v3393 = vld [vmem:[#allocation4 + $0x288] sm:$0xff]
    %v3394 = vld [vmem:[#allocation4 + $0x290] sm:$0xff]
    %v3395 = vld [vmem:[#allocation4 + $0x298] sm:$0xff]
    %v3396 = vld [vmem:[#allocation4 + $0x2a8] sm:$0xff]
    %v3397 = vld [vmem:[#allocation4 + $0x2b0] sm:$0xff]
    %v3398 = vld [vmem:[#allocation4 + $0x2b8] sm:$0xff]
    %v3399 = vld [vmem:[#allocation4 + $0x2c8] sm:$0xff]
    %v3400 = vld [vmem:[#allocation4 + $0x2d0] sm:$0xff]
    %v3401 = vld [vmem:[#allocation4 + $0x2d8] sm:$0xff]
    %v3402 = vld [vmem:[#allocation4 + $0x2e8] sm:$0xff]
    %v3403 = vld [vmem:[#allocation4 + $0x2f0] sm:$0xff]
    %v3404 = vld [vmem:[#allocation4 + $0x2f8] sm:$0xff]
    %v3405 = vld [vmem:[#allocation4 + $0x308] sm:$0xff]
    %v3406 = vld [vmem:[#allocation4 + $0x310] sm:$0xff]
    %v3407 = vld [vmem:[#allocation4 + $0x318] sm:$0xff]
    %v3408 = vld [vmem:[#allocation4 + $0x328] sm:$0xff]
    %v3409 = vld [vmem:[#allocation4 + $0x330] sm:$0xff]
    %v3410 = vld [vmem:[#allocation4 + $0x338] sm:$0xff]
    %v3411 = vld [vmem:[#allocation4 + $0x348] sm:$0xff]
    %v3412 = vld [vmem:[#allocation4 + $0x350] sm:$0xff]
    %v3413 = vld [vmem:[#allocation4 + $0x358] sm:$0xff]
    %v3414 = vld [vmem:[#allocation4 + $0x368] sm:$0xff]
    %v3415 = vld [vmem:[#allocation4 + $0x370] sm:$0xff]
    %v3416 = vld [vmem:[#allocation4 + $0x378] sm:$0xff]
    %v3417 = vld [vmem:[#allocation4 + $0x388] sm:$0xff]
    %v3418 = vld [vmem:[#allocation4 + $0x390] sm:$0xff]
    %v3419 = vld [vmem:[#allocation4 + $0x398] sm:$0xff]
    %v3420 = vld [vmem:[#allocation4 + $0x3a8] sm:$0xff]
    %v3421 = vld [vmem:[#allocation4 + $0x3b0] sm:$0xff]
    %v3422 = vld [vmem:[#allocation4 + $0x3b8] sm:$0xff]
    %v3423 = vld [vmem:[#allocation4 + $0x3c8] sm:$0xff]
    %v3424 = vld [vmem:[#allocation4 + $0x3d0] sm:$0xff]
    %v3425 = vld [vmem:[#allocation4 + $0x3d8] sm:$0xff]
    %v3426 = vld [vmem:[#allocation4 + $0x3e8] sm:$0xff]
    %v3427 = vld [vmem:[#allocation4 + $0x3f0] sm:$0xff]
    %v3428 = vld [vmem:[#allocation4 + $0x3f8] sm:$0xff]
    %v3429 = vld [vmem:[%s2] sm:$0xf]
    %v3431 = vperm.slane %v3429, 1
    %v3432 = vperm.slane %v3429, 2
    %v3433 = vperm.slane %v3429, 3
    %3438 = vst [vmem:[#allocation1] ss:$4 sm:$0xff] %v3332
    %v3439 = vld.sshfl [vmem:[#allocation1] sm:$0xff pattern:$0x73625140]
    %v3440 = vld.sshfl [vmem:[#allocation1 + $0x8] sm:$0xff pattern:$0x73625140]
    %3443 = vmatpush.msra.mxu0 %v3378
    %3444 = vmatpush.msra.mxu0 %v3375
    %3445 = vmatpush.msra.mxu0 %v3372
    %3446 = vmatpush.msra.mxu0 %v3369
    %3447 = vmatpush.msra.mxu0 %v3366
    %3448 = vmatpush.msra.mxu0 %v3363
    %3449 = vmatpush.msra.mxu0 %v3360
    %3450 = vmatpush.msra.mxu0 %v3357
    %3451 = vmatpush.msra.mxu0 %v3354
    %3452 = vmatpush.msra.mxu0 %v3351
    %3453 = vmatpush.msra.mxu0 %v3348
    %3454 = vmatpush.msra.mxu0 %v3345
    %3455 = vmatpush.msra.mxu0 %v3342
    %3456 = vmatpush.msra.mxu0 %v3339
    %3457 = vmatpush.msra.mxu0 %v3336
    %3458 = vmatpush.msra.mxu0 %v3333
    %3459 = vmatmul.f32.gmra.mxu0 %v3439
    %v3460 = vpop.f32.mrf.mxu0
    %v3461 = vadd.f32 %v3431, %v3460
    %3462 = vdwg.mxu0
    %3463 = vmatpush.msra.mxu0 %v3426
    %3464 = vmatpush.msra.mxu0 %v3423
    %3465 = vmatpush.msra.mxu0 %v3420
    %3466 = vmatpush.msra.mxu0 %v3417
    %3467 = vmatpush.msra.mxu0 %v3414
    %3468 = vmatpush.msra.mxu0 %v3411
    %3469 = vmatpush.msra.mxu0 %v3408
    %3470 = vmatpush.msra.mxu0 %v3405
    %3471 = vmatpush.msra.mxu0 %v3402
    %3472 = vmatpush.msra.mxu0 %v3399
    %3473 = vmatpush.msra.mxu0 %v3396
    %3474 = vmatpush.msra.mxu0 %v3393
    %3475 = vmatpush.msra.mxu0 %v3390
    %3476 = vmatpush.msra.mxu0 %v3387
    %3477 = vmatpush.msra.mxu0 %v3384
    %3478 = vmatpush.msra.mxu0 %v3381
    %3479 = vmatmul.f32.gmra.mxu0 %v3440
    %v3480 = vpop.f32.mrf.mxu0
    %v3481 = vadd.f32 %v3461, %v3480
    %3482 = vdwg.mxu0
    %3483 = vmatpush.msra.mxu0 %v3379
    %3484 = vmatpush.msra.mxu0 %v3376
    %3485 = vmatpush.msra.mxu0 %v3373
    %3486 = vmatpush.msra.mxu0 %v3370
    %3487 = vmatpush.msra.mxu0 %v3367
    %3488 = vmatpush.msra.mxu0 %v3364
    %3489 = vmatpush.msra.mxu0 %v3361
    %3490 = vmatpush.msra.mxu0 %v3358
    %3491 = vmatpush.msra.mxu0 %v3355
    %3492 = vmatpush.msra.mxu0 %v3352
    %3493 = vmatpush.msra.mxu0 %v3349
    %3494 = vmatpush.msra.mxu0 %v3346
    %3495 = vmatpush.msra.mxu0 %v3343
    %3496 = vmatpush.msra.mxu0 %v3340
    %3497 = vmatpush.msra.mxu0 %v3337
    %3498 = vmatpush.msra.mxu0 %v3334
    %3499 = vmatmul.f32.gmra.mxu0 %v3439
    %v3500 = vpop.f32.mrf.mxu0
    %v3501 = vadd.f32 %v3432, %v3500
    %3502 = vdwg.mxu0
    %3503 = vmatpush.msra.mxu0 %v3427
    %3504 = vmatpush.msra.mxu0 %v3424
    %3505 = vmatpush.msra.mxu0 %v3421
    %3506 = vmatpush.msra.mxu0 %v3418
    %3507 = vmatpush.msra.mxu0 %v3415
    %3508 = vmatpush.msra.mxu0 %v3412
    %3509 = vmatpush.msra.mxu0 %v3409
    %3510 = vmatpush.msra.mxu0 %v3406
    %3511 = vmatpush.msra.mxu0 %v3403
    %3512 = vmatpush.msra.mxu0 %v3400
    %3513 = vmatpush.msra.mxu0 %v3397
    %3514 = vmatpush.msra.mxu0 %v3394
    %3515 = vmatpush.msra.mxu0 %v3391
    %3516 = vmatpush.msra.mxu0 %v3388
    %3517 = vmatpush.msra.mxu0 %v3385
    %3518 = vmatpush.msra.mxu0 %v3382
    %3519 = vmatmul.f32.gmra.mxu0 %v3440
    %v3520 = vpop.f32.mrf.mxu0
    %v3521 = vadd.f32 %v3501, %v3520
    %3522 = vdwg.mxu0
    %3523 = vmatpush.msra.mxu0 %v3380
    %3524 = vmatpush.msra.mxu0 %v3377
    %3525 = vmatpush.msra.mxu0 %v3374
    %3526 = vmatpush.msra.mxu0 %v3371
    %3527 = vmatpush.msra.mxu0 %v3368
    %3528 = vmatpush.msra.mxu0 %v3365
    %3529 = vmatpush.msra.mxu0 %v3362
    %3530 = vmatpush.msra.mxu0 %v3359
    %3531 = vmatpush.msra.mxu0 %v3356
    %3532 = vmatpush.msra.mxu0 %v3353
    %3533 = vmatpush.msra.mxu0 %v3350
    %3534 = vmatpush.msra.mxu0 %v3347
    %3535 = vmatpush.msra.mxu0 %v3344
    %3536 = vmatpush.msra.mxu0 %v3341
    %3537 = vmatpush.msra.mxu0 %v3338
    %3538 = vmatpush.msra.mxu0 %v3335
    %3539 = vmatmul.f32.gmra.mxu0 %v3439
    %v3540 = vpop.f32.mrf.mxu0
    %v3541 = vadd.f32 %v3433, %v3540
    %3542 = vdwg.mxu0
    %3543 = vmatpush.msra.mxu0 %v3428
    %3544 = vmatpush.msra.mxu0 %v3425
    %3545 = vmatpush.msra.mxu0 %v3422
    %3546 = vmatpush.msra.mxu0 %v3419
    %3547 = vmatpush.msra.mxu0 %v3416
    %3548 = vmatpush.msra.mxu0 %v3413
    %3549 = vmatpush.msra.mxu0 %v3410
    %3550 = vmatpush.msra.mxu0 %v3407
    %3551 = vmatpush.msra.mxu0 %v3404
    %3552 = vmatpush.msra.mxu0 %v3401
    %3553 = vmatpush.msra.mxu0 %v3398
    %3554 = vmatpush.msra.mxu0 %v3395
    %3555 = vmatpush.msra.mxu0 %v3392
    %3556 = vmatpush.msra.mxu0 %v3389
    %3557 = vmatpush.msra.mxu0 %v3386
    %3558 = vmatpush.msra.mxu0 %v3383
    %3559 = vmatmul.f32.gmra.mxu0 %v3440
    %v3560 = vpop.f32.mrf.mxu0
    %v3561 = vadd.f32 %v3541, %v3560
    %3562 = vdwg.mxu0
    %v3563 = vxor.u32 %v3481, 2147483648
    %v3564 = vmul.f32 %v3563, 1.442695
    %v3565 = vpow.pop %v3564
    %v3566 = vadd.f32 %v3565, 1.0
    %v3567 = vrcp.pop %v3566
    %v3568 = vmul.f32 %v3566, %v3567
    %v3569 = vsub.f32 1.0, %v3568
    %v3570 = vmul.f32 %v3567, %v3569
    %v3571 = vadd.f32 %v3567, %v3570
    %vm3572 = vweird.f32 %v3566
    %vm3573 = vweird.f32 %v3567
    %vm3574 = vmor %vm3572, %vm3573
    %v3575 = vsel %vm3574, %v3567, %v3571
    %v3576 = vand.u32 2147483647, %v3566
    %vm3577 = vcmp.eq.f32.partialorder %v3576, 8.507059e+37
    %v3578 = vand.u32 %v3566, 2147483648
    %v3579 = vor.u32 1.1754944e-38, %v3578
    %v3580 = vsel %vm3577, %v3579, %v3575
    %v3581 = vmul.f32 1.0, %v3580
    %v3582 = vtanh.pop %v3481
    %v3583 = vmul.f32 %v3581, %v3230
    %3585 = vrot.lane.b32.xlu0 %v3582, 64
    %v3586 = vpop.permute.xlu0 %3585
    %v3588 = vmul.f32 %v3581, %v3586
    %3590 = vrot.lane.b32.xlu0 %v3588, 32
    %v3591 = vpop.permute.xlu0 %3590
    %v3593 = vadd.f32 %v3583, %v3591
    %v3594 = vtanh.pop %v3593
    %3596 = vrot.lane.b32.xlu0 %v3594, 64
    %v3597 = vpop.permute.xlu0 %3596
    %v3599 = vmul.f32 %v3581, %v3597
    %3600 = vst.msk [vmem:[#allocation2] sm:$0x3] %vm470, %v3599
    %3602 = vrot.lane.b32.xlu0 %v3599, 32
    %v3603 = vpop.permute.xlu0 %3602
    %3605 = vst.msk [vmem:[#allocation2 + $0x2] sm:$0x3] %vm84, %v3603
    %v3606 = vxor.u32 %v3521, 2147483648
    %v3607 = vmul.f32 %v3606, 1.442695
    %v3608 = vpow.pop %v3607
    %v3609 = vadd.f32 %v3608, 1.0
    %v3610 = vrcp.pop %v3609
    %v3611 = vmul.f32 %v3609, %v3610
    %v3612 = vsub.f32 1.0, %v3611
    %v3613 = vmul.f32 %v3610, %v3612
    %v3614 = vadd.f32 %v3610, %v3613
    %vm3615 = vweird.f32 %v3609
    %vm3616 = vweird.f32 %v3610
    %vm3617 = vmor %vm3615, %vm3616
    %v3618 = vsel %vm3617, %v3610, %v3614
    %v3619 = vand.u32 2147483647, %v3609
    %vm3620 = vcmp.eq.f32.partialorder %v3619, 8.507059e+37
    %v3621 = vand.u32 %v3609, 2147483648
    %v3622 = vor.u32 1.1754944e-38, %v3621
    %v3623 = vsel %vm3620, %v3622, %v3618
    %v3624 = vmul.f32 1.0, %v3623
    %v3625 = vtanh.pop %v3521
    %v3626 = vmul.f32 %v3624, %v3273
    %3628 = vrot.lane.b32.xlu0 %v3625, 64
    %v3629 = vpop.permute.xlu0 %3628
    %v3631 = vmul.f32 %v3624, %v3629
    %3633 = vrot.lane.b32.xlu0 %v3631, 32
    %v3634 = vpop.permute.xlu0 %3633
    %v3636 = vadd.f32 %v3626, %v3634
    %v3637 = vtanh.pop %v3636
    %3639 = vrot.lane.b32.xlu0 %v3637, 64
    %v3640 = vpop.permute.xlu0 %3639
    %v3642 = vmul.f32 %v3624, %v3640
    %3644 = vrot.lane.b32.xlu0 %v3642, 64
    %v3645 = vpop.permute.xlu0 %3644
    %3647 = vst.msk [vmem:[#allocation2 + $0x2] sm:$0x3] %vm210, %v3645
    %3648 = vrot.lane.b32.xlu0 %v3642, 96
    %v3649 = vpop.permute.xlu0 %3648
    %3651 = vst.msk [vmem:[#allocation2 + $0x2] sm:$0x3] %vm215, %v3649
    %v3652 = vxor.u32 %v3561, 2147483648
    %v3653 = vmul.f32 %v3652, 1.442695
    %v3654 = vpow.pop %v3653
    %v3655 = vadd.f32 %v3654, 1.0
    %v3656 = vrcp.pop %v3655
    %v3657 = vmul.f32 %v3655, %v3656
    %v3658 = vsub.f32 1.0, %v3657
    %v3659 = vmul.f32 %v3656, %v3658
    %v3660 = vadd.f32 %v3656, %v3659
    %vm3661 = vweird.f32 %v3655
    %vm3662 = vweird.f32 %v3656
    %vm3663 = vmor %vm3661, %vm3662
    %v3664 = vsel %vm3663, %v3656, %v3660
    %v3665 = vand.u32 2147483647, %v3655
    %vm3666 = vcmp.eq.f32.partialorder %v3665, 8.507059e+37
    %v3667 = vand.u32 %v3655, 2147483648
    %v3668 = vor.u32 1.1754944e-38, %v3667
    %v3669 = vsel %vm3666, %v3668, %v3664
    %v3670 = vmul.f32 1.0, %v3669
    %v3671 = vtanh.pop %v3561
    %v3672 = vmul.f32 %v3670, %v3319
    %3674 = vrot.lane.b32.xlu0 %v3671, 64
    %v3675 = vpop.permute.xlu0 %3674
    %v3677 = vmul.f32 %v3670, %v3675
    %3679 = vrot.lane.b32.xlu0 %v3677, 32
    %v3680 = vpop.permute.xlu0 %3679
    %v3682 = vadd.f32 %v3672, %v3680
    %v3683 = vtanh.pop %v3682
    %3685 = vrot.lane.b32.xlu0 %v3683, 64
    %v3686 = vpop.permute.xlu0 %3685
    %v3688 = vmul.f32 %v3670, %v3686
    %3689 = vst.msk [vmem:[#allocation2 + $0x2] sm:$0x3] %vm470, %v3688
    %3691 = vrot.lane.b32.xlu0 %v3688, 64
    %v3692 = vpop.permute.xlu0 %3691
    %3694 = vst.msk [vmem:[#allocation3 + $0x2] sm:$0x3] %vm210, %v3692
    %v3695 = vld [vmem:[#allocation2] sm:$0xf]
    %v3696 = vld [vmem:[#allocation4 + $0x10] sm:$0xff]
    %v3697 = vld [vmem:[#allocation4 + $0x18] sm:$0xff]
    %v3698 = vld [vmem:[#allocation4 + $0x30] sm:$0xff]
    %v3699 = vld [vmem:[#allocation4 + $0x38] sm:$0xff]
    %v3700 = vld [vmem:[#allocation4 + $0x50] sm:$0xff]
    %v3701 = vld [vmem:[#allocation4 + $0x58] sm:$0xff]
    %v3702 = vld [vmem:[#allocation4 + $0x70] sm:$0xff]
    %v3703 = vld [vmem:[#allocation4 + $0x78] sm:$0xff]
    %v3704 = vld [vmem:[#allocation4 + $0x90] sm:$0xff]
    %v3705 = vld [vmem:[#allocation4 + $0x98] sm:$0xff]
    %v3706 = vld [vmem:[#allocation4 + $0xb0] sm:$0xff]
    %v3707 = vld [vmem:[#allocation4 + $0xb8] sm:$0xff]
    %v3708 = vld [vmem:[#allocation4 + $0xd0] sm:$0xff]
    %v3709 = vld [vmem:[#allocation4 + $0xd8] sm:$0xff]
    %v3710 = vld [vmem:[#allocation4 + $0xf0] sm:$0xff]
    %v3711 = vld [vmem:[#allocation4 + $0xf8] sm:$0xff]
    %v3712 = vld [vmem:[#allocation4 + $0x110] sm:$0xff]
    %v3713 = vld [vmem:[#allocation4 + $0x118] sm:$0xff]
    %v3714 = vld [vmem:[#allocation4 + $0x130] sm:$0xff]
    %v3715 = vld [vmem:[#allocation4 + $0x138] sm:$0xff]
    %v3716 = vld [vmem:[#allocation4 + $0x150] sm:$0xff]
    %v3717 = vld [vmem:[#allocation4 + $0x158] sm:$0xff]
    %v3718 = vld [vmem:[#allocation4 + $0x170] sm:$0xff]
    %v3719 = vld [vmem:[#allocation4 + $0x178] sm:$0xff]
    %v3720 = vld [vmem:[#allocation4 + $0x190] sm:$0xff]
    %v3721 = vld [vmem:[#allocation4 + $0x198] sm:$0xff]
    %v3722 = vld [vmem:[#allocation4 + $0x1b0] sm:$0xff]
    %v3723 = vld [vmem:[#allocation4 + $0x1b8] sm:$0xff]
    %v3724 = vld [vmem:[#allocation4 + $0x1d0] sm:$0xff]
    %v3725 = vld [vmem:[#allocation4 + $0x1d8] sm:$0xff]
    %v3726 = vld [vmem:[#allocation4 + $0x1f0] sm:$0xff]
    %v3727 = vld [vmem:[#allocation4 + $0x1f8] sm:$0xff]
    %v3728 = vld [vmem:[#allocation4 + $0x210] sm:$0xff]
    %v3729 = vld [vmem:[#allocation4 + $0x218] sm:$0xff]
    %v3730 = vld [vmem:[#allocation4 + $0x230] sm:$0xff]
    %v3731 = vld [vmem:[#allocation4 + $0x238] sm:$0xff]
    %v3732 = vld [vmem:[#allocation4 + $0x250] sm:$0xff]
    %v3733 = vld [vmem:[#allocation4 + $0x258] sm:$0xff]
    %v3734 = vld [vmem:[#allocation4 + $0x270] sm:$0xff]
    %v3735 = vld [vmem:[#allocation4 + $0x278] sm:$0xff]
    %v3736 = vld [vmem:[#allocation4 + $0x290] sm:$0xff]
    %v3737 = vld [vmem:[#allocation4 + $0x298] sm:$0xff]
    %v3738 = vld [vmem:[#allocation4 + $0x2b0] sm:$0xff]
    %v3739 = vld [vmem:[#allocation4 + $0x2b8] sm:$0xff]
    %v3740 = vld [vmem:[#allocation4 + $0x2d0] sm:$0xff]
    %v3741 = vld [vmem:[#allocation4 + $0x2d8] sm:$0xff]
    %v3742 = vld [vmem:[#allocation4 + $0x2f0] sm:$0xff]
    %v3743 = vld [vmem:[#allocation4 + $0x2f8] sm:$0xff]
    %v3744 = vld [vmem:[#allocation4 + $0x310] sm:$0xff]
    %v3745 = vld [vmem:[#allocation4 + $0x318] sm:$0xff]
    %v3746 = vld [vmem:[#allocation4 + $0x330] sm:$0xff]
    %v3747 = vld [vmem:[#allocation4 + $0x338] sm:$0xff]
    %v3748 = vld [vmem:[#allocation4 + $0x350] sm:$0xff]
    %v3749 = vld [vmem:[#allocation4 + $0x358] sm:$0xff]
    %v3750 = vld [vmem:[#allocation4 + $0x370] sm:$0xff]
    %v3751 = vld [vmem:[#allocation4 + $0x378] sm:$0xff]
    %v3752 = vld [vmem:[#allocation4 + $0x390] sm:$0xff]
    %v3753 = vld [vmem:[#allocation4 + $0x398] sm:$0xff]
    %v3754 = vld [vmem:[#allocation4 + $0x3b0] sm:$0xff]
    %v3755 = vld [vmem:[#allocation4 + $0x3b8] sm:$0xff]
    %v3756 = vld [vmem:[#allocation4 + $0x3d0] sm:$0xff]
    %v3757 = vld [vmem:[#allocation4 + $0x3d8] sm:$0xff]
    %v3758 = vld [vmem:[#allocation4 + $0x3f0] sm:$0xff]
    %v3759 = vld [vmem:[#allocation4 + $0x3f8] sm:$0xff]
    %v3760 = vld [vmem:[%s2] sm:$0xf]
    %v3762 = vperm.slane %v3760, 2
    %v3763 = vperm.slane %v3760, 3
    %3767 = vst [vmem:[#allocation1] ss:$4 sm:$0xff] %v3695
    %v3768 = vld.sshfl [vmem:[#allocation1] sm:$0xff pattern:$0x73625140]
    %v3769 = vld.sshfl [vmem:[#allocation1 + $0x8] sm:$0xff pattern:$0x73625140]
    %3772 = vmatpush.msra.mxu0 %v3726
    %3773 = vmatpush.msra.mxu0 %v3724
    %3774 = vmatpush.msra.mxu0 %v3722
    %3775 = vmatpush.msra.mxu0 %v3720
    %3776 = vmatpush.msra.mxu0 %v3718
    %3777 = vmatpush.msra.mxu0 %v3716
    %3778 = vmatpush.msra.mxu0 %v3714
    %3779 = vmatpush.msra.mxu0 %v3712
    %3780 = vmatpush.msra.mxu0 %v3710
    %3781 = vmatpush.msra.mxu0 %v3708
    %3782 = vmatpush.msra.mxu0 %v3706
    %3783 = vmatpush.msra.mxu0 %v3704
    %3784 = vmatpush.msra.mxu0 %v3702
    %3785 = vmatpush.msra.mxu0 %v3700
    %3786 = vmatpush.msra.mxu0 %v3698
    %3787 = vmatpush.msra.mxu0 %v3696
    %3788 = vmatmul.f32.gmra.mxu0 %v3768
    %v3789 = vpop.f32.mrf.mxu0
    %v3790 = vadd.f32 %v3762, %v3789
    %3791 = vdwg.mxu0
    %3792 = vmatpush.msra.mxu0 %v3758
    %3793 = vmatpush.msra.mxu0 %v3756
    %3794 = vmatpush.msra.mxu0 %v3754
    %3795 = vmatpush.msra.mxu0 %v3752
    %3796 = vmatpush.msra.mxu0 %v3750
    %3797 = vmatpush.msra.mxu0 %v3748
    %3798 = vmatpush.msra.mxu0 %v3746
    %3799 = vmatpush.msra.mxu0 %v3744
    %3800 = vmatpush.msra.mxu0 %v3742
    %3801 = vmatpush.msra.mxu0 %v3740
    %3802 = vmatpush.msra.mxu0 %v3738
    %3803 = vmatpush.msra.mxu0 %v3736
    %3804 = vmatpush.msra.mxu0 %v3734
    %3805 = vmatpush.msra.mxu0 %v3732
    %3806 = vmatpush.msra.mxu0 %v3730
    %3807 = vmatpush.msra.mxu0 %v3728
    %3808 = vmatmul.f32.gmra.mxu0 %v3769
    %v3809 = vpop.f32.mrf.mxu0
    %v3810 = vadd.f32 %v3790, %v3809
    %3811 = vdwg.mxu0
    %3812 = vmatpush.msra.mxu0 %v3727
    %3813 = vmatpush.msra.mxu0 %v3725
    %3814 = vmatpush.msra.mxu0 %v3723
    %3815 = vmatpush.msra.mxu0 %v3721
    %3816 = vmatpush.msra.mxu0 %v3719
    %3817 = vmatpush.msra.mxu0 %v3717
    %3818 = vmatpush.msra.mxu0 %v3715
    %3819 = vmatpush.msra.mxu0 %v3713
    %3820 = vmatpush.msra.mxu0 %v3711
    %3821 = vmatpush.msra.mxu0 %v3709
    %3822 = vmatpush.msra.mxu0 %v3707
    %3823 = vmatpush.msra.mxu0 %v3705
    %3824 = vmatpush.msra.mxu0 %v3703
    %3825 = vmatpush.msra.mxu0 %v3701
    %3826 = vmatpush.msra.mxu0 %v3699
    %3827 = vmatpush.msra.mxu0 %v3697
    %3828 = vmatmul.f32.gmra.mxu0 %v3768
    %v3829 = vpop.f32.mrf.mxu0
    %v3830 = vadd.f32 %v3763, %v3829
    %3831 = vdwg.mxu0
    %3832 = vmatpush.msra.mxu0 %v3759
    %3833 = vmatpush.msra.mxu0 %v3757
    %3834 = vmatpush.msra.mxu0 %v3755
    %3835 = vmatpush.msra.mxu0 %v3753
    %3836 = vmatpush.msra.mxu0 %v3751
    %3837 = vmatpush.msra.mxu0 %v3749
    %3838 = vmatpush.msra.mxu0 %v3747
    %3839 = vmatpush.msra.mxu0 %v3745
    %3840 = vmatpush.msra.mxu0 %v3743
    %3841 = vmatpush.msra.mxu0 %v3741
    %3842 = vmatpush.msra.mxu0 %v3739
    %3843 = vmatpush.msra.mxu0 %v3737
    %3844 = vmatpush.msra.mxu0 %v3735
    %3845 = vmatpush.msra.mxu0 %v3733
    %3846 = vmatpush.msra.mxu0 %v3731
    %3847 = vmatpush.msra.mxu0 %v3729
    %3848 = vmatmul.f32.gmra.mxu0 %v3769
    %v3849 = vpop.f32.mrf.mxu0
    %v3850 = vadd.f32 %v3830, %v3849
    %3851 = vdwg.mxu0
    %v3852 = vxor.u32 %v3810, 2147483648
    %v3853 = vmul.f32 %v3852, 1.442695
    %v3854 = vpow.pop %v3853
    %v3855 = vadd.f32 %v3854, 1.0
    %v3856 = vrcp.pop %v3855
    %v3857 = vmul.f32 %v3855, %v3856
    %v3858 = vsub.f32 1.0, %v3857
    %v3859 = vmul.f32 %v3856, %v3858
    %v3860 = vadd.f32 %v3856, %v3859
    %vm3861 = vweird.f32 %v3855
    %vm3862 = vweird.f32 %v3856
    %vm3863 = vmor %vm3861, %vm3862
    %v3864 = vsel %vm3863, %v3856, %v3860
    %v3865 = vand.u32 2147483647, %v3855
    %vm3866 = vcmp.eq.f32.partialorder %v3865, 8.507059e+37
    %v3867 = vand.u32 %v3855, 2147483648
    %v3868 = vor.u32 1.1754944e-38, %v3867
    %v3869 = vsel %vm3866, %v3868, %v3864
    %v3870 = vmul.f32 1.0, %v3869
    %v3871 = vtanh.pop %v3810
    %v3872 = vmul.f32 %v3870, %v3636
    %3874 = vrot.lane.b32.xlu0 %v3871, 64
    %v3875 = vpop.permute.xlu0 %3874
    %v3877 = vmul.f32 %v3870, %v3875
    %3879 = vrot.lane.b32.xlu0 %v3877, 32
    %v3880 = vpop.permute.xlu0 %3879
    %v3882 = vadd.f32 %v3872, %v3880
    %v3883 = vtanh.pop %v3882
    %3885 = vrot.lane.b32.xlu0 %v3883, 64
    %v3886 = vpop.permute.xlu0 %3885
    %v3888 = vmul.f32 %v3870, %v3886
    %3890 = vrot.lane.b32.xlu0 %v3888, 64
    %v3891 = vpop.permute.xlu0 %3890
    %3893 = vst.msk [vmem:[#allocation2 + $0x2] sm:$0x3] %vm210, %v3891
    %3894 = vrot.lane.b32.xlu0 %v3888, 96
    %v3895 = vpop.permute.xlu0 %3894
    %3897 = vst.msk [vmem:[#allocation2 + $0x2] sm:$0x3] %vm215, %v3895
    %v3898 = vxor.u32 %v3850, 2147483648
    %v3899 = vmul.f32 %v3898, 1.442695
    %v3900 = vpow.pop %v3899
    %v3901 = vadd.f32 %v3900, 1.0
    %v3902 = vrcp.pop %v3901
    %v3903 = vmul.f32 %v3901, %v3902
    %v3904 = vsub.f32 1.0, %v3903
    %v3905 = vmul.f32 %v3902, %v3904
    %v3906 = vadd.f32 %v3902, %v3905
    %vm3907 = vweird.f32 %v3901
    %vm3908 = vweird.f32 %v3902
    %vm3909 = vmor %vm3907, %vm3908
    %v3910 = vsel %vm3909, %v3902, %v3906
    %v3911 = vand.u32 2147483647, %v3901
    %vm3912 = vcmp.eq.f32.partialorder %v3911, 8.507059e+37
    %v3913 = vand.u32 %v3901, 2147483648
    %v3914 = vor.u32 1.1754944e-38, %v3913
    %v3915 = vsel %vm3912, %v3914, %v3910
    %v3916 = vmul.f32 1.0, %v3915
    %v3917 = vtanh.pop %v3850
    %v3918 = vmul.f32 %v3916, %v3682
    %3920 = vrot.lane.b32.xlu0 %v3917, 64
    %v3921 = vpop.permute.xlu0 %3920
    %v3923 = vmul.f32 %v3916, %v3921
    %3925 = vrot.lane.b32.xlu0 %v3923, 32
    %v3926 = vpop.permute.xlu0 %3925
    %v3928 = vadd.f32 %v3918, %v3926
    %v3929 = vtanh.pop %v3928
    %3931 = vrot.lane.b32.xlu0 %v3929, 64
    %v3932 = vpop.permute.xlu0 %3931
    %v3934 = vmul.f32 %v3916, %v3932
    %3935 = vst.msk [vmem:[#allocation2 + $0x2] sm:$0x3] %vm470, %v3934
    %3937 = vrot.lane.b32.xlu0 %v3934, 96
    %v3938 = vpop.permute.xlu0 %3937
    %3940 = vst.msk [vmem:[#allocation3 + $0x2] sm:$0x3] %vm215, %v3938
    %v3941 = vld [vmem:[#allocation2] sm:$0xf]
    %v3942 = vld [vmem:[#allocation4 + $0x18] sm:$0xff]
    %v3943 = vld [vmem:[#allocation4 + $0x38] sm:$0xff]
    %v3944 = vld [vmem:[#allocation4 + $0x58] sm:$0xff]
    %v3945 = vld [vmem:[#allocation4 + $0x78] sm:$0xff]
    %v3946 = vld [vmem:[#allocation4 + $0x98] sm:$0xff]
    %v3947 = vld [vmem:[#allocation4 + $0xb8] sm:$0xff]
    %v3948 = vld [vmem:[#allocation4 + $0xd8] sm:$0xff]
    %v3949 = vld [vmem:[#allocation4 + $0xf8] sm:$0xff]
    %v3950 = vld [vmem:[#allocation4 + $0x118] sm:$0xff]
    %v3951 = vld [vmem:[#allocation4 + $0x138] sm:$0xff]
    %v3952 = vld [vmem:[#allocation4 + $0x158] sm:$0xff]
    %v3953 = vld [vmem:[#allocation4 + $0x178] sm:$0xff]
    %v3954 = vld [vmem:[#allocation4 + $0x198] sm:$0xff]
    %v3955 = vld [vmem:[#allocation4 + $0x1b8] sm:$0xff]
    %v3956 = vld [vmem:[#allocation4 + $0x1d8] sm:$0xff]
    %v3957 = vld [vmem:[#allocation4 + $0x1f8] sm:$0xff]
    %v3958 = vld [vmem:[#allocation4 + $0x218] sm:$0xff]
    %v3959 = vld [vmem:[#allocation4 + $0x238] sm:$0xff]
    %v3960 = vld [vmem:[#allocation4 + $0x258] sm:$0xff]
    %v3961 = vld [vmem:[#allocation4 + $0x278] sm:$0xff]
    %v3962 = vld [vmem:[#allocation4 + $0x298] sm:$0xff]
    %v3963 = vld [vmem:[#allocation4 + $0x2b8] sm:$0xff]
    %v3964 = vld [vmem:[#allocation4 + $0x2d8] sm:$0xff]
    %v3965 = vld [vmem:[#allocation4 + $0x2f8] sm:$0xff]
    %v3966 = vld [vmem:[#allocation4 + $0x318] sm:$0xff]
    %v3967 = vld [vmem:[#allocation4 + $0x338] sm:$0xff]
    %v3968 = vld [vmem:[#allocation4 + $0x358] sm:$0xff]
    %v3969 = vld [vmem:[#allocation4 + $0x378] sm:$0xff]
    %v3970 = vld [vmem:[#allocation4 + $0x398] sm:$0xff]
    %v3971 = vld [vmem:[#allocation4 + $0x3b8] sm:$0xff]
    %v3972 = vld [vmem:[#allocation4 + $0x3d8] sm:$0xff]
    %v3973 = vld [vmem:[#allocation4 + $0x3f8] sm:$0xff]
    %v3974 = vld [vmem:[%s2] sm:$0xf]
    %v3976 = vperm.slane %v3974, 3
    %3979 = vst [vmem:[#allocation1] ss:$4 sm:$0xff] %v3941
    %v3980 = vld.sshfl [vmem:[#allocation1] sm:$0xff pattern:$0x73625140]
    %v3981 = vld.sshfl [vmem:[#allocation1 + $0x8] sm:$0xff pattern:$0x73625140]
    %3984 = vmatpush.msra.mxu0 %v3957
    %3985 = vmatpush.msra.mxu0 %v3956
    %3986 = vmatpush.msra.mxu0 %v3955
    %3987 = vmatpush.msra.mxu0 %v3954
    %3988 = vmatpush.msra.mxu0 %v3953
    %3989 = vmatpush.msra.mxu0 %v3952
    %3990 = vmatpush.msra.mxu0 %v3951
    %3991 = vmatpush.msra.mxu0 %v3950
    %3992 = vmatpush.msra.mxu0 %v3949
    %3993 = vmatpush.msra.mxu0 %v3948
    %3994 = vmatpush.msra.mxu0 %v3947
    %3995 = vmatpush.msra.mxu0 %v3946
    %3996 = vmatpush.msra.mxu0 %v3945
    %3997 = vmatpush.msra.mxu0 %v3944
    %3998 = vmatpush.msra.mxu0 %v3943
    %3999 = vmatpush.msra.mxu0 %v3942
    %4000 = vmatmul.f32.gmra.mxu0 %v3980
    %v4001 = vpop.f32.mrf.mxu0
    %v4002 = vadd.f32 %v3976, %v4001
    %4003 = vdwg.mxu0
    %4004 = vmatpush.msra.mxu0 %v3973
    %4005 = vmatpush.msra.mxu0 %v3972
    %4006 = vmatpush.msra.mxu0 %v3971
    %4007 = vmatpush.msra.mxu0 %v3970
    %4008 = vmatpush.msra.mxu0 %v3969
    %4009 = vmatpush.msra.mxu0 %v3968
    %4010 = vmatpush.msra.mxu0 %v3967
    %4011 = vmatpush.msra.mxu0 %v3966
    %4012 = vmatpush.msra.mxu0 %v3965
    %4013 = vmatpush.msra.mxu0 %v3964
    %4014 = vmatpush.msra.mxu0 %v3963
    %4015 = vmatpush.msra.mxu0 %v3962
    %4016 = vmatpush.msra.mxu0 %v3961
    %4017 = vmatpush.msra.mxu0 %v3960
    %4018 = vmatpush.msra.mxu0 %v3959
    %4019 = vmatpush.msra.mxu0 %v3958
    %4020 = vmatmul.f32.gmra.mxu0 %v3981
    %v4021 = vpop.f32.mrf.mxu0
    %v4022 = vadd.f32 %v4002, %v4021
    %4023 = vdwg.mxu0
    %v4024 = vxor.u32 %v4022, 2147483648
    %v4025 = vmul.f32 %v4024, 1.442695
    %v4026 = vpow.pop %v4025
    %v4027 = vadd.f32 %v4026, 1.0
    %v4028 = vrcp.pop %v4027
    %v4029 = vmul.f32 %v4027, %v4028
    %v4030 = vsub.f32 1.0, %v4029
    %v4031 = vmul.f32 %v4028, %v4030
    %v4032 = vadd.f32 %v4028, %v4031
    %vm4033 = vweird.f32 %v4027
    %vm4034 = vweird.f32 %v4028
    %vm4035 = vmor %vm4033, %vm4034
    %v4036 = vsel %vm4035, %v4028, %v4032
    %v4037 = vand.u32 2147483647, %v4027
    %vm4038 = vcmp.eq.f32.partialorder %v4037, 8.507059e+37
    %v4039 = vand.u32 %v4027, 2147483648
    %v4040 = vor.u32 1.1754944e-38, %v4039
    %v4041 = vsel %vm4038, %v4040, %v4036
    %v4042 = vmul.f32 1.0, %v4041
    %v4043 = vtanh.pop %v4022
    %v4044 = vmul.f32 %v4042, %v3928
    %4046 = vrot.lane.b32.xlu0 %v4043, 64
    %v4047 = vpop.permute.xlu0 %4046
    %v4049 = vmul.f32 %v4042, %v4047
    %4051 = vrot.lane.b32.xlu0 %v4049, 32
    %v4052 = vpop.permute.xlu0 %4051
    %v4054 = vadd.f32 %v4044, %v4052
    %v4055 = vtanh.pop %v4054
    %4057 = vrot.lane.b32.xlu0 %v4055, 64
    %v4058 = vpop.permute.xlu0 %4057
    %v4060 = vmul.f32 %v4042, %v4058
    %4061 = vst.msk [vmem:[#allocation2 + $0x2] sm:$0x3] %vm470, %v4060
    %4062 = vst.msk [vmem:[#allocation3 + $0x2] sm:$0x3] %vm470, %v4060
    %v4063 = vld [vmem:[#allocation3] sm:$0xf]
    %v4064 = vld [vmem:[#allocation7] sm:$0xff]
    %v4065 = vld [vmem:[#allocation7 + $0x8] sm:$0xff]
    %v4066 = vld [vmem:[#allocation7 + $0x10] sm:$0xff]
    %v4067 = vld [vmem:[#allocation7 + $0x18] sm:$0xff]
    %v4068 = vld [vmem:[#allocation7 + $0x20] sm:$0xff]
    %v4069 = vld [vmem:[#allocation7 + $0x28] sm:$0xff]
    %v4070 = vld [vmem:[#allocation7 + $0x30] sm:$0xff]
    %v4071 = vld [vmem:[#allocation7 + $0x38] sm:$0xff]
    %v4072 = vld [vmem:[#allocation7 + $0x40] sm:$0xff]
    %v4073 = vld [vmem:[#allocation7 + $0x48] sm:$0xff]
    %v4074 = vld [vmem:[#allocation7 + $0x50] sm:$0xff]
    %v4075 = vld [vmem:[#allocation7 + $0x58] sm:$0xff]
    %v4076 = vld [vmem:[#allocation7 + $0x60] sm:$0xff]
    %v4077 = vld [vmem:[#allocation7 + $0x68] sm:$0xff]
    %v4078 = vld [vmem:[#allocation7 + $0x70] sm:$0xff]
    %v4079 = vld [vmem:[#allocation7 + $0x78] sm:$0xff]
    %v4080 = vld [vmem:[#allocation7 + $0x80] sm:$0xff]
    %v4081 = vld [vmem:[#allocation7 + $0x88] sm:$0xff]
    %v4082 = vld [vmem:[#allocation7 + $0x90] sm:$0xff]
    %v4083 = vld [vmem:[#allocation7 + $0x98] sm:$0xff]
    %v4084 = vld [vmem:[#allocation7 + $0xa0] sm:$0xff]
    %v4085 = vld [vmem:[#allocation7 + $0xa8] sm:$0xff]
    %v4086 = vld [vmem:[#allocation7 + $0xb0] sm:$0xff]
    %v4087 = vld [vmem:[#allocation7 + $0xb8] sm:$0xff]
    %v4088 = vld [vmem:[#allocation7 + $0xc0] sm:$0xff]
    %v4089 = vld [vmem:[#allocation7 + $0xc8] sm:$0xff]
    %v4090 = vld [vmem:[#allocation7 + $0xd0] sm:$0xff]
    %v4091 = vld [vmem:[#allocation7 + $0xd8] sm:$0xff]
    %v4092 = vld [vmem:[#allocation7 + $0xe0] sm:$0xff]
    %v4093 = vld [vmem:[#allocation7 + $0xe8] sm:$0xff]
    %v4094 = vld [vmem:[#allocation7 + $0xf0] sm:$0xff]
    %v4095 = vld [vmem:[#allocation7 + $0xf8] sm:$0xff]
    %v4096 = vld [vmem:[%s4] sm:$0x1]
    %v4098 = vperm.slane %v4096, 0
    %4101 = vst [vmem:[#allocation1] ss:$4 sm:$0xff] %v4063
    %v4102 = vld.sshfl [vmem:[#allocation1] sm:$0xff pattern:$0x73625140]
    %v4103 = vld.sshfl [vmem:[#allocation1 + $0x8] sm:$0xff pattern:$0x73625140]
    %4106 = vmatpush.msra.mxu0 %v4079
    %4107 = vmatpush.msra.mxu0 %v4078
    %4108 = vmatpush.msra.mxu0 %v4077
    %4109 = vmatpush.msra.mxu0 %v4076
    %4110 = vmatpush.msra.mxu0 %v4075
    %4111 = vmatpush.msra.mxu0 %v4074
    %4112 = vmatpush.msra.mxu0 %v4073
    %4113 = vmatpush.msra.mxu0 %v4072
    %4114 = vmatpush.msra.mxu0 %v4071
    %4115 = vmatpush.msra.mxu0 %v4070
    %4116 = vmatpush.msra.mxu0 %v4069
    %4117 = vmatpush.msra.mxu0 %v4068
    %4118 = vmatpush.msra.mxu0 %v4067
    %4119 = vmatpush.msra.mxu0 %v4066
    %4120 = vmatpush.msra.mxu0 %v4065
    %4121 = vmatpush.msra.mxu0 %v4064
    %4122 = vmatmul.f32.gmra.mxu0 %v4102
    %v4123 = vpop.f32.mrf.mxu0
    %v4124 = vadd.f32 %v4098, %v4123
    %4125 = vdwg.mxu0
    %4126 = vmatpush.msra.mxu0 %v4095
    %4127 = vmatpush.msra.mxu0 %v4094
    %4128 = vmatpush.msra.mxu0 %v4093
    %4129 = vmatpush.msra.mxu0 %v4092
    %4130 = vmatpush.msra.mxu0 %v4091
    %4131 = vmatpush.msra.mxu0 %v4090
    %4132 = vmatpush.msra.mxu0 %v4089
    %4133 = vmatpush.msra.mxu0 %v4088
    %4134 = vmatpush.msra.mxu0 %v4087
    %4135 = vmatpush.msra.mxu0 %v4086
    %4136 = vmatpush.msra.mxu0 %v4085
    %4137 = vmatpush.msra.mxu0 %v4084
    %4138 = vmatpush.msra.mxu0 %v4083
    %4139 = vmatpush.msra.mxu0 %v4082
    %4140 = vmatpush.msra.mxu0 %v4081
    %4141 = vmatpush.msra.mxu0 %v4080
    %4142 = vmatmul.f32.gmra.mxu0 %v4103
    %v4143 = vpop.f32.mrf.mxu0
    %v4144 = vadd.f32 %v4124, %v4143
    %4145 = vdwg.mxu0
    %v4146 = vld [vmem:[%s5] sm:$0xff]
    %v4147 = vld [vmem:[%s5 + $0x8] sm:$0xff]
    %v4148 = vld [vmem:[%s5 + $0x10] sm:$0xff]
    %v4149 = vld [vmem:[%s5 + $0x18] sm:$0xff]
    %v4150 = vld [vmem:[%s5 + $0x20] sm:$0xff]
    %v4151 = vld [vmem:[%s5 + $0x28] sm:$0xff]
    %v4152 = vld [vmem:[%s5 + $0x30] sm:$0xff]
    %v4153 = vld [vmem:[%s5 + $0x38] sm:$0xff]
    %v4154 = vld [vmem:[%s5 + $0x40] sm:$0xff]
    %v4155 = vld [vmem:[%s5 + $0x48] sm:$0xff]
    %v4156 = vld [vmem:[%s5 + $0x50] sm:$0xff]
    %v4157 = vld [vmem:[%s5 + $0x58] sm:$0xff]
    %v4158 = vld [vmem:[%s5 + $0x60] sm:$0xff]
    %v4159 = vld [vmem:[%s5 + $0x68] sm:$0xff]
    %v4160 = vld [vmem:[%s5 + $0x70] sm:$0xff]
    %v4161 = vld [vmem:[%s5 + $0x78] sm:$0xff]
    %v4162 = vld [vmem:[%s6] sm:$0x1]
    %v4164 = vperm.slane %v4162, 0
    %4166 = vmatpush.msra.mxu0 %v4161
    %4167 = vmatpush.msra.mxu0 %v4160
    %4168 = vmatpush.msra.mxu0 %v4159
    %4169 = vmatpush.msra.mxu0 %v4158
    %4170 = vmatpush.msra.mxu0 %v4157
    %4171 = vmatpush.msra.mxu0 %v4156
    %4172 = vmatpush.msra.mxu0 %v4155
    %4173 = vmatpush.msra.mxu0 %v4154
    %4174 = vmatpush.msra.mxu0 %v4153
    %4175 = vmatpush.msra.mxu0 %v4152
    %4176 = vmatpush.msra.mxu0 %v4151
    %4177 = vmatpush.msra.mxu0 %v4150
    %4178 = vmatpush.msra.mxu0 %v4149
    %4179 = vmatpush.msra.mxu0 %v4148
    %4180 = vmatpush.msra.mxu0 %v4147
    %4181 = vmatpush.msra.mxu0 %v4146
    %4182 = vmatmul.f32.gmra.mxu0 %v4144
    %v4183 = vpop.f32.mrf.mxu0
    %v4184 = vadd.f32 %v4164, %v4183
    %4185 = vdwg.mxu0
    %v4186 = vld [vmem:[%s7] sm:$0xff]
    %v4187 = vld [vmem:[%s7 + $0x8] sm:$0xff]
    %v4188 = vld [vmem:[%s7 + $0x10] sm:$0xff]
    %v4189 = vld [vmem:[%s7 + $0x18] sm:$0xff]
    %v4190 = vld [vmem:[%s7 + $0x20] sm:$0xff]
    %v4191 = vld [vmem:[%s7 + $0x28] sm:$0xff]
    %v4192 = vld [vmem:[%s7 + $0x30] sm:$0xff]
    %v4193 = vld [vmem:[%s7 + $0x38] sm:$0xff]
    %v4194 = vld [vmem:[%s8] sm:$0x1]
    %v4196 = vperm.slane %v4194, 0
    %vm4198 = vcmask 523264
    %v4200 = vsel %vm4198, %v4184, 0
    %4202 = vmatpush.msra.mxu0 0.0
    %4203 = vmatpush.msra.mxu0 0.0
    %4204 = vmatpush.msra.mxu0 0.0
    %4205 = vmatpush.msra.mxu0 0.0
    %4206 = vmatpush.msra.mxu0 0.0
    %4207 = vmatpush.msra.mxu0 0.0
    %4208 = vmatpush.msra.mxu0 0.0
    %4209 = vmatpush.msra.mxu0 0.0
    %4210 = vmatpush.msra.mxu0 %v4193
    %4211 = vmatpush.msra.mxu0 %v4192
    %4212 = vmatpush.msra.mxu0 %v4191
    %4213 = vmatpush.msra.mxu0 %v4190
    %4214 = vmatpush.msra.mxu0 %v4189
    %4215 = vmatpush.msra.mxu0 %v4188
    %4216 = vmatpush.msra.mxu0 %v4187
    %4217 = vmatpush.msra.mxu0 %v4186
    %4218 = vmatmul.f32.gmra.mxu0 %v4200
    %v4219 = vpop.f32.mrf.mxu0
    %v4220 = vadd.f32 %v4196, %v4219
    %4221 = vdwg.mxu0
    %vm4222 = vcmask 25600
    %4223 = vst.msk [vmem:[#allocation9] sm:$0x3] %vm4222, %v4220
    // Predicated region
    $region46: #{forward_pallas.1} parent=1 // pred_check
      _
    $region47: #{forward_pallas.1} parent=1 // pred_check_branch
      %4225 = sbr.rel (0) target = $region49
    $region48: #{forward_pallas.1} parent=1 // pred_region
      %4227 = vsyncadd [#allocation6], 0
      %s4229 = sshll.u32 [#allocation9], 4
      %s4230 = int_to_ptr.vmem [resolvable:$true] %s4229
      %s4231 = sshll.u32 %s9, 4
      %s4232 = int_to_ptr.hbm [resolvable:$true] %s4231
      %4234 = dma.vmem_to_hbm [thread:$0]  %s4230, 32, %s4232, [#allocation6]
    $region49: #{forward_pallas.1} parent=1 // pred_fallthru
      _
    // Predicated region
    $region50: #{forward_pallas.1} parent=1 // pred_check
      _
    $region51: #{forward_pallas.1} parent=1 // pred_check_branch
      %4236 = sbr.rel (0) target = $region53
    $region52: #{forward_pallas.1} parent=1 // pred_region
      %4238 = dma.done [#allocation6], 32
    $region53: #{forward_pallas.1} parent=1 // pred_fallthru
      _
    %4239 = vsyncpa [#allocation5], 1
    %4240 = vsyncpa [#allocation8], 1
    %4241 = vsyncpa [#allocation6], 1

</llo_original>
